<compile_context>
chip_gen: v7x
topology: tpu7x:2x2x1
jax: 0.10.0
libtpu: 0.0.40
codegen_flags: <defaults>
</compile_context>

<pallas_src>
import math

import jax
import jax.numpy as jnp
from jax.experimental import pallas as pl
from jax.experimental.pallas import tpu as pltpu

# ----- small, deterministic hyper-parameters (consistent with the module) -----
BATCH = 2
C_IN = 4
SEQ_LEN = 16          # seq_len <= max_seq_len, no conv kwargs -> W_P is nn.Linear
D_MODEL = 32
N_HEADS = 4
D_K = D_MODEL // N_HEADS   # 8
D_V = D_MODEL // N_HEADS   # 8
D_FF = 64
N_LAYERS = 2
BN_EPS = 1e-5
ATTN_SCALE = 1.0 / math.sqrt(D_K)
BL = BATCH * SEQ_LEN       # 32 (flattened batch*time rows)
OUT_W = D_MODEL + C_IN     # packed output width: [z | x_reconstructed]

# res_dropout = fc_dropout = 0.0  -> all Dropout layers are identity.
# res_attention=True, pre_norm=False, act='gelu', pe='zeros', store_attn=False.


# ----------------------------- in-kernel helpers ------------------------------
def _erf(x):
    # Abramowitz & Stegun 7.1.26 rational approximation (max abs err ~1.5e-7).
    # Guaranteed Mosaic lowering + matches nn.GELU() to float32 noise; it is pure
    # VPU/EUP filler hidden under the FFN matmuls at this size.
    ax = jnp.abs(x)
    t = 1.0 / (1.0 + 0.3275911 * ax)
    poly = ((((1.061405429 * t - 1.453152027) * t + 1.421413741) * t
             - 0.284496736) * t + 0.254829592) * t
    y = 1.0 - poly * jnp.exp(-ax * ax)
    return jnp.where(x < 0, -y, y)


def _gelu(x):
    return 0.5 * x * (1.0 + _erf(x * (1.0 / math.sqrt(2.0))))


def _bn_qlen(x2, gamma, beta):
    # nn.BatchNorm1d(q_len) applied to (B, q_len, d_model): channel axis = q_len.
    # x2 is the flattened (B*L, D) activation (row index = b*L + l).
    # Per-timestep stats are computed with lane reductions only (axis=-1); the B rows
    # sharing the same l are combined with cheap static sublane slices.
    inv_n = 1.0 / (BATCH * D_MODEL)
    row_sum = jnp.sum(x2, axis=-1, keepdims=True)                     # (B*L, 1)
    mean_l = row_sum[0:SEQ_LEN]
    for b in range(1, BATCH):
        mean_l = mean_l + row_sum[b * SEQ_LEN:(b + 1) * SEQ_LEN]
    mean_l = mean_l * inv_n                                           # (L, 1)
    mean_full = jnp.concatenate([mean_l] * BATCH, axis=0)             # (B*L, 1)
    d = x2 - mean_full
    sq_sum = jnp.sum(d * d, axis=-1, keepdims=True)                   # (B*L, 1)
    var_l = sq_sum[0:SEQ_LEN]
    for b in range(1, BATCH):
        var_l = var_l + sq_sum[b * SEQ_LEN:(b + 1) * SEQ_LEN]
    var_l = var_l * inv_n                                             # (L, 1), biased (training-mode stats)
    scale_l = jax.lax.rsqrt(var_l + BN_EPS) * gamma                   # (L, 1)
    scale_full = jnp.concatenate([scale_l] * BATCH, axis=0)           # (B*L, 1)
    shift_full = jnp.concatenate([beta] * BATCH, axis=0)              # (B*L, 1)
    return d * scale_full + shift_full


# ------------------------------ fused kernel ----------------------------------
def _tst_fused_kernel(x2_ref, emb_ref, wqkv_ref, wo_ref, w1_ref, w2_ref,
                      bvec_ref, bnp_ref, head_ref,
                      out_ref,
                      src_scr, scores_scr):
    layer = pl.program_id(0)

    # ---- layer 0 prologue: input embedding + positional add, zero residual scores ----
    @pl.when(layer == 0)
    def _():
        xb = x2_ref[...]                                          # (B*L, C_in)
        xb = jnp.where(xb != xb, jnp.zeros_like(xb), xb)          # NaN -> 0 (key_padding_mask scrub)
        add = emb_ref[0:BL, :]                                    # b_P + tiled W_pos  (B*L, D)
        wp = emb_ref[BL:BL + C_IN, :]                             # W_P                (C_in, D)
        src_scr[...] = jnp.dot(xb, wp, preferred_element_type=jnp.float32) + add
        scores_scr[...] = jnp.zeros_like(scores_scr)              # prev=None == add zeros

    # ---- residual multi-head self-attention (res_attention=True) ----
    src = src_scr[...]                                            # (B*L, D)
    qkv = jnp.dot(src, wqkv_ref[0], preferred_element_type=jnp.float32)   # (B*L, 3D)
    prev = scores_scr[...]                                        # (B*L, H*L), one load

    score_rows = []
    ctx_rows = []
    for b in range(BATCH):
        r0 = b * SEQ_LEN
        qkv_b = qkv[r0:r0 + SEQ_LEN, :]                           # (L, 3D)   static slice
        prev_b = prev[r0:r0 + SEQ_LEN, :]                         # (L, H*L)  static slice
        s_heads = []
        ctx_heads = []
        for h in range(N_HEADS):
            q = qkv_b[:, h * D_K:(h + 1) * D_K]                                   # (L, dk)
            k = qkv_b[:, D_MODEL + h * D_K:D_MODEL + (h + 1) * D_K]               # (L, dk)
            v = qkv_b[:, 2 * D_MODEL + h * D_V:2 * D_MODEL + (h + 1) * D_V]       # (L, dv)
            s = jax.lax.dot_general(q, k, (((1,), (1,)), ((), ())),
                                    preferred_element_type=jnp.float32) * ATTN_SCALE
            s = s + prev_b[:, h * SEQ_LEN:(h + 1) * SEQ_LEN]      # add previous-layer scores
            s_heads.append(s)
            m = jnp.max(s, axis=-1, keepdims=True)
            e = jnp.exp(s - m)
            a = e / jnp.sum(e, axis=-1, keepdims=True)            # softmax
            ctx_heads.append(jnp.dot(a, v, preferred_element_type=jnp.float32))   # (L, dv)
        score_rows.append(jnp.concatenate(s_heads, axis=-1))      # (L, H*L) lane-dense
        ctx_rows.append(jnp.concatenate(ctx_heads, axis=-1))      # (L, H*dv)
    scores_scr[...] = jnp.concatenate(score_rows, axis=0)         # carried to next layer (one store)
    ctx = jnp.concatenate(ctx_rows, axis=0)                       # (B*L, H*dv)
    attn_out = jnp.dot(ctx, wo_ref[0], preferred_element_type=jnp.float32)        # W_O, one matmul

    src = src + attn_out                                          # residual (dropout = identity)

    # ---- BatchNorm1d(q_len) after attention ----
    bnp = bnp_ref[0]                                              # (L, 4): [g1, be1, g2, be2]
    src = _bn_qlen(src, bnp[:, 0:1], bnp[:, 1:2])

    # ---- position-wise FFN: Linear -> GELU -> Linear, + residual ----
    b1 = bvec_ref[0, :, 0:D_FF]                                   # (1, d_ff)
    b2 = bvec_ref[0, :, D_FF:D_FF + D_MODEL]                      # (1, d_model)
    h1 = jnp.dot(src, w1_ref[0], preferred_element_type=jnp.float32) + b1
    h1 = _gelu(h1)
    ff = jnp.dot(h1, w2_ref[0], preferred_element_type=jnp.float32) + b2
    src = src + ff

    # ---- BatchNorm1d(q_len) after FFN ----
    src = _bn_qlen(src, bnp[:, 2:3], bnp[:, 3:4])

    # carry src to the next layer only when there is one (skip redundant final store)
    @pl.when(layer < N_LAYERS - 1)
    def _():
        src_scr[...] = src

    # ---- final layer: backbone output + Conv1d(d_model, c_in, 1) head, packed store ----
    @pl.when(layer == N_LAYERS - 1)
    def _():
        wh = head_ref[0:D_MODEL, :]                               # (d_model, c_in)
        bh = head_ref[D_MODEL:D_MODEL + 1, :]                     # (1, c_in)
        y = jnp.dot(src, wh, preferred_element_type=jnp.float32) + bh
        out_ref[...] = jnp.concatenate([src, y], axis=-1)         # [z | x_rec], single store/DMA


# ------------------------------- parameters -----------------------------------
def init_params(key):
    keys = iter(jax.random.split(key, 64))

    def u(shape, scale):
        return jax.random.uniform(next(keys), shape, jnp.float32, -1.0, 1.0) * scale

    # ---- embedding: nn.Linear(c_in, d_model) + learned positional encoding ----
    w_p = u((C_IN, D_MODEL), 1.0 / math.sqrt(C_IN))
    b_p = u((1, D_MODEL), 1.0 / math.sqrt(C_IN))
    # pe='zeros' init is all-zeros; small deterministic values so the add is exercised.
    w_pos = 0.02 * jax.random.normal(next(keys), (SEQ_LEN, D_MODEL), jnp.float32)
    # packed: rows 0:BL = b_P + tiled W_pos (added post-matmul), rows BL:BL+C_IN = W_P
    emb = jnp.concatenate([jnp.tile(w_pos, (BATCH, 1)) + b_p, w_p], axis=0)   # (BL+C_in, D)

    wqkv, wo, w1, w2, bvec, bnp = [], [], [], [], [], []
    for _ in range(N_LAYERS):
        # MultiheadAttention projections (bias-free W_Q/W_K/W_V/W_O), head-major columns:
        # packed as a single (D, 3D) matrix [W_Q | W_K | W_V].
        wqkv.append(jnp.concatenate([
            u((D_MODEL, N_HEADS * D_K), 1.0 / math.sqrt(D_MODEL)),
            u((D_MODEL, N_HEADS * D_K), 1.0 / math.sqrt(D_MODEL)),
            u((D_MODEL, N_HEADS * D_V), 1.0 / math.sqrt(D_MODEL)),
        ], axis=1))
        wo.append(u((N_HEADS * D_V, D_MODEL), 1.0 / math.sqrt(N_HEADS * D_V)))
        w1.append(u((D_MODEL, D_FF), 1.0 / math.sqrt(D_MODEL)))
        w2.append(u((D_FF, D_MODEL), 1.0 / math.sqrt(D_FF)))
        # packed FFN biases: [b1 (d_ff) | b2 (d_model)]
        bvec.append(jnp.concatenate([u((1, D_FF), 1.0 / math.sqrt(D_MODEL)),
                                     u((1, D_MODEL), 1.0 / math.sqrt(D_FF))], axis=1))
        # packed BatchNorm1d(q_len) affine params (PyTorch default: gamma=1, beta=0)
        bnp.append(jnp.stack([jnp.ones((SEQ_LEN,), jnp.float32),
                              jnp.zeros((SEQ_LEN,), jnp.float32),
                              jnp.ones((SEQ_LEN,), jnp.float32),
                              jnp.zeros((SEQ_LEN,), jnp.float32)], axis=1))

    # ---- head: Conv1d(d_model, c_in, kernel_size=1) packed as [W^T ; b] ----
    head = jnp.concatenate([u((D_MODEL, C_IN), 1.0 / math.sqrt(D_MODEL)),
                            u((1, C_IN), 1.0 / math.sqrt(D_MODEL))], axis=0)   # (D+1, C_in)

    return {
        "emb": emb,
        "wqkv": jnp.stack(wqkv, axis=0),   # (n_layers, D, 3D)
        "wo": jnp.stack(wo, axis=0),       # (n_layers, H*dv, D)
        "w1": jnp.stack(w1, axis=0),       # (n_layers, D, d_ff)
        "w2": jnp.stack(w2, axis=0),       # (n_layers, d_ff, D)
        "bvec": jnp.stack(bvec, axis=0),   # (n_layers, 1, d_ff + D)
        "bnp": jnp.stack(bnp, axis=0),     # (n_layers, L, 4)
        "head": head,                      # (D+1, C_in)
    }


# --------------------------------- forward ------------------------------------
def tst_plus_forward(x, params):
    # x: (B, C_in, L) -> returns (x_reconstructed (B, C_in, L), z (B, d_model, L))
    xt = jnp.transpose(x, (0, 2, 1)).astype(jnp.float32)      # glue transpose: (B, L, C_in)
    x2 = xt.reshape(BL, C_IN)                                 # flatten batch into rows

    out = pl.pallas_call(
        _tst_fused_kernel,
        out_shape=jax.ShapeDtypeStruct((BL, OUT_W), jnp.float32),   # packed [z | x_rec]
        grid_spec=pltpu.PrefetchScalarGridSpec(
            num_scalar_prefetch=0,
            grid=(N_LAYERS,),                                  # grid axis = encoder layer
            in_specs=[
                pl.BlockSpec((BL, C_IN), lambda l: (0, 0)),                      # x2 (resident)
                pl.BlockSpec((BL + C_IN, D_MODEL), lambda l: (0, 0)),            # packed embed
                pl.BlockSpec((1, D_MODEL, 3 * D_MODEL), lambda l: (l, 0, 0)),    # W_QKV[l]
                pl.BlockSpec((1, N_HEADS * D_V, D_MODEL), lambda l: (l, 0, 0)),  # W_O[l]
                pl.BlockSpec((1, D_MODEL, D_FF), lambda l: (l, 0, 0)),           # W1[l]
                pl.BlockSpec((1, D_FF, D_MODEL), lambda l: (l, 0, 0)),           # W2[l]
                pl.BlockSpec((1, 1, D_FF + D_MODEL), lambda l: (l, 0, 0)),       # packed b1|b2
                pl.BlockSpec((1, SEQ_LEN, 4), lambda l: (l, 0, 0)),              # packed BN g/b
                pl.BlockSpec((D_MODEL + 1, C_IN), lambda l: (0, 0)),             # packed head
            ],
            out_specs=pl.BlockSpec((BL, OUT_W), lambda l: (0, 0)),   # single writeback at end
            scratch_shapes=[
                pltpu.VMEM((BL, D_MODEL), jnp.float32),                        # src (resident)
                pltpu.VMEM((BL, N_HEADS * SEQ_LEN), jnp.float32),              # residual scores
            ],
        ),
        compiler_params=pltpu.CompilerParams(
            dimension_semantics=("arbitrary",)),               # layer axis carries state
    )(x2, params["emb"], params["wqkv"], params["wo"], params["w1"],
      params["w2"], params["bvec"], params["bnp"], params["head"])

    z2 = out[:, 0:D_MODEL]                                    # (B*L, D)
    y2 = out[:, D_MODEL:OUT_W]                                # (B*L, C_in)
    z = jnp.transpose(z2.reshape(BATCH, SEQ_LEN, D_MODEL), (0, 2, 1))   # (B, d_model, L)
    x_rec = jnp.transpose(y2.reshape(BATCH, SEQ_LEN, C_IN), (0, 2, 1))  # (B, c_in, L)
    return x_rec, z


# TODO(synk): key_padding_mask attention masking is skipped — inputs contain no NaNs,
# so the reference _key_padding_mask returns mask=None and no masking is applied.

if __name__ == "__main__":
    root = jax.random.PRNGKey(0)
    pkey, xkey = jax.random.split(root)
    params = init_params(pkey)
    x = jax.random.normal(xkey, (BATCH, C_IN, SEQ_LEN), jnp.float32)

    x_rec, z = tst_plus_forward(x, params)
    x_rec = jax.block_until_ready(x_rec)
    z = jax.block_until_ready(z)

    assert x_rec.shape == (BATCH, C_IN, SEQ_LEN)
    assert z.shape == (BATCH, D_MODEL, SEQ_LEN)
    assert bool(jnp.all(jnp.isfinite(x_rec))) and bool(jnp.all(jnp.isfinite(z)))
    print("KERNEL_OK")
</pallas_src>

<mosaic_0001>
module attributes {stable_mosaic.version = 11 : i64} {
  func.func @_tst_fused_kernel(%arg0: i32, %arg1: memref<32x4xf32, #tpu.memory_space<vmem>>, %arg2: memref<36x32xf32, #tpu.memory_space<vmem>>, %arg3: memref<1x32x96xf32, #tpu.memory_space<vmem>>, %arg4: memref<1x32x32xf32, #tpu.memory_space<vmem>>, %arg5: memref<1x32x64xf32, #tpu.memory_space<vmem>>, %arg6: memref<1x64x32xf32, #tpu.memory_space<vmem>>, %arg7: memref<1x1x96xf32, #tpu.memory_space<vmem>>, %arg8: memref<1x16x4xf32, #tpu.memory_space<vmem>>, %arg9: memref<33x4xf32, #tpu.memory_space<vmem>>, %arg10: memref<32x36xf32, #tpu.memory_space<vmem>>, %arg11: memref<32x32xf32, #tpu.memory_space<vmem>>, %arg12: memref<32x64xf32, #tpu.memory_space<vmem>>) attributes {dimension_semantics = [#tpu.dimension_semantics<arbitrary>], iteration_bounds = array<i64: 2>, scalar_prefetch = 0 : i64, scratch_operands = 2 : i64, tpu.core_type = #tpu.core_type<tc>, window_params = [{pipeline_mode = #tpu.pipeline_mode<synchronous>, transform_indices = @transform_0, window_bounds = array<i64: 32, 4>}, {pipeline_mode = #tpu.pipeline_mode<synchronous>, transform_indices = @transform_1, window_bounds = array<i64: 36, 32>}, {transform_indices = @transform_2, window_bounds = array<i64: 1, 32, 96>}, {transform_indices = @transform_3, window_bounds = array<i64: 1, 32, 32>}, {transform_indices = @transform_4, window_bounds = array<i64: 1, 32, 64>}, {transform_indices = @transform_5, window_bounds = array<i64: 1, 64, 32>}, {transform_indices = @transform_6, window_bounds = array<i64: 1, 1, 96>}, {transform_indices = @transform_7, window_bounds = array<i64: 1, 16, 4>}, {pipeline_mode = #tpu.pipeline_mode<synchronous>, transform_indices = @transform_8, window_bounds = array<i64: 33, 4>}, {pipeline_mode = #tpu.pipeline_mode<synchronous>, transform_indices = @transform_9, window_bounds = array<i64: 32, 36>}]} {
    %c0_i32 = arith.constant 0 : i32
    %0 = arith.cmpi eq, %arg0, %c0_i32 : i32
    %1 = arith.extui %0 : i1 to i32
    %c0_i32_0 = arith.constant 0 : i32
    %2 = arith.cmpi ne, %1, %c0_i32_0 : i32
    scf.if %2 {
      %c0_97 = arith.constant 0 : index
      %c0_98 = arith.constant 0 : index
      %290 = vector.load %arg1[%c0_97, %c0_98] : memref<32x4xf32, #tpu.memory_space<vmem>>, vector<32x4xf32>
      %291 = arith.cmpf one, %290, %290 : vector<32x4xf32>
      %cst_99 = arith.constant 0.000000e+00 : f32
      %292 = vector.broadcast %cst_99 : f32 to vector<32x4xf32>
      %293 = arith.select %291, %292, %290 : vector<32x4xi1>, vector<32x4xf32>
      %c0_100 = arith.constant 0 : index
      %c0_101 = arith.constant 0 : index
      %294 = vector.load %arg2[%c0_100, %c0_101] : memref<36x32xf32, #tpu.memory_space<vmem>>, vector<32x32xf32>
      %c32 = arith.constant 32 : index
      %c0_102 = arith.constant 0 : index
      %295 = vector.load %arg2[%c32, %c0_102] : memref<36x32xf32, #tpu.memory_space<vmem>>, vector<4x32xf32>
      %cst_103 = arith.constant dense<0.000000e+00> : vector<32x32xf32>
      %296 = tpu.matmul %293, %295, %cst_103 {dimension_numbers = #tpu.dot_dimension_numbers<[1], [0], [0], [1], [0, 0, 1, 1], [], []>} : vector<32x4xf32>, vector<4x32xf32>, vector<32x32xf32> -> vector<32x32xf32>
      %297 = arith.addf %296, %294 : vector<32x32xf32>
      %c0_104 = arith.constant 0 : index
      %c0_105 = arith.constant 0 : index
      %298 = vector.load %arg11[%c0_104, %c0_105] : memref<32x32xf32, #tpu.memory_space<vmem>>, vector<32x32xf32>
      tpu.vector_store %arg11[%c0_104, %c0_105], %297 {strides = array<i32>} : memref<32x32xf32, #tpu.memory_space<vmem>>, vector<32x32xf32>,
      %cst_106 = arith.constant 0.000000e+00 : f32
      %299 = vector.broadcast %cst_106 : f32 to vector<32x64xf32>
      %c0_107 = arith.constant 0 : index
      %c0_108 = arith.constant 0 : index
      %300 = vector.load %arg12[%c0_107, %c0_108] : memref<32x64xf32, #tpu.memory_space<vmem>>, vector<32x64xf32>
      tpu.vector_store %arg12[%c0_107, %c0_108], %299 {strides = array<i32>} : memref<32x64xf32, #tpu.memory_space<vmem>>, vector<32x64xf32>,
    } else {
    }
    %c0 = arith.constant 0 : index
    %c0_1 = arith.constant 0 : index
    %3 = vector.load %arg11[%c0, %c0_1] : memref<32x32xf32, #tpu.memory_space<vmem>>, vector<32x32xf32>
    %c0_2 = arith.constant 0 : index
    %c0_3 = arith.constant 0 : index
    %c0_4 = arith.constant 0 : index
    %4 = vector.load %arg3[%c0_2, %c0_3, %c0_4] : memref<1x32x96xf32, #tpu.memory_space<vmem>>, vector<1x32x96xf32>
    %5 = vector.shape_cast %4 : vector<1x32x96xf32> to vector<32x96xf32>
    %cst = arith.constant dense<0.000000e+00> : vector<32x96xf32>
    %6 = tpu.matmul %3, %5, %cst {dimension_numbers = #tpu.dot_dimension_numbers<[1], [0], [0], [1], [0, 0, 1, 1], [], []>} : vector<32x32xf32>, vector<32x96xf32>, vector<32x96xf32> -> vector<32x96xf32>
    %c0_5 = arith.constant 0 : index
    %c0_6 = arith.constant 0 : index
    %7 = vector.load %arg12[%c0_5, %c0_6] : memref<32x64xf32, #tpu.memory_space<vmem>>, vector<32x64xf32>
    %8 = vector.extract_strided_slice %6 {offsets = [0, 0], sizes = [16, 96], strides = [1, 1]} : vector<32x96xf32> to vector<16x96xf32>
    %9 = vector.extract_strided_slice %7 {offsets = [0, 0], sizes = [16, 64], strides = [1, 1]} : vector<32x64xf32> to vector<16x64xf32>
    %10 = vector.extract_strided_slice %8 {offsets = [0, 0], sizes = [16, 8], strides = [1, 1]} : vector<16x96xf32> to vector<16x8xf32>
    %11 = vector.extract_strided_slice %8 {offsets = [0, 32], sizes = [16, 8], strides = [1, 1]} : vector<16x96xf32> to vector<16x8xf32>
    %12 = vector.extract_strided_slice %8 {offsets = [0, 64], sizes = [16, 8], strides = [1, 1]} : vector<16x96xf32> to vector<16x8xf32>
    %cst_7 = arith.constant dense<0.000000e+00> : vector<16x16xf32>
    %13 = tpu.matmul %10, %11, %cst_7 {dimension_numbers = #tpu.dot_dimension_numbers<[1], [1], [0], [0], [0, 0, 1, 0], [], []>} : vector<16x8xf32>, vector<16x8xf32>, vector<16x16xf32> -> vector<16x16xf32>
    %cst_8 = arith.constant 0.353553385 : f32
    %14 = vector.broadcast %cst_8 : f32 to vector<16x16xf32>
    %15 = arith.mulf %13, %14 : vector<16x16xf32>
    %16 = vector.extract_strided_slice %9 {offsets = [0, 0], sizes = [16, 16], strides = [1, 1]} : vector<16x64xf32> to vector<16x16xf32>
    %17 = arith.addf %15, %16 : vector<16x16xf32>
    %cst_9 = arith.constant dense<0xFF800000> : vector<16xf32>
    %18 = vector.multi_reduction <maximumf>, %17, %cst_9 [1] : vector<16x16xf32> to vector<16xf32>
    %19 = vector.shape_cast %18 : vector<16xf32> to vector<16x1xf32>
    %20 = vector.broadcast %19 : vector<16x1xf32> to vector<16x16xf32>
    %21 = arith.subf %17, %20 : vector<16x16xf32>
    %22 = math.exp %21 : vector<16x16xf32>
    %cst_10 = arith.constant dense<0.000000e+00> : vector<16xf32>
    %23 = vector.multi_reduction <add>, %22, %cst_10 [1] : vector<16x16xf32> to vector<16xf32>
    %24 = vector.shape_cast %23 : vector<16xf32> to vector<16x1xf32>
    %25 = vector.broadcast %24 : vector<16x1xf32> to vector<16x16xf32>
    %26 = arith.divf %22, %25 : vector<16x16xf32>
    %cst_11 = arith.constant dense<0.000000e+00> : vector<16x8xf32>
    %27 = tpu.matmul %26, %12, %cst_11 {dimension_numbers = #tpu.dot_dimension_numbers<[1], [0], [0], [1], [0, 0, 1, 1], [], []>} : vector<16x16xf32>, vector<16x8xf32>, vector<16x8xf32> -> vector<16x8xf32>
    %28 = vector.extract_strided_slice %8 {offsets = [0, 8], sizes = [16, 8], strides = [1, 1]} : vector<16x96xf32> to vector<16x8xf32>
    %29 = vector.extract_strided_slice %8 {offsets = [0, 40], sizes = [16, 8], strides = [1, 1]} : vector<16x96xf32> to vector<16x8xf32>
    %30 = vector.extract_strided_slice %8 {offsets = [0, 72], sizes = [16, 8], strides = [1, 1]} : vector<16x96xf32> to vector<16x8xf32>
    %cst_12 = arith.constant dense<0.000000e+00> : vector<16x16xf32>
    %31 = tpu.matmul %28, %29, %cst_12 {dimension_numbers = #tpu.dot_dimension_numbers<[1], [1], [0], [0], [0, 0, 1, 0], [], []>} : vector<16x8xf32>, vector<16x8xf32>, vector<16x16xf32> -> vector<16x16xf32>
    %cst_13 = arith.constant 0.353553385 : f32
    %32 = vector.broadcast %cst_13 : f32 to vector<16x16xf32>
    %33 = arith.mulf %31, %32 : vector<16x16xf32>
    %34 = vector.extract_strided_slice %9 {offsets = [0, 16], sizes = [16, 16], strides = [1, 1]} : vector<16x64xf32> to vector<16x16xf32>
    %35 = arith.addf %33, %34 : vector<16x16xf32>
    %cst_14 = arith.constant dense<0xFF800000> : vector<16xf32>
    %36 = vector.multi_reduction <maximumf>, %35, %cst_14 [1] : vector<16x16xf32> to vector<16xf32>
    %37 = vector.shape_cast %36 : vector<16xf32> to vector<16x1xf32>
    %38 = vector.broadcast %37 : vector<16x1xf32> to vector<16x16xf32>
    %39 = arith.subf %35, %38 : vector<16x16xf32>
    %40 = math.exp %39 : vector<16x16xf32>
    %cst_15 = arith.constant dense<0.000000e+00> : vector<16xf32>
    %41 = vector.multi_reduction <add>, %40, %cst_15 [1] : vector<16x16xf32> to vector<16xf32>
    %42 = vector.shape_cast %41 : vector<16xf32> to vector<16x1xf32>
    %43 = vector.broadcast %42 : vector<16x1xf32> to vector<16x16xf32>
    %44 = arith.divf %40, %43 : vector<16x16xf32>
    %cst_16 = arith.constant dense<0.000000e+00> : vector<16x8xf32>
    %45 = tpu.matmul %44, %30, %cst_16 {dimension_numbers = #tpu.dot_dimension_numbers<[1], [0], [0], [1], [0, 0, 1, 1], [], []>} : vector<16x16xf32>, vector<16x8xf32>, vector<16x8xf32> -> vector<16x8xf32>
    %46 = vector.extract_strided_slice %8 {offsets = [0, 16], sizes = [16, 8], strides = [1, 1]} : vector<16x96xf32> to vector<16x8xf32>
    %47 = vector.extract_strided_slice %8 {offsets = [0, 48], sizes = [16, 8], strides = [1, 1]} : vector<16x96xf32> to vector<16x8xf32>
    %48 = vector.extract_strided_slice %8 {offsets = [0, 80], sizes = [16, 8], strides = [1, 1]} : vector<16x96xf32> to vector<16x8xf32>
    %cst_17 = arith.constant dense<0.000000e+00> : vector<16x16xf32>
    %49 = tpu.matmul %46, %47, %cst_17 {dimension_numbers = #tpu.dot_dimension_numbers<[1], [1], [0], [0], [0, 0, 1, 0], [], []>} : vector<16x8xf32>, vector<16x8xf32>, vector<16x16xf32> -> vector<16x16xf32>
    %cst_18 = arith.constant 0.353553385 : f32
    %50 = vector.broadcast %cst_18 : f32 to vector<16x16xf32>
    %51 = arith.mulf %49, %50 : vector<16x16xf32>
    %52 = vector.extract_strided_slice %9 {offsets = [0, 32], sizes = [16, 16], strides = [1, 1]} : vector<16x64xf32> to vector<16x16xf32>
    %53 = arith.addf %51, %52 : vector<16x16xf32>
    %cst_19 = arith.constant dense<0xFF800000> : vector<16xf32>
    %54 = vector.multi_reduction <maximumf>, %53, %cst_19 [1] : vector<16x16xf32> to vector<16xf32>
    %55 = vector.shape_cast %54 : vector<16xf32> to vector<16x1xf32>
    %56 = vector.broadcast %55 : vector<16x1xf32> to vector<16x16xf32>
    %57 = arith.subf %53, %56 : vector<16x16xf32>
    %58 = math.exp %57 : vector<16x16xf32>
    %cst_20 = arith.constant dense<0.000000e+00> : vector<16xf32>
    %59 = vector.multi_reduction <add>, %58, %cst_20 [1] : vector<16x16xf32> to vector<16xf32>
    %60 = vector.shape_cast %59 : vector<16xf32> to vector<16x1xf32>
    %61 = vector.broadcast %60 : vector<16x1xf32> to vector<16x16xf32>
    %62 = arith.divf %58, %61 : vector<16x16xf32>
    %cst_21 = arith.constant dense<0.000000e+00> : vector<16x8xf32>
    %63 = tpu.matmul %62, %48, %cst_21 {dimension_numbers = #tpu.dot_dimension_numbers<[1], [0], [0], [1], [0, 0, 1, 1], [], []>} : vector<16x16xf32>, vector<16x8xf32>, vector<16x8xf32> -> vector<16x8xf32>
    %64 = vector.extract_strided_slice %8 {offsets = [0, 24], sizes = [16, 8], strides = [1, 1]} : vector<16x96xf32> to vector<16x8xf32>
    %65 = vector.extract_strided_slice %8 {offsets = [0, 56], sizes = [16, 8], strides = [1, 1]} : vector<16x96xf32> to vector<16x8xf32>
    %66 = vector.extract_strided_slice %8 {offsets = [0, 88], sizes = [16, 8], strides = [1, 1]} : vector<16x96xf32> to vector<16x8xf32>
    %cst_22 = arith.constant dense<0.000000e+00> : vector<16x16xf32>
    %67 = tpu.matmul %64, %65, %cst_22 {dimension_numbers = #tpu.dot_dimension_numbers<[1], [1], [0], [0], [0, 0, 1, 0], [], []>} : vector<16x8xf32>, vector<16x8xf32>, vector<16x16xf32> -> vector<16x16xf32>
    %cst_23 = arith.constant 0.353553385 : f32
    %68 = vector.broadcast %cst_23 : f32 to vector<16x16xf32>
    %69 = arith.mulf %67, %68 : vector<16x16xf32>
    %70 = vector.extract_strided_slice %9 {offsets = [0, 48], sizes = [16, 16], strides = [1, 1]} : vector<16x64xf32> to vector<16x16xf32>
    %71 = arith.addf %69, %70 : vector<16x16xf32>
    %cst_24 = arith.constant dense<0xFF800000> : vector<16xf32>
    %72 = vector.multi_reduction <maximumf>, %71, %cst_24 [1] : vector<16x16xf32> to vector<16xf32>
    %73 = vector.shape_cast %72 : vector<16xf32> to vector<16x1xf32>
    %74 = vector.broadcast %73 : vector<16x1xf32> to vector<16x16xf32>
    %75 = arith.subf %71, %74 : vector<16x16xf32>
    %76 = math.exp %75 : vector<16x16xf32>
    %cst_25 = arith.constant dense<0.000000e+00> : vector<16xf32>
    %77 = vector.multi_reduction <add>, %76, %cst_25 [1] : vector<16x16xf32> to vector<16xf32>
    %78 = vector.shape_cast %77 : vector<16xf32> to vector<16x1xf32>
    %79 = vector.broadcast %78 : vector<16x1xf32> to vector<16x16xf32>
    %80 = arith.divf %76, %79 : vector<16x16xf32>
    %cst_26 = arith.constant dense<0.000000e+00> : vector<16x8xf32>
    %81 = tpu.matmul %80, %66, %cst_26 {dimension_numbers = #tpu.dot_dimension_numbers<[1], [0], [0], [1], [0, 0, 1, 1], [], []>} : vector<16x16xf32>, vector<16x8xf32>, vector<16x8xf32> -> vector<16x8xf32>
    %82 = tpu.concatenate %17, %35, %53, %71 in 1 : vector<16x16xf32>, vector<16x16xf32>, vector<16x16xf32>, vector<16x16xf32> -> vector<16x64xf32>
    %83 = tpu.concatenate %27, %45, %63, %81 in 1 : vector<16x8xf32>, vector<16x8xf32>, vector<16x8xf32>, vector<16x8xf32> -> vector<16x32xf32>
    %84 = vector.extract_strided_slice %6 {offsets = [16, 0], sizes = [16, 96], strides = [1, 1]} : vector<32x96xf32> to vector<16x96xf32>
    %85 = vector.extract_strided_slice %7 {offsets = [16, 0], sizes = [16, 64], strides = [1, 1]} : vector<32x64xf32> to vector<16x64xf32>
    %86 = vector.extract_strided_slice %84 {offsets = [0, 0], sizes = [16, 8], strides = [1, 1]} : vector<16x96xf32> to vector<16x8xf32>
    %87 = vector.extract_strided_slice %84 {offsets = [0, 32], sizes = [16, 8], strides = [1, 1]} : vector<16x96xf32> to vector<16x8xf32>
    %88 = vector.extract_strided_slice %84 {offsets = [0, 64], sizes = [16, 8], strides = [1, 1]} : vector<16x96xf32> to vector<16x8xf32>
    %cst_27 = arith.constant dense<0.000000e+00> : vector<16x16xf32>
    %89 = tpu.matmul %86, %87, %cst_27 {dimension_numbers = #tpu.dot_dimension_numbers<[1], [1], [0], [0], [0, 0, 1, 0], [], []>} : vector<16x8xf32>, vector<16x8xf32>, vector<16x16xf32> -> vector<16x16xf32>
    %cst_28 = arith.constant 0.353553385 : f32
    %90 = vector.broadcast %cst_28 : f32 to vector<16x16xf32>
    %91 = arith.mulf %89, %90 : vector<16x16xf32>
    %92 = vector.extract_strided_slice %85 {offsets = [0, 0], sizes = [16, 16], strides = [1, 1]} : vector<16x64xf32> to vector<16x16xf32>
    %93 = arith.addf %91, %92 : vector<16x16xf32>
    %cst_29 = arith.constant dense<0xFF800000> : vector<16xf32>
    %94 = vector.multi_reduction <maximumf>, %93, %cst_29 [1] : vector<16x16xf32> to vector<16xf32>
    %95 = vector.shape_cast %94 : vector<16xf32> to vector<16x1xf32>
    %96 = vector.broadcast %95 : vector<16x1xf32> to vector<16x16xf32>
    %97 = arith.subf %93, %96 : vector<16x16xf32>
    %98 = math.exp %97 : vector<16x16xf32>
    %cst_30 = arith.constant dense<0.000000e+00> : vector<16xf32>
    %99 = vector.multi_reduction <add>, %98, %cst_30 [1] : vector<16x16xf32> to vector<16xf32>
    %100 = vector.shape_cast %99 : vector<16xf32> to vector<16x1xf32>
    %101 = vector.broadcast %100 : vector<16x1xf32> to vector<16x16xf32>
    %102 = arith.divf %98, %101 : vector<16x16xf32>
    %cst_31 = arith.constant dense<0.000000e+00> : vector<16x8xf32>
    %103 = tpu.matmul %102, %88, %cst_31 {dimension_numbers = #tpu.dot_dimension_numbers<[1], [0], [0], [1], [0, 0, 1, 1], [], []>} : vector<16x16xf32>, vector<16x8xf32>, vector<16x8xf32> -> vector<16x8xf32>
    %104 = vector.extract_strided_slice %84 {offsets = [0, 8], sizes = [16, 8], strides = [1, 1]} : vector<16x96xf32> to vector<16x8xf32>
    %105 = vector.extract_strided_slice %84 {offsets = [0, 40], sizes = [16, 8], strides = [1, 1]} : vector<16x96xf32> to vector<16x8xf32>
    %106 = vector.extract_strided_slice %84 {offsets = [0, 72], sizes = [16, 8], strides = [1, 1]} : vector<16x96xf32> to vector<16x8xf32>
    %cst_32 = arith.constant dense<0.000000e+00> : vector<16x16xf32>
    %107 = tpu.matmul %104, %105, %cst_32 {dimension_numbers = #tpu.dot_dimension_numbers<[1], [1], [0], [0], [0, 0, 1, 0], [], []>} : vector<16x8xf32>, vector<16x8xf32>, vector<16x16xf32> -> vector<16x16xf32>
    %cst_33 = arith.constant 0.353553385 : f32
    %108 = vector.broadcast %cst_33 : f32 to vector<16x16xf32>
    %109 = arith.mulf %107, %108 : vector<16x16xf32>
    %110 = vector.extract_strided_slice %85 {offsets = [0, 16], sizes = [16, 16], strides = [1, 1]} : vector<16x64xf32> to vector<16x16xf32>
    %111 = arith.addf %109, %110 : vector<16x16xf32>
    %cst_34 = arith.constant dense<0xFF800000> : vector<16xf32>
    %112 = vector.multi_reduction <maximumf>, %111, %cst_34 [1] : vector<16x16xf32> to vector<16xf32>
    %113 = vector.shape_cast %112 : vector<16xf32> to vector<16x1xf32>
    %114 = vector.broadcast %113 : vector<16x1xf32> to vector<16x16xf32>
    %115 = arith.subf %111, %114 : vector<16x16xf32>
    %116 = math.exp %115 : vector<16x16xf32>
    %cst_35 = arith.constant dense<0.000000e+00> : vector<16xf32>
    %117 = vector.multi_reduction <add>, %116, %cst_35 [1] : vector<16x16xf32> to vector<16xf32>
    %118 = vector.shape_cast %117 : vector<16xf32> to vector<16x1xf32>
    %119 = vector.broadcast %118 : vector<16x1xf32> to vector<16x16xf32>
    %120 = arith.divf %116, %119 : vector<16x16xf32>
    %cst_36 = arith.constant dense<0.000000e+00> : vector<16x8xf32>
    %121 = tpu.matmul %120, %106, %cst_36 {dimension_numbers = #tpu.dot_dimension_numbers<[1], [0], [0], [1], [0, 0, 1, 1], [], []>} : vector<16x16xf32>, vector<16x8xf32>, vector<16x8xf32> -> vector<16x8xf32>
    %122 = vector.extract_strided_slice %84 {offsets = [0, 16], sizes = [16, 8], strides = [1, 1]} : vector<16x96xf32> to vector<16x8xf32>
    %123 = vector.extract_strided_slice %84 {offsets = [0, 48], sizes = [16, 8], strides = [1, 1]} : vector<16x96xf32> to vector<16x8xf32>
    %124 = vector.extract_strided_slice %84 {offsets = [0, 80], sizes = [16, 8], strides = [1, 1]} : vector<16x96xf32> to vector<16x8xf32>
    %cst_37 = arith.constant dense<0.000000e+00> : vector<16x16xf32>
    %125 = tpu.matmul %122, %123, %cst_37 {dimension_numbers = #tpu.dot_dimension_numbers<[1], [1], [0], [0], [0, 0, 1, 0], [], []>} : vector<16x8xf32>, vector<16x8xf32>, vector<16x16xf32> -> vector<16x16xf32>
    %cst_38 = arith.constant 0.353553385 : f32
    %126 = vector.broadcast %cst_38 : f32 to vector<16x16xf32>
    %127 = arith.mulf %125, %126 : vector<16x16xf32>
    %128 = vector.extract_strided_slice %85 {offsets = [0, 32], sizes = [16, 16], strides = [1, 1]} : vector<16x64xf32> to vector<16x16xf32>
    %129 = arith.addf %127, %128 : vector<16x16xf32>
    %cst_39 = arith.constant dense<0xFF800000> : vector<16xf32>
    %130 = vector.multi_reduction <maximumf>, %129, %cst_39 [1] : vector<16x16xf32> to vector<16xf32>
    %131 = vector.shape_cast %130 : vector<16xf32> to vector<16x1xf32>
    %132 = vector.broadcast %131 : vector<16x1xf32> to vector<16x16xf32>
    %133 = arith.subf %129, %132 : vector<16x16xf32>
    %134 = math.exp %133 : vector<16x16xf32>
    %cst_40 = arith.constant dense<0.000000e+00> : vector<16xf32>
    %135 = vector.multi_reduction <add>, %134, %cst_40 [1] : vector<16x16xf32> to vector<16xf32>
    %136 = vector.shape_cast %135 : vector<16xf32> to vector<16x1xf32>
    %137 = vector.broadcast %136 : vector<16x1xf32> to vector<16x16xf32>
    %138 = arith.divf %134, %137 : vector<16x16xf32>
    %cst_41 = arith.constant dense<0.000000e+00> : vector<16x8xf32>
    %139 = tpu.matmul %138, %124, %cst_41 {dimension_numbers = #tpu.dot_dimension_numbers<[1], [0], [0], [1], [0, 0, 1, 1], [], []>} : vector<16x16xf32>, vector<16x8xf32>, vector<16x8xf32> -> vector<16x8xf32>
    %140 = vector.extract_strided_slice %84 {offsets = [0, 24], sizes = [16, 8], strides = [1, 1]} : vector<16x96xf32> to vector<16x8xf32>
    %141 = vector.extract_strided_slice %84 {offsets = [0, 56], sizes = [16, 8], strides = [1, 1]} : vector<16x96xf32> to vector<16x8xf32>
    %142 = vector.extract_strided_slice %84 {offsets = [0, 88], sizes = [16, 8], strides = [1, 1]} : vector<16x96xf32> to vector<16x8xf32>
    %cst_42 = arith.constant dense<0.000000e+00> : vector<16x16xf32>
    %143 = tpu.matmul %140, %141, %cst_42 {dimension_numbers = #tpu.dot_dimension_numbers<[1], [1], [0], [0], [0, 0, 1, 0], [], []>} : vector<16x8xf32>, vector<16x8xf32>, vector<16x16xf32> -> vector<16x16xf32>
    %cst_43 = arith.constant 0.353553385 : f32
    %144 = vector.broadcast %cst_43 : f32 to vector<16x16xf32>
    %145 = arith.mulf %143, %144 : vector<16x16xf32>
    %146 = vector.extract_strided_slice %85 {offsets = [0, 48], sizes = [16, 16], strides = [1, 1]} : vector<16x64xf32> to vector<16x16xf32>
    %147 = arith.addf %145, %146 : vector<16x16xf32>
    %cst_44 = arith.constant dense<0xFF800000> : vector<16xf32>
    %148 = vector.multi_reduction <maximumf>, %147, %cst_44 [1] : vector<16x16xf32> to vector<16xf32>
    %149 = vector.shape_cast %148 : vector<16xf32> to vector<16x1xf32>
    %150 = vector.broadcast %149 : vector<16x1xf32> to vector<16x16xf32>
    %151 = arith.subf %147, %150 : vector<16x16xf32>
    %152 = math.exp %151 : vector<16x16xf32>
    %cst_45 = arith.constant dense<0.000000e+00> : vector<16xf32>
    %153 = vector.multi_reduction <add>, %152, %cst_45 [1] : vector<16x16xf32> to vector<16xf32>
    %154 = vector.shape_cast %153 : vector<16xf32> to vector<16x1xf32>
    %155 = vector.broadcast %154 : vector<16x1xf32> to vector<16x16xf32>
    %156 = arith.divf %152, %155 : vector<16x16xf32>
    %cst_46 = arith.constant dense<0.000000e+00> : vector<16x8xf32>
    %157 = tpu.matmul %156, %142, %cst_46 {dimension_numbers = #tpu.dot_dimension_numbers<[1], [0], [0], [1], [0, 0, 1, 1], [], []>} : vector<16x16xf32>, vector<16x8xf32>, vector<16x8xf32> -> vector<16x8xf32>
    %158 = tpu.concatenate %93, %111, %129, %147 in 1 : vector<16x16xf32>, vector<16x16xf32>, vector<16x16xf32>, vector<16x16xf32> -> vector<16x64xf32>
    %159 = tpu.concatenate %103, %121, %139, %157 in 1 : vector<16x8xf32>, vector<16x8xf32>, vector<16x8xf32>, vector<16x8xf32> -> vector<16x32xf32>
    %160 = tpu.concatenate %82, %158 in 0 : vector<16x64xf32>, vector<16x64xf32> -> vector<32x64xf32>
    %c0_47 = arith.constant 0 : index
    %c0_48 = arith.constant 0 : index
    %161 = vector.load %arg12[%c0_47, %c0_48] : memref<32x64xf32, #tpu.memory_space<vmem>>, vector<32x64xf32>
    tpu.vector_store %arg12[%c0_47, %c0_48], %160 {strides = array<i32>} : memref<32x64xf32, #tpu.memory_space<vmem>>, vector<32x64xf32>,
    %162 = tpu.concatenate %83, %159 in 0 : vector<16x32xf32>, vector<16x32xf32> -> vector<32x32xf32>
    %c0_49 = arith.constant 0 : index
    %c0_50 = arith.constant 0 : index
    %c0_51 = arith.constant 0 : index
    %163 = vector.load %arg4[%c0_49, %c0_50, %c0_51] : memref<1x32x32xf32, #tpu.memory_space<vmem>>, vector<1x32x32xf32>
    %164 = vector.shape_cast %163 : vector<1x32x32xf32> to vector<32x32xf32>
    %cst_52 = arith.constant dense<0.000000e+00> : vector<32x32xf32>
    %165 = tpu.matmul %162, %164, %cst_52 {dimension_numbers = #tpu.dot_dimension_numbers<[1], [0], [0], [1], [0, 0, 1, 1], [], []>} : vector<32x32xf32>, vector<32x32xf32>, vector<32x32xf32> -> vector<32x32xf32>
    %166 = arith.addf %3, %165 : vector<32x32xf32>
    %c0_53 = arith.constant 0 : index
    %c0_54 = arith.constant 0 : index
    %c0_55 = arith.constant 0 : index
    %167 = vector.load %arg8[%c0_53, %c0_54, %c0_55] : memref<1x16x4xf32, #tpu.memory_space<vmem>>, vector<1x16x4xf32>
    %168 = vector.shape_cast %167 : vector<1x16x4xf32> to vector<16x4xf32>
    %169 = vector.extract_strided_slice %168 {offsets = [0, 0], sizes = [16, 1], strides = [1, 1]} : vector<16x4xf32> to vector<16x1xf32>
    %170 = vector.extract_strided_slice %168 {offsets = [0, 1], sizes = [16, 1], strides = [1, 1]} : vector<16x4xf32> to vector<16x1xf32>
    %cst_56 = arith.constant dense<0.000000e+00> : vector<32xf32>
    %171 = vector.multi_reduction <add>, %166, %cst_56 [1] : vector<32x32xf32> to vector<32xf32>
    %172 = vector.shape_cast %171 : vector<32xf32> to vector<32x1xf32>
    %173 = vector.extract_strided_slice %172 {offsets = [0, 0], sizes = [16, 1], strides = [1, 1]} : vector<32x1xf32> to vector<16x1xf32>
    %174 = vector.extract_strided_slice %172 {offsets = [16, 0], sizes = [16, 1], strides = [1, 1]} : vector<32x1xf32> to vector<16x1xf32>
    %175 = arith.addf %173, %174 : vector<16x1xf32>
    %cst_57 = arith.constant 1.562500e-02 : f32
    %176 = vector.broadcast %cst_57 : f32 to vector<16x1xf32>
    %177 = arith.mulf %175, %176 : vector<16x1xf32>
    %178 = tpu.concatenate %177, %177 in 0 : vector<16x1xf32>, vector<16x1xf32> -> vector<32x1xf32>
    %179 = vector.broadcast %178 : vector<32x1xf32> to vector<32x32xf32>
    %180 = arith.subf %166, %179 : vector<32x32xf32>
    %181 = arith.mulf %180, %180 : vector<32x32xf32>
    %cst_58 = arith.constant dense<0.000000e+00> : vector<32xf32>
    %182 = vector.multi_reduction <add>, %181, %cst_58 [1] : vector<32x32xf32> to vector<32xf32>
    %183 = vector.shape_cast %182 : vector<32xf32> to vector<32x1xf32>
    %184 = vector.extract_strided_slice %183 {offsets = [0, 0], sizes = [16, 1], strides = [1, 1]} : vector<32x1xf32> to vector<16x1xf32>
    %185 = vector.extract_strided_slice %183 {offsets = [16, 0], sizes = [16, 1], strides = [1, 1]} : vector<32x1xf32> to vector<16x1xf32>
    %186 = arith.addf %184, %185 : vector<16x1xf32>
    %cst_59 = arith.constant 1.562500e-02 : f32
    %187 = vector.broadcast %cst_59 : f32 to vector<16x1xf32>
    %188 = arith.mulf %186, %187 : vector<16x1xf32>
    %cst_60 = arith.constant 9.99999974E-6 : f32
    %189 = vector.broadcast %cst_60 : f32 to vector<16x1xf32>
    %190 = arith.addf %188, %189 : vector<16x1xf32>
    %191 = math.rsqrt %190 : vector<16x1xf32>
    %192 = arith.mulf %191, %169 : vector<16x1xf32>
    %193 = tpu.concatenate %192, %192 in 0 : vector<16x1xf32>, vector<16x1xf32> -> vector<32x1xf32>
    %194 = tpu.concatenate %170, %170 in 0 : vector<16x1xf32>, vector<16x1xf32> -> vector<32x1xf32>
    %195 = vector.broadcast %193 : vector<32x1xf32> to vector<32x32xf32>
    %196 = arith.mulf %180, %195 : vector<32x32xf32>
    %197 = vector.broadcast %194 : vector<32x1xf32> to vector<32x32xf32>
    %198 = arith.addf %196, %197 : vector<32x32xf32>
    %c0_61 = arith.constant 0 : index
    %c0_62 = arith.constant 0 : index
    %c0_63 = arith.constant 0 : index
    %199 = vector.load %arg7[%c0_61, %c0_62, %c0_63] : memref<1x1x96xf32, #tpu.memory_space<vmem>>, vector<1x1x64xf32>
    %200 = vector.shape_cast %199 : vector<1x1x64xf32> to vector<1x64xf32>
    %c0_64 = arith.constant 0 : index
    %c0_65 = arith.constant 0 : index
    %c64 = arith.constant 64 : index
    %201 = vector.load %arg7[%c0_64, %c0_65, %c64] : memref<1x1x96xf32, #tpu.memory_space<vmem>>, vector<1x1x32xf32>
    %202 = vector.shape_cast %201 : vector<1x1x32xf32> to vector<1x32xf32>
    %c0_66 = arith.constant 0 : index
    %c0_67 = arith.constant 0 : index
    %c0_68 = arith.constant 0 : index
    %203 = vector.load %arg5[%c0_66, %c0_67, %c0_68] : memref<1x32x64xf32, #tpu.memory_space<vmem>>, vector<1x32x64xf32>
    %204 = vector.shape_cast %203 : vector<1x32x64xf32> to vector<32x64xf32>
    %cst_69 = arith.constant dense<0.000000e+00> : vector<32x64xf32>
    %205 = tpu.matmul %198, %204, %cst_69 {dimension_numbers = #tpu.dot_dimension_numbers<[1], [0], [0], [1], [0, 0, 1, 1], [], []>} : vector<32x32xf32>, vector<32x64xf32>, vector<32x64xf32> -> vector<32x64xf32>
    %206 = vector.broadcast %200 : vector<1x64xf32> to vector<32x64xf32>
    %207 = arith.addf %205, %206 : vector<32x64xf32>
    %cst_70 = arith.constant 5.000000e-01 : f32
    %208 = vector.broadcast %cst_70 : f32 to vector<32x64xf32>
    %209 = arith.mulf %208, %207 : vector<32x64xf32>
    %cst_71 = arith.constant 0.707106769 : f32
    %210 = vector.broadcast %cst_71 : f32 to vector<32x64xf32>
    %211 = arith.mulf %207, %210 : vector<32x64xf32>
    %212 = math.absf %211 : vector<32x64xf32>
    %cst_72 = arith.constant 0.327591091 : f32
    %213 = vector.broadcast %cst_72 : f32 to vector<32x64xf32>
    %214 = arith.mulf %213, %212 : vector<32x64xf32>
    %cst_73 = arith.constant 1.000000e+00 : f32
    %215 = vector.broadcast %cst_73 : f32 to vector<32x64xf32>
    %216 = arith.addf %215, %214 : vector<32x64xf32>
    %cst_74 = arith.constant 1.000000e+00 : f32
    %217 = vector.broadcast %cst_74 : f32 to vector<32x64xf32>
    %218 = arith.divf %217, %216 : vector<32x64xf32>
    %cst_75 = arith.constant 1.06140542 : f32
    %219 = vector.broadcast %cst_75 : f32 to vector<32x64xf32>
    %220 = arith.mulf %219, %218 : vector<32x64xf32>
    %cst_76 = arith.constant 1.45315206 : f32
    %221 = vector.broadcast %cst_76 : f32 to vector<32x64xf32>
    %222 = arith.subf %220, %221 : vector<32x64xf32>
    %223 = arith.mulf %222, %218 : vector<32x64xf32>
    %cst_77 = arith.constant 1.42141378 : f32
    %224 = vector.broadcast %cst_77 : f32 to vector<32x64xf32>
    %225 = arith.addf %223, %224 : vector<32x64xf32>
    %226 = arith.mulf %225, %218 : vector<32x64xf32>
    %cst_78 = arith.constant 0.284496725 : f32
    %227 = vector.broadcast %cst_78 : f32 to vector<32x64xf32>
    %228 = arith.subf %226, %227 : vector<32x64xf32>
    %229 = arith.mulf %228, %218 : vector<32x64xf32>
    %cst_79 = arith.constant 0.254829586 : f32
    %230 = vector.broadcast %cst_79 : f32 to vector<32x64xf32>
    %231 = arith.addf %229, %230 : vector<32x64xf32>
    %232 = arith.mulf %231, %218 : vector<32x64xf32>
    %cst_80 = arith.constant 0.000000e+00 : f32
    %233 = vector.broadcast %cst_80 : f32 to vector<32x64xf32>
    %234 = arith.subf %233, %212 : vector<32x64xf32>
    %235 = arith.mulf %234, %212 : vector<32x64xf32>
    %236 = math.exp %235 : vector<32x64xf32>
    %237 = arith.mulf %232, %236 : vector<32x64xf32>
    %cst_81 = arith.constant 1.000000e+00 : f32
    %238 = vector.broadcast %cst_81 : f32 to vector<32x64xf32>
    %239 = arith.subf %238, %237 : vector<32x64xf32>
    %cst_82 = arith.constant 0.000000e+00 : f32
    %240 = vector.broadcast %cst_82 : f32 to vector<32x64xf32>
    %241 = arith.cmpf olt, %211, %240 : vector<32x64xf32>
    %cst_83 = arith.constant 0.000000e+00 : f32
    %242 = vector.broadcast %cst_83 : f32 to vector<32x64xf32>
    %243 = arith.subf %242, %239 : vector<32x64xf32>
    %244 = arith.select %241, %243, %239 : vector<32x64xi1>, vector<32x64xf32>
    %cst_84 = arith.constant 1.000000e+00 : f32
    %245 = vector.broadcast %cst_84 : f32 to vector<32x64xf32>
    %246 = arith.addf %245, %244 : vector<32x64xf32>
    %247 = arith.mulf %209, %246 : vector<32x64xf32>
    %c0_85 = arith.constant 0 : index
    %c0_86 = arith.constant 0 : index
    %c0_87 = arith.constant 0 : index
    %248 = vector.load %arg6[%c0_85, %c0_86, %c0_87] : memref<1x64x32xf32, #tpu.memory_space<vmem>>, vector<1x64x32xf32>
    %249 = vector.shape_cast %248 : vector<1x64x32xf32> to vector<64x32xf32>
    %cst_88 = arith.constant dense<0.000000e+00> : vector<32x32xf32>
    %250 = tpu.matmul %247, %249, %cst_88 {dimension_numbers = #tpu.dot_dimension_numbers<[1], [0], [0], [1], [0, 0, 1, 1], [], []>} : vector<32x64xf32>, vector<64x32xf32>, vector<32x32xf32> -> vector<32x32xf32>
    %251 = vector.broadcast %202 : vector<1x32xf32> to vector<32x32xf32>
    %252 = arith.addf %250, %251 : vector<32x32xf32>
    %253 = arith.addf %198, %252 : vector<32x32xf32>
    %254 = vector.extract_strided_slice %168 {offsets = [0, 2], sizes = [16, 1], strides = [1, 1]} : vector<16x4xf32> to vector<16x1xf32>
    %255 = vector.extract_strided_slice %168 {offsets = [0, 3], sizes = [16, 1], strides = [1, 1]} : vector<16x4xf32> to vector<16x1xf32>
    %cst_89 = arith.constant dense<0.000000e+00> : vector<32xf32>
    %256 = vector.multi_reduction <add>, %253, %cst_89 [1] : vector<32x32xf32> to vector<32xf32>
    %257 = vector.shape_cast %256 : vector<32xf32> to vector<32x1xf32>
    %258 = vector.extract_strided_slice %257 {offsets = [0, 0], sizes = [16, 1], strides = [1, 1]} : vector<32x1xf32> to vector<16x1xf32>
    %259 = vector.extract_strided_slice %257 {offsets = [16, 0], sizes = [16, 1], strides = [1, 1]} : vector<32x1xf32> to vector<16x1xf32>
    %260 = arith.addf %258, %259 : vector<16x1xf32>
    %cst_90 = arith.constant 1.562500e-02 : f32
    %261 = vector.broadcast %cst_90 : f32 to vector<16x1xf32>
    %262 = arith.mulf %260, %261 : vector<16x1xf32>
    %263 = tpu.concatenate %262, %262 in 0 : vector<16x1xf32>, vector<16x1xf32> -> vector<32x1xf32>
    %264 = vector.broadcast %263 : vector<32x1xf32> to vector<32x32xf32>
    %265 = arith.subf %253, %264 : vector<32x32xf32>
    %266 = arith.mulf %265, %265 : vector<32x32xf32>
    %cst_91 = arith.constant dense<0.000000e+00> : vector<32xf32>
    %267 = vector.multi_reduction <add>, %266, %cst_91 [1] : vector<32x32xf32> to vector<32xf32>
    %268 = vector.shape_cast %267 : vector<32xf32> to vector<32x1xf32>
    %269 = vector.extract_strided_slice %268 {offsets = [0, 0], sizes = [16, 1], strides = [1, 1]} : vector<32x1xf32> to vector<16x1xf32>
    %270 = vector.extract_strided_slice %268 {offsets = [16, 0], sizes = [16, 1], strides = [1, 1]} : vector<32x1xf32> to vector<16x1xf32>
    %271 = arith.addf %269, %270 : vector<16x1xf32>
    %cst_92 = arith.constant 1.562500e-02 : f32
    %272 = vector.broadcast %cst_92 : f32 to vector<16x1xf32>
    %273 = arith.mulf %271, %272 : vector<16x1xf32>
    %cst_93 = arith.constant 9.99999974E-6 : f32
    %274 = vector.broadcast %cst_93 : f32 to vector<16x1xf32>
    %275 = arith.addf %273, %274 : vector<16x1xf32>
    %276 = math.rsqrt %275 : vector<16x1xf32>
    %277 = arith.mulf %276, %254 : vector<16x1xf32>
    %278 = tpu.concatenate %277, %277 in 0 : vector<16x1xf32>, vector<16x1xf32> -> vector<32x1xf32>
    %279 = tpu.concatenate %255, %255 in 0 : vector<16x1xf32>, vector<16x1xf32> -> vector<32x1xf32>
    %280 = vector.broadcast %278 : vector<32x1xf32> to vector<32x32xf32>
    %281 = arith.mulf %265, %280 : vector<32x32xf32>
    %282 = vector.broadcast %279 : vector<32x1xf32> to vector<32x32xf32>
    %283 = arith.addf %281, %282 : vector<32x32xf32>
    %c1_i32 = arith.constant 1 : i32
    %284 = arith.cmpi slt, %arg0, %c1_i32 : i32
    %285 = arith.extui %284 : i1 to i32
    %c0_i32_94 = arith.constant 0 : i32
    %286 = arith.cmpi ne, %285, %c0_i32_94 : i32
    scf.if %286 {
      %c0_97 = arith.constant 0 : index
      %c0_98 = arith.constant 0 : index
      %290 = vector.load %arg11[%c0_97, %c0_98] : memref<32x32xf32, #tpu.memory_space<vmem>>, vector<32x32xf32>
      tpu.vector_store %arg11[%c0_97, %c0_98], %283 {strides = array<i32>} : memref<32x32xf32, #tpu.memory_space<vmem>>, vector<32x32xf32>,
    } else {
    }
    %c1_i32_95 = arith.constant 1 : i32
    %287 = arith.cmpi eq, %arg0, %c1_i32_95 : i32
    %288 = arith.extui %287 : i1 to i32
    %c0_i32_96 = arith.constant 0 : i32
    %289 = arith.cmpi ne, %288, %c0_i32_96 : i32
    scf.if %289 {
      %c0_97 = arith.constant 0 : index
      %c0_98 = arith.constant 0 : index
      %290 = vector.load %arg9[%c0_97, %c0_98] : memref<33x4xf32, #tpu.memory_space<vmem>>, vector<32x4xf32>
      %c32 = arith.constant 32 : index
      %c0_99 = arith.constant 0 : index
      %291 = vector.load %arg9[%c32, %c0_99] : memref<33x4xf32, #tpu.memory_space<vmem>>, vector<1x4xf32>
      %cst_100 = arith.constant dense<0.000000e+00> : vector<32x4xf32>
      %292 = tpu.matmul %283, %290, %cst_100 {dimension_numbers = #tpu.dot_dimension_numbers<[1], [0], [0], [1], [0, 0, 1, 1], [], []>} : vector<32x32xf32>, vector<32x4xf32>, vector<32x4xf32> -> vector<32x4xf32>
      %293 = vector.broadcast %291 : vector<1x4xf32> to vector<32x4xf32>
      %294 = arith.addf %292, %293 : vector<32x4xf32>
      %295 = tpu.concatenate %283, %294 in 1 : vector<32x32xf32>, vector<32x4xf32> -> vector<32x36xf32>
      %c0_101 = arith.constant 0 : index
      %c0_102 = arith.constant 0 : index
      %296 = vector.load %arg10[%c0_101, %c0_102] : memref<32x36xf32, #tpu.memory_space<vmem>>, vector<32x36xf32>
      tpu.vector_store %arg10[%c0_101, %c0_102], %295 {strides = array<i32>} : memref<32x36xf32, #tpu.memory_space<vmem>>, vector<32x36xf32>,
    } else {
    }
    return
  }
  func.func @transform_0(%arg0: i32) -> (i32, i32) {
    %c0_i32 = arith.constant 0 : i32
    %c0_i32_0 = arith.constant 0 : i32
    %c0_i32_1 = arith.constant 0 : i32
    return %c0_i32, %c0_i32_0 : i32, i32
  }
  func.func @transform_1(%arg0: i32) -> (i32, i32) {
    %c0_i32 = arith.constant 0 : i32
    %c0_i32_0 = arith.constant 0 : i32
    %c0_i32_1 = arith.constant 0 : i32
    return %c0_i32, %c0_i32_0 : i32, i32
  }
  func.func @transform_2(%arg0: i32) -> (i32, i32, i32) {
    %c0_i32 = arith.constant 0 : i32
    %c0_i32_0 = arith.constant 0 : i32
    %c0_i32_1 = arith.constant 0 : i32
    return %arg0, %c0_i32, %c0_i32_0 : i32, i32, i32
  }
  func.func @transform_3(%arg0: i32) -> (i32, i32, i32) {
    %c0_i32 = arith.constant 0 : i32
    %c0_i32_0 = arith.constant 0 : i32
    %c0_i32_1 = arith.constant 0 : i32
    return %arg0, %c0_i32, %c0_i32_0 : i32, i32, i32
  }
  func.func @transform_4(%arg0: i32) -> (i32, i32, i32) {
    %c0_i32 = arith.constant 0 : i32
    %c0_i32_0 = arith.constant 0 : i32
    %c0_i32_1 = arith.constant 0 : i32
    return %arg0, %c0_i32, %c0_i32_0 : i32, i32, i32
  }
  func.func @transform_5(%arg0: i32) -> (i32, i32, i32) {
    %c0_i32 = arith.constant 0 : i32
    %c0_i32_0 = arith.constant 0 : i32
    %c0_i32_1 = arith.constant 0 : i32
    return %arg0, %c0_i32, %c0_i32_0 : i32, i32, i32
  }
  func.func @transform_6(%arg0: i32) -> (i32, i32, i32) {
    %c0_i32 = arith.constant 0 : i32
    %c0_i32_0 = arith.constant 0 : i32
    %c0_i32_1 = arith.constant 0 : i32
    return %arg0, %c0_i32, %c0_i32_0 : i32, i32, i32
  }
  func.func @transform_7(%arg0: i32) -> (i32, i32, i32) {
    %c0_i32 = arith.constant 0 : i32
    %c0_i32_0 = arith.constant 0 : i32
    %c0_i32_1 = arith.constant 0 : i32
    return %arg0, %c0_i32, %c0_i32_0 : i32, i32, i32
  }
  func.func @transform_8(%arg0: i32) -> (i32, i32) {
    %c0_i32 = arith.constant 0 : i32
    %c0_i32_0 = arith.constant 0 : i32
    %c0_i32_1 = arith.constant 0 : i32
    return %c0_i32, %c0_i32_0 : i32, i32
  }
  func.func @transform_9(%arg0: i32) -> (i32, i32) {
    %c0_i32 = arith.constant 0 : i32
    %c0_i32_0 = arith.constant 0 : i32
    %c0_i32_1 = arith.constant 0 : i32
    return %c0_i32, %c0_i32_0 : i32, i32
  }
}

</mosaic_0001>

<llo_original>
// kernel: tpu_custom_call.1
$region0: #{tpu_custom_call.1}
  #allocation0 [shape = 'u32[]', space=smem, size = 0x4, offset = 0x4, fixed_abs, tag = 'smem constant byte address 0x4 - core index']
  #allocation1 [shape = 'u32[144,128]{1,0:T(1,128)}', space=vmem, size = 0x12000, scoped, tag = 'internal scratch']
  #allocation2 [shape = 'f32[32,32]{1,0:T(8,128)}', space=vmem, size = 0x4000, scoped, tag = 'scratch operand']
  #allocation3 [shape = 'f32[32,64]{1,0:T(8,128)}', space=vmem, size = 0x4000, scoped, tag = 'scratch operand']
  %s0 = inlined_call_operand.vmem [shape: f32[32,4], index: 0, kind: input, shape index: {}]
  %s1 = inlined_call_operand.vmem [shape: f32[36,32], index: 1, kind: input, shape index: {}]
  %s2 = inlined_call_operand.vmem [shape: f32[2,32,96], index: 2, kind: input, shape index: {}]
  %s3 = inlined_call_operand.vmem [shape: f32[2,32,32], index: 3, kind: input, shape index: {}]
  %s4 = inlined_call_operand.vmem [shape: f32[2,32,64], index: 4, kind: input, shape index: {}]
  %s5 = inlined_call_operand.vmem [shape: f32[2,64,32], index: 5, kind: input, shape index: {}]
  %s6 = inlined_call_operand.vmem [shape: f32[2,1,96], index: 6, kind: input, shape index: {}]
  %s7 = inlined_call_operand.vmem [shape: f32[2,16,4], index: 7, kind: input, shape index: {}]
  %s8 = inlined_call_operand.vmem [shape: f32[33,4], index: 8, kind: input, shape index: {}]
  %s9 = inlined_call_operand.hbm [shape: f32[32,36], index: 9, kind: output, shape index: {}]
  %s10 = sld [smem:[#allocation0]]
  $region81: #{tpu_custom_call.1} parent=0
    _
  %s12 = ssub.s32 1, %s10
  %s13 = scalar_select 0, %s12, %s10
  $region1: #{tpu_custom_call.1} parent=0
    #allocation4 [shape = 'u8[16384]{0}', space=vmem, size = 0x4000, scoped, tag = 'output window, operand 0, single buffered']
    #allocation5 [shape = 's32[2]{0}', space=sflag, size = 0x8, scoped, tag = 'scoped memory for tpu_custom_call.1']
    %14 = vsyncpa [#allocation5], 0
    loop: start=0, step=1, limit=4
    $region2: #{tpu_custom_call.1} parent=1 // loop_pre_header
      _
    $region3: #{tpu_custom_call.1} parent=1 // loop_header
      %s16 = sphi 0, %s20
      %p17 = scmp.ge.s32.totalorder %s16, 4
      %s24 = sphi 0, %s24
      %s26 = sphi 0, %s24
      %s27 = sphi 0, %s26
      %s41 = sphi 0, %s27
      %s45 = sphi 0, %s45
      %s47 = sphi 0, %s45
      %s48 = sphi 0, %s47
      %s62 = sphi 0, %s48
      %s68 = sphi 0, %s70
      %s71 = sphi 0, %s68
      %s72 = sphi 0, %s71
      %s88 = sphi 0, %s72
      %s94 = sphi 0, %s96
      %s97 = sphi 0, %s94
      %s98 = sphi 0, %s97
      %s114 = sphi 0, %s98
      %s120 = sphi 0, %s122
      %s123 = sphi 0, %s120
      %s124 = sphi 0, %s123
      %s140 = sphi 0, %s124
      %s146 = sphi 0, %s148
      %s149 = sphi 0, %s146
      %s150 = sphi 0, %s149
      %s166 = sphi 0, %s150
      %s172 = sphi 0, %s174
      %s175 = sphi 0, %s172
      %s176 = sphi 0, %s175
      %s192 = sphi 0, %s176
      %s198 = sphi 0, %s200
      %s201 = sphi 0, %s198
      %s202 = sphi 0, %s201
      %s218 = sphi 0, %s202
      %s222 = sphi 0, %s222
      %s224 = sphi 0, %s222
      %s225 = sphi 0, %s224
      %s239 = sphi 0, %s225
      %s243 = sphi 0, %s243
      %s245 = sphi 0, %s243
      %s246 = sphi 0, %s245
      %s260 = sphi 0, %s246
    $region4: #{tpu_custom_call.1} parent=1 // loop_header_branch
      %19 = sbr.rel (%p17) target = $region8
    $region5: #{tpu_custom_call.1} parent=1 // loop_body
      %s21 = ssub.s32 %s16, 1
      %s22 = ssub.s32 %s16, 2
      %s23 = sadd.s32 %s16, 1
      %s25 = sadd.s32 %s24, 1
      %p28 = scmp.eq.s32.totalorder %s16, 1
      %p29 = scmp.ne.s32.totalorder %s24, %s26
      %p30 = scmp.eq.s32.totalorder %s16, 0
      %p31 = por %p29, %p30
      %p32 = scmp.ne.s32.totalorder %s24, %s26
      %p33 = scmp.eq.s32.totalorder %s21, 1
      %p34 = por %p32, %p33
      %p35 = scmp.ne.s32.totalorder %s26, %s27
      %p36 = scmp.eq.s32.totalorder %s21, 0
      %p37 = por %p35, %p36
      %p38 = scmp.ne.s32.totalorder %s26, %s27
      %p39 = scmp.eq.s32.totalorder %s22, 1
      %p40 = por %p38, %p39
      %p42 = scmp.ne.s32.totalorder %s27, %s41
      %p43 = scmp.eq.s32.totalorder %s22, 0
      %p44 = por %p42, %p43
      %s46 = sadd.s32 %s45, 1
      %p49 = scmp.eq.s32.totalorder %s16, 1
      %p50 = scmp.ne.s32.totalorder %s45, %s47
      %p51 = scmp.eq.s32.totalorder %s16, 0
      %p52 = por %p50, %p51
      %p53 = scmp.ne.s32.totalorder %s45, %s47
      %p54 = scmp.eq.s32.totalorder %s21, 1
      %p55 = por %p53, %p54
      %p56 = scmp.ne.s32.totalorder %s47, %s48
      %p57 = scmp.eq.s32.totalorder %s21, 0
      %p58 = por %p56, %p57
      %p59 = scmp.ne.s32.totalorder %s47, %s48
      %p60 = scmp.eq.s32.totalorder %s22, 1
      %p61 = por %p59, %p60
      %p63 = scmp.ne.s32.totalorder %s48, %s62
      %p64 = scmp.eq.s32.totalorder %s22, 0
      %p65 = por %p63, %p64
      %s66 = ssub.s32 %s16, %s23
      %p67 = scmp.eq.s32.totalorder %s66, 0
      %s69 = sadd.s32 %s68, 1
      %s70 = scalar_select %p67, %s68, %s69
      %p73 = pneg %p67
      %p74 = scmp.eq.s32.totalorder %s16, 1
      %p75 = por %p73, %p74
      %p76 = scmp.ne.s32.totalorder %s68, %s71
      %p77 = scmp.eq.s32.totalorder %s16, 0
      %p78 = por %p76, %p77
      %p79 = scmp.ne.s32.totalorder %s68, %s71
      %p80 = scmp.eq.s32.totalorder %s21, 1
      %p81 = por %p79, %p80
      %p82 = scmp.ne.s32.totalorder %s71, %s72
      %p83 = scmp.eq.s32.totalorder %s21, 0
      %p84 = por %p82, %p83
      %p85 = scmp.ne.s32.totalorder %s71, %s72
      %p86 = scmp.eq.s32.totalorder %s22, 1
      %p87 = por %p85, %p86
      %p89 = scmp.ne.s32.totalorder %s72, %s88
      %p90 = scmp.eq.s32.totalorder %s22, 0
      %p91 = por %p89, %p90
      %s92 = ssub.s32 %s16, %s23
      %p93 = scmp.eq.s32.totalorder %s92, 0
      %s95 = sadd.s32 %s94, 1
      %s96 = scalar_select %p93, %s94, %s95
      %p99 = pneg %p93
      %p100 = scmp.eq.s32.totalorder %s16, 1
      %p101 = por %p99, %p100
      %p102 = scmp.ne.s32.totalorder %s94, %s97
      %p103 = scmp.eq.s32.totalorder %s16, 0
      %p104 = por %p102, %p103
      %p105 = scmp.ne.s32.totalorder %s94, %s97
      %p106 = scmp.eq.s32.totalorder %s21, 1
      %p107 = por %p105, %p106
      %p108 = scmp.ne.s32.totalorder %s97, %s98
      %p109 = scmp.eq.s32.totalorder %s21, 0
      %p110 = por %p108, %p109
      %p111 = scmp.ne.s32.totalorder %s97, %s98
      %p112 = scmp.eq.s32.totalorder %s22, 1
      %p113 = por %p111, %p112
      %p115 = scmp.ne.s32.totalorder %s98, %s114
      %p116 = scmp.eq.s32.totalorder %s22, 0
      %p117 = por %p115, %p116
      %s118 = ssub.s32 %s16, %s23
      %p119 = scmp.eq.s32.totalorder %s118, 0
      %s121 = sadd.s32 %s120, 1
      %s122 = scalar_select %p119, %s120, %s121
      %p125 = pneg %p119
      %p126 = scmp.eq.s32.totalorder %s16, 1
      %p127 = por %p125, %p126
      %p128 = scmp.ne.s32.totalorder %s120, %s123
      %p129 = scmp.eq.s32.totalorder %s16, 0
      %p130 = por %p128, %p129
      %p131 = scmp.ne.s32.totalorder %s120, %s123
      %p132 = scmp.eq.s32.totalorder %s21, 1
      %p133 = por %p131, %p132
      %p134 = scmp.ne.s32.totalorder %s123, %s124
      %p135 = scmp.eq.s32.totalorder %s21, 0
      %p136 = por %p134, %p135
      %p137 = scmp.ne.s32.totalorder %s123, %s124
      %p138 = scmp.eq.s32.totalorder %s22, 1
      %p139 = por %p137, %p138
      %p141 = scmp.ne.s32.totalorder %s124, %s140
      %p142 = scmp.eq.s32.totalorder %s22, 0
      %p143 = por %p141, %p142
      %s144 = ssub.s32 %s16, %s23
      %p145 = scmp.eq.s32.totalorder %s144, 0
      %s147 = sadd.s32 %s146, 1
      %s148 = scalar_select %p145, %s146, %s147
      %p151 = pneg %p145
      %p152 = scmp.eq.s32.totalorder %s16, 1
      %p153 = por %p151, %p152
      %p154 = scmp.ne.s32.totalorder %s146, %s149
      %p155 = scmp.eq.s32.totalorder %s16, 0
      %p156 = por %p154, %p155
      %p157 = scmp.ne.s32.totalorder %s146, %s149
      %p158 = scmp.eq.s32.totalorder %s21, 1
      %p159 = por %p157, %p158
      %p160 = scmp.ne.s32.totalorder %s149, %s150
      %p161 = scmp.eq.s32.totalorder %s21, 0
      %p162 = por %p160, %p161
      %p163 = scmp.ne.s32.totalorder %s149, %s150
      %p164 = scmp.eq.s32.totalorder %s22, 1
      %p165 = por %p163, %p164
      %p167 = scmp.ne.s32.totalorder %s150, %s166
      %p168 = scmp.eq.s32.totalorder %s22, 0
      %p169 = por %p167, %p168
      %s170 = ssub.s32 %s16, %s23
      %p171 = scmp.eq.s32.totalorder %s170, 0
      %s173 = sadd.s32 %s172, 1
      %s174 = scalar_select %p171, %s172, %s173
      %p177 = pneg %p171
      %p178 = scmp.eq.s32.totalorder %s16, 1
      %p179 = por %p177, %p178
      %p180 = scmp.ne.s32.totalorder %s172, %s175
      %p181 = scmp.eq.s32.totalorder %s16, 0
      %p182 = por %p180, %p181
      %p183 = scmp.ne.s32.totalorder %s172, %s175
      %p184 = scmp.eq.s32.totalorder %s21, 1
      %p185 = por %p183, %p184
      %p186 = scmp.ne.s32.totalorder %s175, %s176
      %p187 = scmp.eq.s32.totalorder %s21, 0
      %p188 = por %p186, %p187
      %p189 = scmp.ne.s32.totalorder %s175, %s176
      %p190 = scmp.eq.s32.totalorder %s22, 1
      %p191 = por %p189, %p190
      %p193 = scmp.ne.s32.totalorder %s176, %s192
      %p194 = scmp.eq.s32.totalorder %s22, 0
      %p195 = por %p193, %p194
      %s196 = ssub.s32 %s16, %s23
      %p197 = scmp.eq.s32.totalorder %s196, 0
      %s199 = sadd.s32 %s198, 1
      %s200 = scalar_select %p197, %s198, %s199
      %p203 = pneg %p197
      %p204 = scmp.eq.s32.totalorder %s16, 1
      %p205 = por %p203, %p204
      %p206 = scmp.ne.s32.totalorder %s198, %s201
      %p207 = scmp.eq.s32.totalorder %s16, 0
      %p208 = por %p206, %p207
      %p209 = scmp.ne.s32.totalorder %s198, %s201
      %p210 = scmp.eq.s32.totalorder %s21, 1
      %p211 = por %p209, %p210
      %p212 = scmp.ne.s32.totalorder %s201, %s202
      %p213 = scmp.eq.s32.totalorder %s21, 0
      %p214 = por %p212, %p213
      %p215 = scmp.ne.s32.totalorder %s201, %s202
      %p216 = scmp.eq.s32.totalorder %s22, 1
      %p217 = por %p215, %p216
      %p219 = scmp.ne.s32.totalorder %s202, %s218
      %p220 = scmp.eq.s32.totalorder %s22, 0
      %p221 = por %p219, %p220
      %s223 = sadd.s32 %s222, 1
      %p226 = scmp.eq.s32.totalorder %s16, 1
      %p227 = scmp.ne.s32.totalorder %s222, %s224
      %p228 = scmp.eq.s32.totalorder %s16, 0
      %p229 = por %p227, %p228
      %p230 = scmp.ne.s32.totalorder %s222, %s224
      %p231 = scmp.eq.s32.totalorder %s21, 1
      %p232 = por %p230, %p231
      %p233 = scmp.ne.s32.totalorder %s224, %s225
      %p234 = scmp.eq.s32.totalorder %s21, 0
      %p235 = por %p233, %p234
      %p236 = scmp.ne.s32.totalorder %s224, %s225
      %p237 = scmp.eq.s32.totalorder %s22, 1
      %p238 = por %p236, %p237
      %p240 = scmp.ne.s32.totalorder %s225, %s239
      %p241 = scmp.eq.s32.totalorder %s22, 0
      %p242 = por %p240, %p241
      %s244 = sadd.s32 %s243, 1
      %p247 = scmp.eq.s32.totalorder %s16, 1
      %p248 = scmp.ne.s32.totalorder %s243, %s245
      %p249 = scmp.eq.s32.totalorder %s16, 0
      %p250 = por %p248, %p249
      %p251 = scmp.ne.s32.totalorder %s243, %s245
      %p252 = scmp.eq.s32.totalorder %s21, 1
      %p253 = por %p251, %p252
      %p254 = scmp.ne.s32.totalorder %s245, %s246
      %p255 = scmp.eq.s32.totalorder %s21, 0
      %p256 = por %p254, %p255
      %p257 = scmp.ne.s32.totalorder %s245, %s246
      %p258 = scmp.eq.s32.totalorder %s22, 1
      %p259 = por %p257, %p258
      %p261 = scmp.ne.s32.totalorder %s246, %s260
      %p262 = scmp.eq.s32.totalorder %s22, 0
      %p263 = por %p261, %p262
      %p264 = scmp.le.s32.totalorder 1, %s16
      %p265 = scmp.lt.s32.totalorder %s16, 3
      %p266 = pnand %p264, %p265
      %p267 = pneg %p266
      // Predicated region
      $region9: #{tpu_custom_call.1} parent=5 // pred_check
        _
      $region10: #{tpu_custom_call.1} parent=5 // pred_check_branch
        %269 = sbr.rel (%p266) target = $region12
      $region11: #{tpu_custom_call.1} parent=5 // pred_region
        %s270 = ssub.s32 %s16, 1
        // Predicated region
        $region13: #{tpu_custom_call.1} parent=11 // pred_check
          %p271 = pneg %p37
        $region14: #{tpu_custom_call.1} parent=11 // pred_check_branch
          %273 = sbr.rel (%p271) target = $region16
        $region15: #{tpu_custom_call.1} parent=11 // pred_region
          _
        $region16: #{tpu_custom_call.1} parent=11 // pred_fallthru
          _
        // Predicated region
        $region17: #{tpu_custom_call.1} parent=11 // pred_check
          %p274 = pneg %p58
        $region18: #{tpu_custom_call.1} parent=11 // pred_check_branch
          %276 = sbr.rel (%p274) target = $region20
        $region19: #{tpu_custom_call.1} parent=11 // pred_region
          _
        $region20: #{tpu_custom_call.1} parent=11 // pred_fallthru
          _
        // Predicated region
        $region21: #{tpu_custom_call.1} parent=11 // pred_check
          %p277 = pneg %p235
        $region22: #{tpu_custom_call.1} parent=11 // pred_check_branch
          %279 = sbr.rel (%p277) target = $region24
        $region23: #{tpu_custom_call.1} parent=11 // pred_region
          _
        $region24: #{tpu_custom_call.1} parent=11 // pred_fallthru
          _
      $region12: #{tpu_custom_call.1} parent=5 // pred_fallthru
        _
      %p280 = scmp.lt.s32.totalorder %s16, 2
      // Predicated region
      $region25: #{tpu_custom_call.1} parent=5 // pred_check
        %p281 = pneg %p280
      $region26: #{tpu_custom_call.1} parent=5 // pred_check_branch
        %283 = sbr.rel (%p281) target = $region28
      $region27: #{tpu_custom_call.1} parent=5 // pred_region
        // Predicated region
        $region29: #{tpu_custom_call.1} parent=27 // pred_check
          %p284 = pneg %p78
        $region30: #{tpu_custom_call.1} parent=27 // pred_check_branch
          %286 = sbr.rel (%p284) target = $region32
        $region31: #{tpu_custom_call.1} parent=27 // pred_region
          %p287 = scmp.lt.s32.totalorder %s16, 1
          %s288 = scalar_select %p287, %s16, 1
          %s289 = smul.addr %s288, 4
          %s290 = smul.addr %s289, 8
          %s291 = scalar_lea.vmem %s2, %s290
        $region32: #{tpu_custom_call.1} parent=27 // pred_fallthru
          _
        // Predicated region
        $region33: #{tpu_custom_call.1} parent=27 // pred_check
          %p292 = pneg %p104
        $region34: #{tpu_custom_call.1} parent=27 // pred_check_branch
          %294 = sbr.rel (%p292) target = $region36
        $region35: #{tpu_custom_call.1} parent=27 // pred_region
          %p295 = scmp.lt.s32.totalorder %s16, 1
          %s296 = scalar_select %p295, %s16, 1
          %s297 = smul.addr %s296, 4
          %s298 = smul.addr %s297, 8
          %s299 = scalar_lea.vmem %s3, %s298
        $region36: #{tpu_custom_call.1} parent=27 // pred_fallthru
          _
        // Predicated region
        $region37: #{tpu_custom_call.1} parent=27 // pred_check
          %p300 = pneg %p130
        $region38: #{tpu_custom_call.1} parent=27 // pred_check_branch
          %302 = sbr.rel (%p300) target = $region40
        $region39: #{tpu_custom_call.1} parent=27 // pred_region
          %p303 = scmp.lt.s32.totalorder %s16, 1
          %s304 = scalar_select %p303, %s16, 1
          %s305 = smul.addr %s304, 4
          %s306 = smul.addr %s305, 8
          %s307 = scalar_lea.vmem %s4, %s306
        $region40: #{tpu_custom_call.1} parent=27 // pred_fallthru
          _
        // Predicated region
        $region41: #{tpu_custom_call.1} parent=27 // pred_check
          %p308 = pneg %p156
        $region42: #{tpu_custom_call.1} parent=27 // pred_check_branch
          %310 = sbr.rel (%p308) target = $region44
        $region43: #{tpu_custom_call.1} parent=27 // pred_region
          %p311 = scmp.lt.s32.totalorder %s16, 1
          %s312 = scalar_select %p311, %s16, 1
          %s313 = smul.addr %s312, 8
          %s314 = smul.addr %s313, 8
          %s315 = scalar_lea.vmem %s5, %s314
        $region44: #{tpu_custom_call.1} parent=27 // pred_fallthru
          _
        // Predicated region
        $region45: #{tpu_custom_call.1} parent=27 // pred_check
          %p316 = pneg %p182
        $region46: #{tpu_custom_call.1} parent=27 // pred_check_branch
          %318 = sbr.rel (%p316) target = $region48
        $region47: #{tpu_custom_call.1} parent=27 // pred_region
          %p319 = scmp.lt.s32.totalorder %s16, 1
          %s320 = scalar_select %p319, %s16, 1
          %s321 = scalar_lea.vmem %s6, %s320
        $region48: #{tpu_custom_call.1} parent=27 // pred_fallthru
          _
        // Predicated region
        $region49: #{tpu_custom_call.1} parent=27 // pred_check
          %p322 = pneg %p208
        $region50: #{tpu_custom_call.1} parent=27 // pred_check_branch
          %324 = sbr.rel (%p322) target = $region52
        $region51: #{tpu_custom_call.1} parent=27 // pred_region
          %p325 = scmp.lt.s32.totalorder %s16, 1
          %s326 = scalar_select %p325, %s16, 1
          %s327 = smul.addr %s326, 2
          %s328 = smul.addr %s327, 8
          %s329 = scalar_lea.vmem %s7, %s328
        $region52: #{tpu_custom_call.1} parent=27 // pred_fallthru
          _
      $region28: #{tpu_custom_call.1} parent=5 // pred_fallthru
        _
      %p330 = scmp.le.s32.totalorder 1, %s16
      %p331 = scmp.lt.s32.totalorder %s16, 3
      %p332 = pnand %p330, %p331
      %p333 = pneg %p332
      // Predicated region
      $region53: #{tpu_custom_call.1} parent=5 // pred_check
        _
      $region54: #{tpu_custom_call.1} parent=5 // pred_check_branch
        %335 = sbr.rel (%p332) target = $region56
      $region55: #{tpu_custom_call.1} parent=5 // pred_region
        %s336 = ssub.s32 %s16, 1
        %p337 = pneg %p37
        %p338 = pneg %p34
        %p339 = pneg %p58
        %p340 = pneg %p55
        %p341 = scmp.lt.s32.totalorder %s21, 1
        %s342 = scalar_select %p341, %s21, 1
        %s343 = smul.addr %s342, 4
        %s344 = smul.addr %s343, 8
        %s345 = scalar_lea.vmem %s2, %s344
        %p346 = pneg %p84
        %p347 = pneg %p81
        %p348 = scmp.lt.s32.totalorder %s21, 1
        %s349 = scalar_select %p348, %s21, 1
        %s350 = smul.addr %s349, 4
        %s351 = smul.addr %s350, 8
        %s352 = scalar_lea.vmem %s3, %s351
        %p353 = pneg %p110
        %p354 = pneg %p107
        %p355 = scmp.lt.s32.totalorder %s21, 1
        %s356 = scalar_select %p355, %s21, 1
        %s357 = smul.addr %s356, 4
        %s358 = smul.addr %s357, 8
        %s359 = scalar_lea.vmem %s4, %s358
        %p360 = pneg %p136
        %p361 = pneg %p133
        %p362 = scmp.lt.s32.totalorder %s21, 1
        %s363 = scalar_select %p362, %s21, 1
        %s364 = smul.addr %s363, 8
        %s365 = smul.addr %s364, 8
        %s366 = scalar_lea.vmem %s5, %s365
        %p367 = pneg %p162
        %p368 = pneg %p159
        %p369 = scmp.lt.s32.totalorder %s21, 1
        %s370 = scalar_select %p369, %s21, 1
        %s371 = scalar_lea.vmem %s6, %s370
        %p372 = pneg %p188
        %p373 = pneg %p185
        %p374 = scmp.lt.s32.totalorder %s21, 1
        %s375 = scalar_select %p374, %s21, 1
        %s376 = smul.addr %s375, 2
        %s377 = smul.addr %s376, 8
        %s378 = scalar_lea.vmem %s7, %s377
        %p379 = pneg %p214
        %p380 = pneg %p211
        %p381 = pneg %p235
        %p382 = pneg %p232
        %p383 = pneg %p256
        %p384 = pneg %p253
        %p385 = scmp.lt.s32.totalorder %s21, 1
        %s386 = scalar_select %p385, %s21, 1
        %s387 = smul.addr %s386, 4
        %s388 = smul.addr %s387, 8
        %s389 = scalar_lea.vmem %s2, %s388
        %p390 = scmp.lt.s32.totalorder %s21, 1
        %s391 = scalar_select %p390, %s21, 1
        %s392 = smul.addr %s391, 4
        %s393 = smul.addr %s392, 8
        %s394 = scalar_lea.vmem %s3, %s393
        %p395 = scmp.lt.s32.totalorder %s21, 1
        %s396 = scalar_select %p395, %s21, 1
        %s397 = smul.addr %s396, 4
        %s398 = smul.addr %s397, 8
        %s399 = scalar_lea.vmem %s4, %s398
        %p400 = scmp.lt.s32.totalorder %s21, 1
        %s401 = scalar_select %p400, %s21, 1
        %s402 = smul.addr %s401, 8
        %s403 = smul.addr %s402, 8
        %s404 = scalar_lea.vmem %s5, %s403
        %p405 = scmp.lt.s32.totalorder %s21, 1
        %s406 = scalar_select %p405, %s21, 1
        %s407 = scalar_lea.vmem %s6, %s406
        %p408 = scmp.lt.s32.totalorder %s21, 1
        %s409 = scalar_select %p408, %s21, 1
        %s410 = smul.addr %s409, 2
        %s411 = smul.addr %s410, 8
        %s412 = scalar_lea.vmem %s7, %s411
        %p413 = scmp.eq.s32.totalorder %s21, 0
        // Predicated region
        $region57: #{tpu_custom_call.1} parent=55 // pred_check
          %p414 = pneg %p413
        $region58: #{tpu_custom_call.1} parent=55 // pred_check_branch
          %416 = sbr.rel (%p414) target = $region60
        $region59: #{tpu_custom_call.1} parent=55 // pred_region
          %v417 = vld [vmem:[%s0] sm:$0xff]
          %v418 = vld [vmem:[%s0 + $0x8] sm:$0xff]
          %v419 = vld [vmem:[%s0 + $0x10] sm:$0xff]
          %v420 = vld [vmem:[%s0 + $0x18] sm:$0xff]
          %vm421 = vcmp.ne.f32.partialorder %v417, %v417
          %vm422 = vcmp.ne.f32.partialorder %v418, %v418
          %vm423 = vcmp.ne.f32.partialorder %v419, %v419
          %vm424 = vcmp.ne.f32.partialorder %v420, %v420
          %v425 = vsel %vm421, 0.0, %v417
          %v426 = vsel %vm422, 0.0, %v418
          %v427 = vsel %vm423, 0.0, %v419
          %v428 = vsel %vm424, 0.0, %v420
          %v429 = vld [vmem:[%s1] sm:$0xff]
          %v430 = vld [vmem:[%s1 + $0x8] sm:$0xff]
          %v431 = vld [vmem:[%s1 + $0x10] sm:$0xff]
          %v432 = vld [vmem:[%s1 + $0x18] sm:$0xff]
          %v433 = vld [vmem:[%s1 + $0x20] sm:$0xf]
          %vm434 = vcmask 31744
          %v436 = vsel %vm434, %v425, 0
          %v439 = vsel %vm434, %v426, 0
          %v442 = vsel %vm434, %v427, 0
          %v445 = vsel %vm434, %v428, 0
          %vm447 = vcmask 1043456
          %v449 = vsel %vm447, %v433, 0
          %451 = vmatprep.subr.mxu0 0.0
          %452 = vmatpush1.msra.mxu0 %v449
          %453 = vmatprep.subr.mxu0 0.0
          %454 = vmatpush1.msra.mxu0 0.0
          %455 = vmatprep.subr.mxu0 0.0
          %456 = vmatpush1.msra.mxu0 0.0
          %457 = vmatprep.subr.mxu0 0.0
          %458 = vmatpush1.msra.mxu0 0.0
          %459 = vmatprep.subr.mxu0 0.0
          %460 = vmatpush1.msra.mxu0 0.0
          %461 = vmatprep.subr.mxu0 0.0
          %462 = vmatpush1.msra.mxu0 0.0
          %463 = vmatprep.subr.mxu0 0.0
          %464 = vmatpush1.msra.mxu0 0.0
          %465 = vmatprep.subr.mxu0 0.0
          %466 = vmatpush1.msra.mxu0 0.0
          %467 = vmatprep.subr.mxu0 0.0
          %468 = vmatpush1.msra.mxu0 0.0
          %469 = vmatprep.subr.mxu0 0.0
          %470 = vmatpush1.msra.mxu0 0.0
          %471 = vmatprep.subr.mxu0 0.0
          %472 = vmatpush1.msra.mxu0 0.0
          %473 = vmatprep.subr.mxu0 0.0
          %474 = vmatpush1.msra.mxu0 0.0
          %475 = vmatprep.subr.mxu0 0.0
          %476 = vmatpush1.msra.mxu0 0.0
          %477 = vmatprep.subr.mxu0 0.0
          %478 = vmatpush1.msra.mxu0 0.0
          %479 = vmatprep.subr.mxu0 0.0
          %480 = vmatpush1.msra.mxu0 0.0
          %481 = vmatprep.subr.mxu0 0.0
          %482 = vmatpush1.msra.mxu0 0.0
          %483 = vmatprep.subr.mxu0 0.0
          %484 = vmatpush1.msra.mxu0 0.0
          %485 = vmatprep.subr.mxu0 0.0
          %486 = vmatpush1.msra.mxu0 0.0
          %487 = vmatprep.subr.mxu0 0.0
          %488 = vmatpush1.msra.mxu0 0.0
          %489 = vmatprep.subr.mxu0 0.0
          %490 = vmatpush1.msra.mxu0 0.0
          %491 = vmatprep.subr.mxu0 0.0
          %492 = vmatpush1.msra.mxu0 0.0
          %493 = vmatprep.subr.mxu0 0.0
          %494 = vmatpush1.msra.mxu0 0.0
          %495 = vmatprep.subr.mxu0 0.0
          %496 = vmatpush1.msra.mxu0 0.0
          %497 = vmatprep.subr.mxu0 0.0
          %498 = vmatpush1.msra.mxu0 0.0
          %499 = vmatprep.subr.mxu0 0.0
          %500 = vmatpush1.msra.mxu0 0.0
          %501 = vmatprep.subr.mxu0 0.0
          %502 = vmatpush1.msra.mxu0 0.0
          %503 = vmatprep.subr.mxu0 0.0
          %504 = vmatpush1.msra.mxu0 0.0
          %505 = vmatprep.subr.mxu0 0.0
          %506 = vmatpush1.msra.mxu0 0.0
          %507 = vmatprep.subr.mxu0 0.0
          %508 = vmatpush1.msra.mxu0 0.0
          %509 = vmatprep.subr.mxu0 0.0
          %510 = vmatpush1.msra.mxu0 0.0
          %511 = vmatprep.subr.mxu0 0.0
          %512 = vmatpush1.msra.mxu0 0.0
          %513 = vmatprep.subr.mxu0 0.0
          %514 = vmatpush1.msra.mxu0 0.0
          %515 = vmatprep.mubr.f32.mxu0 0.0
          %516 = vmatmul.mubr.f32.gmra.mrb[0].mxu0 %v436
          %v517 = vpop.f32.mrb[0].mxu0
          %v518 = vadd.f32 %v429, %v517
          %v519 = vpop.f32.mrb[0].mxu0
          %520 = vmatprep.mubr.f32.mxu0 0.0
          %521 = vmatmul.mubr.f32.gmra.mrb[0].mxu0 %v439
          %v522 = vpop.f32.mrb[0].mxu0
          %v523 = vadd.f32 %v430, %v522
          %v524 = vpop.f32.mrb[0].mxu0
          %525 = vmatprep.mubr.f32.mxu0 0.0
          %526 = vmatmul.mubr.f32.gmra.mrb[0].mxu0 %v442
          %v527 = vpop.f32.mrb[0].mxu0
          %v528 = vadd.f32 %v431, %v527
          %v529 = vpop.f32.mrb[0].mxu0
          %530 = vmatprep.mubr.f32.mxu0 0.0
          %531 = vmatmul.mubr.f32.gmra.mrb[0].mxu0 %v445
          %v532 = vpop.f32.mrb[0].mxu0
          %v533 = vadd.f32 %v432, %v532
          %v534 = vpop.f32.mrb[0].mxu0
          %535 = vdwg.mxu0
          %vm536 = vcmask 261120
          %537 = vst.msk [vmem:[#allocation2] sm:$0xff] %vm536, %v518
          %538 = vst.msk [vmem:[#allocation2 + $0x8] sm:$0xff] %vm536, %v523
          %539 = vst.msk [vmem:[#allocation2 + $0x10] sm:$0xff] %vm536, %v528
          %540 = vst.msk [vmem:[#allocation2 + $0x18] sm:$0xff] %vm536, %v533
          %vm541 = vcmask 523264
          %542 = vst.msk [vmem:[#allocation3] sm:$0xff] %vm541, 0.0
          %543 = vst.msk [vmem:[#allocation3 + $0x8] sm:$0xff] %vm541, 0.0
          %544 = vst.msk [vmem:[#allocation3 + $0x10] sm:$0xff] %vm541, 0.0
          %545 = vst.msk [vmem:[#allocation3 + $0x18] sm:$0xff] %vm541, 0.0
        $region60: #{tpu_custom_call.1} parent=55 // pred_fallthru
          _
        %v546 = vld [vmem:[#allocation2] sm:$0xff]
        %v547 = vld [vmem:[#allocation2 + $0x8] sm:$0xff]
        %v548 = vld [vmem:[#allocation2 + $0x10] sm:$0xff]
        %v549 = vld [vmem:[#allocation2 + $0x18] sm:$0xff]
        %v550 = vld [vmem:[%s389] sm:$0xff]
        %v551 = vld [vmem:[%s389 + $0x8] sm:$0xff]
        %v552 = vld [vmem:[%s389 + $0x10] sm:$0xff]
        %v553 = vld [vmem:[%s389 + $0x18] sm:$0xff]
        %vm554 = vcmask 261120
        %v556 = vsel %vm554, %v546, 0
        %v559 = vsel %vm554, %v547, 0
        %v562 = vsel %vm554, %v548, 0
        %v565 = vsel %vm554, %v549, 0
        %567 = vmatprep.subr.mxu0 0.0
        %568 = vmatpush1.msra.mxu0 %v550
        %569 = vmatprep.subr.mxu0 0.0
        %570 = vmatpush1.msra.mxu0 %v551
        %571 = vmatprep.subr.mxu0 0.0
        %572 = vmatpush1.msra.mxu0 %v552
        %573 = vmatprep.subr.mxu0 0.0
        %574 = vmatpush1.msra.mxu0 %v553
        %575 = vmatprep.subr.mxu0 0.0
        %576 = vmatpush1.msra.mxu0 0.0
        %577 = vmatprep.subr.mxu0 0.0
        %578 = vmatpush1.msra.mxu0 0.0
        %579 = vmatprep.subr.mxu0 0.0
        %580 = vmatpush1.msra.mxu0 0.0
        %581 = vmatprep.subr.mxu0 0.0
        %582 = vmatpush1.msra.mxu0 0.0
        %583 = vmatprep.subr.mxu0 0.0
        %584 = vmatpush1.msra.mxu0 0.0
        %585 = vmatprep.subr.mxu0 0.0
        %586 = vmatpush1.msra.mxu0 0.0
        %587 = vmatprep.subr.mxu0 0.0
        %588 = vmatpush1.msra.mxu0 0.0
        %589 = vmatprep.subr.mxu0 0.0
        %590 = vmatpush1.msra.mxu0 0.0
        %591 = vmatprep.subr.mxu0 0.0
        %592 = vmatpush1.msra.mxu0 0.0
        %593 = vmatprep.subr.mxu0 0.0
        %594 = vmatpush1.msra.mxu0 0.0
        %595 = vmatprep.subr.mxu0 0.0
        %596 = vmatpush1.msra.mxu0 0.0
        %597 = vmatprep.subr.mxu0 0.0
        %598 = vmatpush1.msra.mxu0 0.0
        %599 = vmatprep.subr.mxu0 0.0
        %600 = vmatpush1.msra.mxu0 0.0
        %601 = vmatprep.subr.mxu0 0.0
        %602 = vmatpush1.msra.mxu0 0.0
        %603 = vmatprep.subr.mxu0 0.0
        %604 = vmatpush1.msra.mxu0 0.0
        %605 = vmatprep.subr.mxu0 0.0
        %606 = vmatpush1.msra.mxu0 0.0
        %607 = vmatprep.subr.mxu0 0.0
        %608 = vmatpush1.msra.mxu0 0.0
        %609 = vmatprep.subr.mxu0 0.0
        %610 = vmatpush1.msra.mxu0 0.0
        %611 = vmatprep.subr.mxu0 0.0
        %612 = vmatpush1.msra.mxu0 0.0
        %613 = vmatprep.subr.mxu0 0.0
        %614 = vmatpush1.msra.mxu0 0.0
        %615 = vmatprep.subr.mxu0 0.0
        %616 = vmatpush1.msra.mxu0 0.0
        %617 = vmatprep.subr.mxu0 0.0
        %618 = vmatpush1.msra.mxu0 0.0
        %619 = vmatprep.subr.mxu0 0.0
        %620 = vmatpush1.msra.mxu0 0.0
        %621 = vmatprep.subr.mxu0 0.0
        %622 = vmatpush1.msra.mxu0 0.0
        %623 = vmatprep.subr.mxu0 0.0
        %624 = vmatpush1.msra.mxu0 0.0
        %625 = vmatprep.subr.mxu0 0.0
        %626 = vmatpush1.msra.mxu0 0.0
        %627 = vmatprep.subr.mxu0 0.0
        %628 = vmatpush1.msra.mxu0 0.0
        %629 = vmatprep.subr.mxu0 0.0
        %630 = vmatpush1.msra.mxu0 0.0
        %631 = vmatprep.mubr.f32.mxu0 0.0
        %632 = vmatmul.mubr.f32.gmra.mrb[0].mxu0 %v556
        %v633 = vpop.f32.mrb[0].mxu0
        %v634 = vadd.f32 0.0, %v633
        %v635 = vpop.f32.mrb[0].mxu0
        %636 = vmatprep.mubr.f32.mxu0 0.0
        %637 = vmatmul.mubr.f32.gmra.mrb[0].mxu0 %v559
        %v638 = vpop.f32.mrb[0].mxu0
        %v639 = vadd.f32 0.0, %v638
        %v640 = vpop.f32.mrb[0].mxu0
        %641 = vmatprep.mubr.f32.mxu0 0.0
        %642 = vmatmul.mubr.f32.gmra.mrb[0].mxu0 %v562
        %v643 = vpop.f32.mrb[0].mxu0
        %v644 = vadd.f32 0.0, %v643
        %v645 = vpop.f32.mrb[0].mxu0
        %646 = vmatprep.mubr.f32.mxu0 0.0
        %647 = vmatmul.mubr.f32.gmra.mrb[0].mxu0 %v565
        %v648 = vpop.f32.mrb[0].mxu0
        %v649 = vadd.f32 0.0, %v648
        %v650 = vpop.f32.mrb[0].mxu0
        %651 = vdwg.mxu0
        %v652 = vld [vmem:[#allocation3] sm:$0xff]
        %v653 = vld [vmem:[#allocation3 + $0x8] sm:$0xff]
        %v654 = vld [vmem:[#allocation3 + $0x10] sm:$0xff]
        %v655 = vld [vmem:[#allocation3 + $0x18] sm:$0xff]
        %658 = vrot.lane.b32.xlu0 %v634, 96
        %v659 = vpop.permute.xlu0 %658
        %660 = vrot.lane.b32.xlu0 %v639, 96
        %v661 = vpop.permute.xlu0 %660
        %vm662 = vcmask 64512
        %v663 = vsel %vm662, %v634, 0
        %v665 = vsel %vm662, %v639, 0
        %v667 = vsel %vm662, %v659, 0
        %v669 = vsel %vm662, %v661, 0
        %671 = vmatprep.subr.mxu0 0.0
        %672 = vmatpush1.xpose.msra.mxu0 %v667
        %673 = vmatprep.subr.mxu0 0.0
        %674 = vmatpush1.xpose.msra.mxu0 %v669
        %675 = vmatprep.subr.mxu0 0.0
        %676 = vmatpush1.xpose.msra.mxu0 0.0
        %677 = vmatprep.subr.mxu0 0.0
        %678 = vmatpush1.xpose.msra.mxu0 0.0
        %679 = vmatprep.subr.mxu0 0.0
        %680 = vmatpush1.xpose.msra.mxu0 0.0
        %681 = vmatprep.subr.mxu0 0.0
        %682 = vmatpush1.xpose.msra.mxu0 0.0
        %683 = vmatprep.subr.mxu0 0.0
        %684 = vmatpush1.xpose.msra.mxu0 0.0
        %685 = vmatprep.subr.mxu0 0.0
        %686 = vmatpush1.xpose.msra.mxu0 0.0
        %687 = vmatprep.subr.mxu0 0.0
        %688 = vmatpush1.xpose.msra.mxu0 0.0
        %689 = vmatprep.subr.mxu0 0.0
        %690 = vmatpush1.xpose.msra.mxu0 0.0
        %691 = vmatprep.subr.mxu0 0.0
        %692 = vmatpush1.xpose.msra.mxu0 0.0
        %693 = vmatprep.subr.mxu0 0.0
        %694 = vmatpush1.xpose.msra.mxu0 0.0
        %695 = vmatprep.subr.mxu0 0.0
        %696 = vmatpush1.xpose.msra.mxu0 0.0
        %697 = vmatprep.subr.mxu0 0.0
        %698 = vmatpush1.xpose.msra.mxu0 0.0
        %699 = vmatprep.subr.mxu0 0.0
        %700 = vmatpush1.xpose.msra.mxu0 0.0
        %701 = vmatprep.subr.mxu0 0.0
        %702 = vmatpush1.xpose.msra.mxu0 0.0
        %703 = vmatprep.subr.mxu0 0.0
        %704 = vmatpush1.xpose.msra.mxu0 0.0
        %705 = vmatprep.subr.mxu0 0.0
        %706 = vmatpush1.xpose.msra.mxu0 0.0
        %707 = vmatprep.subr.mxu0 0.0
        %708 = vmatpush1.xpose.msra.mxu0 0.0
        %709 = vmatprep.subr.mxu0 0.0
        %710 = vmatpush1.xpose.msra.mxu0 0.0
        %711 = vmatprep.subr.mxu0 0.0
        %712 = vmatpush1.xpose.msra.mxu0 0.0
        %713 = vmatprep.subr.mxu0 0.0
        %714 = vmatpush1.xpose.msra.mxu0 0.0
        %715 = vmatprep.subr.mxu0 0.0
        %716 = vmatpush1.xpose.msra.mxu0 0.0
        %717 = vmatprep.subr.mxu0 0.0
        %718 = vmatpush1.xpose.msra.mxu0 0.0
        %719 = vmatprep.subr.mxu0 0.0
        %720 = vmatpush1.xpose.msra.mxu0 0.0
        %721 = vmatprep.subr.mxu0 0.0
        %722 = vmatpush1.xpose.msra.mxu0 0.0
        %723 = vmatprep.subr.mxu0 0.0
        %724 = vmatpush1.xpose.msra.mxu0 0.0
        %725 = vmatprep.subr.mxu0 0.0
        %726 = vmatpush1.xpose.msra.mxu0 0.0
        %727 = vmatprep.subr.mxu0 0.0
        %728 = vmatpush1.xpose.msra.mxu0 0.0
        %729 = vmatprep.subr.mxu0 0.0
        %730 = vmatpush1.xpose.msra.mxu0 0.0
        %731 = vmatprep.subr.mxu0 0.0
        %732 = vmatpush1.xpose.msra.mxu0 0.0
        %733 = vmatprep.subr.mxu0 0.0
        %734 = vmatpush1.xpose.msra.mxu0 0.0
        %735 = vmatprep.mubr.f32.mxu0 0.0
        %736 = vmatmul.mubr.f32.gmra.mrb[0].mxu0 %v663
        %v737 = vpop.f32.mrb[0].mxu0
        %v738 = vadd.f32 0.0, %v737
        %v739 = vpop.f32.mrb[0].mxu0
        %740 = vmatprep.mubr.f32.mxu0 0.0
        %741 = vmatmul.mubr.f32.gmra.mrb[0].mxu0 %v665
        %v742 = vpop.f32.mrb[0].mxu0
        %v743 = vadd.f32 0.0, %v742
        %v744 = vpop.f32.mrb[0].mxu0
        %745 = vdwg.mxu0
        %v746 = vmul.f32 %v738, 0.35355338
        %v747 = vmul.f32 %v743, 0.35355338
        %v748 = vadd.f32 %v746, %v652
        %v749 = vadd.f32 %v747, %v653
        %vm750 = vcmask 130048
        %v751 = vsel %vm750, %v748, -inf
        %752 = vmax.xlane.f32.xlu0 %v751
        %v753 = vpop.xlane.xlu0 %752
        %v754 = vsel %vm750, %v749, -inf
        %755 = vmax.xlane.f32.xlu0 %v754
        %v756 = vpop.xlane.xlu0 %755
        %v757 = vsub.f32 %v748, %v753
        %v758 = vsub.f32 %v749, %v756
        %v759 = vmul.f32 %v757, 1.442695
        %v760 = vpow.pop %v759
        %v761 = vmul.f32 %v758, 1.442695
        %v762 = vpow.pop %v761
        %v763 = vsel %vm750, %v760, 0.0
        %764 = vadd.xlane.f32.xlu0 %v763
        %v765 = vpop.xlane.xlu0 %764
        %v766 = vsel %vm750, %v762, 0.0
        %767 = vadd.xlane.f32.xlu0 %v766
        %v768 = vpop.xlane.xlu0 %767
        %v769 = vrcp.pop %v765
        %v770 = vmul.f32 %v760, %v769
        %v771 = vrcp.pop %v768
        %v772 = vmul.f32 %v762, %v771
        %773 = vrot.lane.b32.xlu0 %v634, 64
        %v774 = vpop.permute.xlu0 %773
        %775 = vrot.lane.b32.xlu0 %v639, 64
        %v776 = vpop.permute.xlu0 %775
        %v780 = vsel %vm750, %v770, 0
        %v783 = vsel %vm750, %v772, 0
        %785 = vmatprep.subr.mxu0 0.0
        %786 = vmatpush1.msra.mxu0 %v774
        %787 = vmatprep.subr.mxu0 0.0
        %788 = vmatpush1.msra.mxu0 %v776
        %789 = vmatprep.subr.mxu0 0.0
        %790 = vmatpush1.msra.mxu0 0.0
        %791 = vmatprep.subr.mxu0 0.0
        %792 = vmatpush1.msra.mxu0 0.0
        %793 = vmatprep.subr.mxu0 0.0
        %794 = vmatpush1.msra.mxu0 0.0
        %795 = vmatprep.subr.mxu0 0.0
        %796 = vmatpush1.msra.mxu0 0.0
        %797 = vmatprep.subr.mxu0 0.0
        %798 = vmatpush1.msra.mxu0 0.0
        %799 = vmatprep.subr.mxu0 0.0
        %800 = vmatpush1.msra.mxu0 0.0
        %801 = vmatprep.subr.mxu0 0.0
        %802 = vmatpush1.msra.mxu0 0.0
        %803 = vmatprep.subr.mxu0 0.0
        %804 = vmatpush1.msra.mxu0 0.0
        %805 = vmatprep.subr.mxu0 0.0
        %806 = vmatpush1.msra.mxu0 0.0
        %807 = vmatprep.subr.mxu0 0.0
        %808 = vmatpush1.msra.mxu0 0.0
        %809 = vmatprep.subr.mxu0 0.0
        %810 = vmatpush1.msra.mxu0 0.0
        %811 = vmatprep.subr.mxu0 0.0
        %812 = vmatpush1.msra.mxu0 0.0
        %813 = vmatprep.subr.mxu0 0.0
        %814 = vmatpush1.msra.mxu0 0.0
        %815 = vmatprep.subr.mxu0 0.0
        %816 = vmatpush1.msra.mxu0 0.0
        %817 = vmatprep.subr.mxu0 0.0
        %818 = vmatpush1.msra.mxu0 0.0
        %819 = vmatprep.subr.mxu0 0.0
        %820 = vmatpush1.msra.mxu0 0.0
        %821 = vmatprep.subr.mxu0 0.0
        %822 = vmatpush1.msra.mxu0 0.0
        %823 = vmatprep.subr.mxu0 0.0
        %824 = vmatpush1.msra.mxu0 0.0
        %825 = vmatprep.subr.mxu0 0.0
        %826 = vmatpush1.msra.mxu0 0.0
        %827 = vmatprep.subr.mxu0 0.0
        %828 = vmatpush1.msra.mxu0 0.0
        %829 = vmatprep.subr.mxu0 0.0
        %830 = vmatpush1.msra.mxu0 0.0
        %831 = vmatprep.subr.mxu0 0.0
        %832 = vmatpush1.msra.mxu0 0.0
        %833 = vmatprep.subr.mxu0 0.0
        %834 = vmatpush1.msra.mxu0 0.0
        %835 = vmatprep.subr.mxu0 0.0
        %836 = vmatpush1.msra.mxu0 0.0
        %837 = vmatprep.subr.mxu0 0.0
        %838 = vmatpush1.msra.mxu0 0.0
        %839 = vmatprep.subr.mxu0 0.0
        %840 = vmatpush1.msra.mxu0 0.0
        %841 = vmatprep.subr.mxu0 0.0
        %842 = vmatpush1.msra.mxu0 0.0
        %843 = vmatprep.subr.mxu0 0.0
        %844 = vmatpush1.msra.mxu0 0.0
        %845 = vmatprep.subr.mxu0 0.0
        %846 = vmatpush1.msra.mxu0 0.0
        %847 = vmatprep.subr.mxu0 0.0
        %848 = vmatpush1.msra.mxu0 0.0
        %849 = vmatprep.mubr.f32.mxu0 0.0
        %850 = vmatmul.mubr.f32.gmra.mrb[0].mxu0 %v780
        %v851 = vpop.f32.mrb[0].mxu0
        %v852 = vadd.f32 0.0, %v851
        %v853 = vpop.f32.mrb[0].mxu0
        %854 = vmatprep.mubr.f32.mxu0 0.0
        %855 = vmatmul.mubr.f32.gmra.mrb[0].mxu0 %v783
        %v856 = vpop.f32.mrb[0].mxu0
        %v857 = vadd.f32 0.0, %v856
        %v858 = vpop.f32.mrb[0].mxu0
        %859 = vdwg.mxu0
        %860 = vrot.lane.b32.xlu0 %v634, 120
        %v861 = vpop.permute.xlu0 %860
        %862 = vrot.lane.b32.xlu0 %v639, 120
        %v863 = vpop.permute.xlu0 %862
        %864 = vrot.lane.b32.xlu0 %v634, 88
        %v865 = vpop.permute.xlu0 %864
        %866 = vrot.lane.b32.xlu0 %v639, 88
        %v867 = vpop.permute.xlu0 %866
        %v868 = vsel %vm662, %v861, 0
        %v870 = vsel %vm662, %v863, 0
        %v872 = vsel %vm662, %v865, 0
        %v874 = vsel %vm662, %v867, 0
        %876 = vmatprep.subr.mxu0 0.0
        %877 = vmatpush1.xpose.msra.mxu0 %v872
        %878 = vmatprep.subr.mxu0 0.0
        %879 = vmatpush1.xpose.msra.mxu0 %v874
        %880 = vmatprep.subr.mxu0 0.0
        %881 = vmatpush1.xpose.msra.mxu0 0.0
        %882 = vmatprep.subr.mxu0 0.0
        %883 = vmatpush1.xpose.msra.mxu0 0.0
        %884 = vmatprep.subr.mxu0 0.0
        %885 = vmatpush1.xpose.msra.mxu0 0.0
        %886 = vmatprep.subr.mxu0 0.0
        %887 = vmatpush1.xpose.msra.mxu0 0.0
        %888 = vmatprep.subr.mxu0 0.0
        %889 = vmatpush1.xpose.msra.mxu0 0.0
        %890 = vmatprep.subr.mxu0 0.0
        %891 = vmatpush1.xpose.msra.mxu0 0.0
        %892 = vmatprep.subr.mxu0 0.0
        %893 = vmatpush1.xpose.msra.mxu0 0.0
        %894 = vmatprep.subr.mxu0 0.0
        %895 = vmatpush1.xpose.msra.mxu0 0.0
        %896 = vmatprep.subr.mxu0 0.0
        %897 = vmatpush1.xpose.msra.mxu0 0.0
        %898 = vmatprep.subr.mxu0 0.0
        %899 = vmatpush1.xpose.msra.mxu0 0.0
        %900 = vmatprep.subr.mxu0 0.0
        %901 = vmatpush1.xpose.msra.mxu0 0.0
        %902 = vmatprep.subr.mxu0 0.0
        %903 = vmatpush1.xpose.msra.mxu0 0.0
        %904 = vmatprep.subr.mxu0 0.0
        %905 = vmatpush1.xpose.msra.mxu0 0.0
        %906 = vmatprep.subr.mxu0 0.0
        %907 = vmatpush1.xpose.msra.mxu0 0.0
        %908 = vmatprep.subr.mxu0 0.0
        %909 = vmatpush1.xpose.msra.mxu0 0.0
        %910 = vmatprep.subr.mxu0 0.0
        %911 = vmatpush1.xpose.msra.mxu0 0.0
        %912 = vmatprep.subr.mxu0 0.0
        %913 = vmatpush1.xpose.msra.mxu0 0.0
        %914 = vmatprep.subr.mxu0 0.0
        %915 = vmatpush1.xpose.msra.mxu0 0.0
        %916 = vmatprep.subr.mxu0 0.0
        %917 = vmatpush1.xpose.msra.mxu0 0.0
        %918 = vmatprep.subr.mxu0 0.0
        %919 = vmatpush1.xpose.msra.mxu0 0.0
        %920 = vmatprep.subr.mxu0 0.0
        %921 = vmatpush1.xpose.msra.mxu0 0.0
        %922 = vmatprep.subr.mxu0 0.0
        %923 = vmatpush1.xpose.msra.mxu0 0.0
        %924 = vmatprep.subr.mxu0 0.0
        %925 = vmatpush1.xpose.msra.mxu0 0.0
        %926 = vmatprep.subr.mxu0 0.0
        %927 = vmatpush1.xpose.msra.mxu0 0.0
        %928 = vmatprep.subr.mxu0 0.0
        %929 = vmatpush1.xpose.msra.mxu0 0.0
        %930 = vmatprep.subr.mxu0 0.0
        %931 = vmatpush1.xpose.msra.mxu0 0.0
        %932 = vmatprep.subr.mxu0 0.0
        %933 = vmatpush1.xpose.msra.mxu0 0.0
        %934 = vmatprep.subr.mxu0 0.0
        %935 = vmatpush1.xpose.msra.mxu0 0.0
        %936 = vmatprep.subr.mxu0 0.0
        %937 = vmatpush1.xpose.msra.mxu0 0.0
        %938 = vmatprep.subr.mxu0 0.0
        %939 = vmatpush1.xpose.msra.mxu0 0.0
        %940 = vmatprep.mubr.f32.mxu0 0.0
        %941 = vmatmul.mubr.f32.gmra.mrb[0].mxu0 %v868
        %v942 = vpop.f32.mrb[0].mxu0
        %v943 = vadd.f32 0.0, %v942
        %v944 = vpop.f32.mrb[0].mxu0
        %945 = vmatprep.mubr.f32.mxu0 0.0
        %946 = vmatmul.mubr.f32.gmra.mrb[0].mxu0 %v870
        %v947 = vpop.f32.mrb[0].mxu0
        %v948 = vadd.f32 0.0, %v947
        %v949 = vpop.f32.mrb[0].mxu0
        %950 = vdwg.mxu0
        %v951 = vmul.f32 %v943, 0.35355338
        %v952 = vmul.f32 %v948, 0.35355338
        %955 = vrot.lane.b32.xlu0 %v652, 112
        %v956 = vpop.permute.xlu0 %955
        %957 = vrot.lane.b32.xlu0 %v653, 112
        %v958 = vpop.permute.xlu0 %957
        %v961 = vadd.f32 %v951, %v956
        %v962 = vadd.f32 %v952, %v958
        %v963 = vsel %vm750, %v961, -inf
        %964 = vmax.xlane.f32.xlu0 %v963
        %v965 = vpop.xlane.xlu0 %964
        %v966 = vsel %vm750, %v962, -inf
        %967 = vmax.xlane.f32.xlu0 %v966
        %v968 = vpop.xlane.xlu0 %967
        %v969 = vsub.f32 %v961, %v965
        %v970 = vsub.f32 %v962, %v968
        %v971 = vmul.f32 %v969, 1.442695
        %v972 = vpow.pop %v971
        %v973 = vmul.f32 %v970, 1.442695
        %v974 = vpow.pop %v973
        %v975 = vsel %vm750, %v972, 0.0
        %976 = vadd.xlane.f32.xlu0 %v975
        %v977 = vpop.xlane.xlu0 %976
        %v978 = vsel %vm750, %v974, 0.0
        %979 = vadd.xlane.f32.xlu0 %v978
        %v980 = vpop.xlane.xlu0 %979
        %v981 = vrcp.pop %v977
        %v982 = vmul.f32 %v972, %v981
        %v983 = vrcp.pop %v980
        %v984 = vmul.f32 %v974, %v983
        %985 = vrot.lane.b32.xlu0 %v634, 56
        %v986 = vpop.permute.xlu0 %985
        %987 = vrot.lane.b32.xlu0 %v639, 56
        %v988 = vpop.permute.xlu0 %987
        %v992 = vsel %vm750, %v982, 0
        %v995 = vsel %vm750, %v984, 0
        %997 = vmatprep.subr.mxu0 0.0
        %998 = vmatpush1.msra.mxu0 %v986
        %999 = vmatprep.subr.mxu0 0.0
        %1000 = vmatpush1.msra.mxu0 %v988
        %1001 = vmatprep.subr.mxu0 0.0
        %1002 = vmatpush1.msra.mxu0 0.0
        %1003 = vmatprep.subr.mxu0 0.0
        %1004 = vmatpush1.msra.mxu0 0.0
        %1005 = vmatprep.subr.mxu0 0.0
        %1006 = vmatpush1.msra.mxu0 0.0
        %1007 = vmatprep.subr.mxu0 0.0
        %1008 = vmatpush1.msra.mxu0 0.0
        %1009 = vmatprep.subr.mxu0 0.0
        %1010 = vmatpush1.msra.mxu0 0.0
        %1011 = vmatprep.subr.mxu0 0.0
        %1012 = vmatpush1.msra.mxu0 0.0
        %1013 = vmatprep.subr.mxu0 0.0
        %1014 = vmatpush1.msra.mxu0 0.0
        %1015 = vmatprep.subr.mxu0 0.0
        %1016 = vmatpush1.msra.mxu0 0.0
        %1017 = vmatprep.subr.mxu0 0.0
        %1018 = vmatpush1.msra.mxu0 0.0
        %1019 = vmatprep.subr.mxu0 0.0
        %1020 = vmatpush1.msra.mxu0 0.0
        %1021 = vmatprep.subr.mxu0 0.0
        %1022 = vmatpush1.msra.mxu0 0.0
        %1023 = vmatprep.subr.mxu0 0.0
        %1024 = vmatpush1.msra.mxu0 0.0
        %1025 = vmatprep.subr.mxu0 0.0
        %1026 = vmatpush1.msra.mxu0 0.0
        %1027 = vmatprep.subr.mxu0 0.0
        %1028 = vmatpush1.msra.mxu0 0.0
        %1029 = vmatprep.subr.mxu0 0.0
        %1030 = vmatpush1.msra.mxu0 0.0
        %1031 = vmatprep.subr.mxu0 0.0
        %1032 = vmatpush1.msra.mxu0 0.0
        %1033 = vmatprep.subr.mxu0 0.0
        %1034 = vmatpush1.msra.mxu0 0.0
        %1035 = vmatprep.subr.mxu0 0.0
        %1036 = vmatpush1.msra.mxu0 0.0
        %1037 = vmatprep.subr.mxu0 0.0
        %1038 = vmatpush1.msra.mxu0 0.0
        %1039 = vmatprep.subr.mxu0 0.0
        %1040 = vmatpush1.msra.mxu0 0.0
        %1041 = vmatprep.subr.mxu0 0.0
        %1042 = vmatpush1.msra.mxu0 0.0
        %1043 = vmatprep.subr.mxu0 0.0
        %1044 = vmatpush1.msra.mxu0 0.0
        %1045 = vmatprep.subr.mxu0 0.0
        %1046 = vmatpush1.msra.mxu0 0.0
        %1047 = vmatprep.subr.mxu0 0.0
        %1048 = vmatpush1.msra.mxu0 0.0
        %1049 = vmatprep.subr.mxu0 0.0
        %1050 = vmatpush1.msra.mxu0 0.0
        %1051 = vmatprep.subr.mxu0 0.0
        %1052 = vmatpush1.msra.mxu0 0.0
        %1053 = vmatprep.subr.mxu0 0.0
        %1054 = vmatpush1.msra.mxu0 0.0
        %1055 = vmatprep.subr.mxu0 0.0
        %1056 = vmatpush1.msra.mxu0 0.0
        %1057 = vmatprep.subr.mxu0 0.0
        %1058 = vmatpush1.msra.mxu0 0.0
        %1059 = vmatprep.subr.mxu0 0.0
        %1060 = vmatpush1.msra.mxu0 0.0
        %1061 = vmatprep.mubr.f32.mxu0 0.0
        %1062 = vmatmul.mubr.f32.gmra.mrb[0].mxu0 %v992
        %v1063 = vpop.f32.mrb[0].mxu0
        %v1064 = vadd.f32 0.0, %v1063
        %v1065 = vpop.f32.mrb[0].mxu0
        %1066 = vmatprep.mubr.f32.mxu0 0.0
        %1067 = vmatmul.mubr.f32.gmra.mrb[0].mxu0 %v995
        %v1068 = vpop.f32.mrb[0].mxu0
        %v1069 = vadd.f32 0.0, %v1068
        %v1070 = vpop.f32.mrb[0].mxu0
        %1071 = vdwg.mxu0
        %1072 = vrot.lane.b32.xlu0 %v634, 112
        %v1073 = vpop.permute.xlu0 %1072
        %1074 = vrot.lane.b32.xlu0 %v639, 112
        %v1075 = vpop.permute.xlu0 %1074
        %1076 = vrot.lane.b32.xlu0 %v634, 80
        %v1077 = vpop.permute.xlu0 %1076
        %1078 = vrot.lane.b32.xlu0 %v639, 80
        %v1079 = vpop.permute.xlu0 %1078
        %v1080 = vsel %vm662, %v1073, 0
        %v1082 = vsel %vm662, %v1075, 0
        %v1084 = vsel %vm662, %v1077, 0
        %v1086 = vsel %vm662, %v1079, 0
        %1088 = vmatprep.subr.mxu0 0.0
        %1089 = vmatpush1.xpose.msra.mxu0 %v1084
        %1090 = vmatprep.subr.mxu0 0.0
        %1091 = vmatpush1.xpose.msra.mxu0 %v1086
        %1092 = vmatprep.subr.mxu0 0.0
        %1093 = vmatpush1.xpose.msra.mxu0 0.0
        %1094 = vmatprep.subr.mxu0 0.0
        %1095 = vmatpush1.xpose.msra.mxu0 0.0
        %1096 = vmatprep.subr.mxu0 0.0
        %1097 = vmatpush1.xpose.msra.mxu0 0.0
        %1098 = vmatprep.subr.mxu0 0.0
        %1099 = vmatpush1.xpose.msra.mxu0 0.0
        %1100 = vmatprep.subr.mxu0 0.0
        %1101 = vmatpush1.xpose.msra.mxu0 0.0
        %1102 = vmatprep.subr.mxu0 0.0
        %1103 = vmatpush1.xpose.msra.mxu0 0.0
        %1104 = vmatprep.subr.mxu0 0.0
        %1105 = vmatpush1.xpose.msra.mxu0 0.0
        %1106 = vmatprep.subr.mxu0 0.0
        %1107 = vmatpush1.xpose.msra.mxu0 0.0
        %1108 = vmatprep.subr.mxu0 0.0
        %1109 = vmatpush1.xpose.msra.mxu0 0.0
        %1110 = vmatprep.subr.mxu0 0.0
        %1111 = vmatpush1.xpose.msra.mxu0 0.0
        %1112 = vmatprep.subr.mxu0 0.0
        %1113 = vmatpush1.xpose.msra.mxu0 0.0
        %1114 = vmatprep.subr.mxu0 0.0
        %1115 = vmatpush1.xpose.msra.mxu0 0.0
        %1116 = vmatprep.subr.mxu0 0.0
        %1117 = vmatpush1.xpose.msra.mxu0 0.0
        %1118 = vmatprep.subr.mxu0 0.0
        %1119 = vmatpush1.xpose.msra.mxu0 0.0
        %1120 = vmatprep.subr.mxu0 0.0
        %1121 = vmatpush1.xpose.msra.mxu0 0.0
        %1122 = vmatprep.subr.mxu0 0.0
        %1123 = vmatpush1.xpose.msra.mxu0 0.0
        %1124 = vmatprep.subr.mxu0 0.0
        %1125 = vmatpush1.xpose.msra.mxu0 0.0
        %1126 = vmatprep.subr.mxu0 0.0
        %1127 = vmatpush1.xpose.msra.mxu0 0.0
        %1128 = vmatprep.subr.mxu0 0.0
        %1129 = vmatpush1.xpose.msra.mxu0 0.0
        %1130 = vmatprep.subr.mxu0 0.0
        %1131 = vmatpush1.xpose.msra.mxu0 0.0
        %1132 = vmatprep.subr.mxu0 0.0
        %1133 = vmatpush1.xpose.msra.mxu0 0.0
        %1134 = vmatprep.subr.mxu0 0.0
        %1135 = vmatpush1.xpose.msra.mxu0 0.0
        %1136 = vmatprep.subr.mxu0 0.0
        %1137 = vmatpush1.xpose.msra.mxu0 0.0
        %1138 = vmatprep.subr.mxu0 0.0
        %1139 = vmatpush1.xpose.msra.mxu0 0.0
        %1140 = vmatprep.subr.mxu0 0.0
        %1141 = vmatpush1.xpose.msra.mxu0 0.0
        %1142 = vmatprep.subr.mxu0 0.0
        %1143 = vmatpush1.xpose.msra.mxu0 0.0
        %1144 = vmatprep.subr.mxu0 0.0
        %1145 = vmatpush1.xpose.msra.mxu0 0.0
        %1146 = vmatprep.subr.mxu0 0.0
        %1147 = vmatpush1.xpose.msra.mxu0 0.0
        %1148 = vmatprep.subr.mxu0 0.0
        %1149 = vmatpush1.xpose.msra.mxu0 0.0
        %1150 = vmatprep.subr.mxu0 0.0
        %1151 = vmatpush1.xpose.msra.mxu0 0.0
        %1152 = vmatprep.mubr.f32.mxu0 0.0
        %1153 = vmatmul.mubr.f32.gmra.mrb[0].mxu0 %v1080
        %v1154 = vpop.f32.mrb[0].mxu0
        %v1155 = vadd.f32 0.0, %v1154
        %v1156 = vpop.f32.mrb[0].mxu0
        %1157 = vmatprep.mubr.f32.mxu0 0.0
        %1158 = vmatmul.mubr.f32.gmra.mrb[0].mxu0 %v1082
        %v1159 = vpop.f32.mrb[0].mxu0
        %v1160 = vadd.f32 0.0, %v1159
        %v1161 = vpop.f32.mrb[0].mxu0
        %1162 = vdwg.mxu0
        %v1163 = vmul.f32 %v1155, 0.35355338
        %v1164 = vmul.f32 %v1160, 0.35355338
        %1165 = vrot.lane.b32.xlu0 %v652, 96
        %v1166 = vpop.permute.xlu0 %1165
        %1167 = vrot.lane.b32.xlu0 %v653, 96
        %v1168 = vpop.permute.xlu0 %1167
        %v1171 = vadd.f32 %v1163, %v1166
        %v1172 = vadd.f32 %v1164, %v1168
        %v1173 = vsel %vm750, %v1171, -inf
        %1174 = vmax.xlane.f32.xlu0 %v1173
        %v1175 = vpop.xlane.xlu0 %1174
        %v1176 = vsel %vm750, %v1172, -inf
        %1177 = vmax.xlane.f32.xlu0 %v1176
        %v1178 = vpop.xlane.xlu0 %1177
        %v1179 = vsub.f32 %v1171, %v1175
        %v1180 = vsub.f32 %v1172, %v1178
        %v1181 = vmul.f32 %v1179, 1.442695
        %v1182 = vpow.pop %v1181
        %v1183 = vmul.f32 %v1180, 1.442695
        %v1184 = vpow.pop %v1183
        %v1185 = vsel %vm750, %v1182, 0.0
        %1186 = vadd.xlane.f32.xlu0 %v1185
        %v1187 = vpop.xlane.xlu0 %1186
        %v1188 = vsel %vm750, %v1184, 0.0
        %1189 = vadd.xlane.f32.xlu0 %v1188
        %v1190 = vpop.xlane.xlu0 %1189
        %v1191 = vrcp.pop %v1187
        %v1192 = vmul.f32 %v1182, %v1191
        %v1193 = vrcp.pop %v1190
        %v1194 = vmul.f32 %v1184, %v1193
        %1195 = vrot.lane.b32.xlu0 %v634, 48
        %v1196 = vpop.permute.xlu0 %1195
        %1197 = vrot.lane.b32.xlu0 %v639, 48
        %v1198 = vpop.permute.xlu0 %1197
        %v1202 = vsel %vm750, %v1192, 0
        %v1205 = vsel %vm750, %v1194, 0
        %1207 = vmatprep.subr.mxu0 0.0
        %1208 = vmatpush1.msra.mxu0 %v1196
        %1209 = vmatprep.subr.mxu0 0.0
        %1210 = vmatpush1.msra.mxu0 %v1198
        %1211 = vmatprep.subr.mxu0 0.0
        %1212 = vmatpush1.msra.mxu0 0.0
        %1213 = vmatprep.subr.mxu0 0.0
        %1214 = vmatpush1.msra.mxu0 0.0
        %1215 = vmatprep.subr.mxu0 0.0
        %1216 = vmatpush1.msra.mxu0 0.0
        %1217 = vmatprep.subr.mxu0 0.0
        %1218 = vmatpush1.msra.mxu0 0.0
        %1219 = vmatprep.subr.mxu0 0.0
        %1220 = vmatpush1.msra.mxu0 0.0
        %1221 = vmatprep.subr.mxu0 0.0
        %1222 = vmatpush1.msra.mxu0 0.0
        %1223 = vmatprep.subr.mxu0 0.0
        %1224 = vmatpush1.msra.mxu0 0.0
        %1225 = vmatprep.subr.mxu0 0.0
        %1226 = vmatpush1.msra.mxu0 0.0
        %1227 = vmatprep.subr.mxu0 0.0
        %1228 = vmatpush1.msra.mxu0 0.0
        %1229 = vmatprep.subr.mxu0 0.0
        %1230 = vmatpush1.msra.mxu0 0.0
        %1231 = vmatprep.subr.mxu0 0.0
        %1232 = vmatpush1.msra.mxu0 0.0
        %1233 = vmatprep.subr.mxu0 0.0
        %1234 = vmatpush1.msra.mxu0 0.0
        %1235 = vmatprep.subr.mxu0 0.0
        %1236 = vmatpush1.msra.mxu0 0.0
        %1237 = vmatprep.subr.mxu0 0.0
        %1238 = vmatpush1.msra.mxu0 0.0
        %1239 = vmatprep.subr.mxu0 0.0
        %1240 = vmatpush1.msra.mxu0 0.0
        %1241 = vmatprep.subr.mxu0 0.0
        %1242 = vmatpush1.msra.mxu0 0.0
        %1243 = vmatprep.subr.mxu0 0.0
        %1244 = vmatpush1.msra.mxu0 0.0
        %1245 = vmatprep.subr.mxu0 0.0
        %1246 = vmatpush1.msra.mxu0 0.0
        %1247 = vmatprep.subr.mxu0 0.0
        %1248 = vmatpush1.msra.mxu0 0.0
        %1249 = vmatprep.subr.mxu0 0.0
        %1250 = vmatpush1.msra.mxu0 0.0
        %1251 = vmatprep.subr.mxu0 0.0
        %1252 = vmatpush1.msra.mxu0 0.0
        %1253 = vmatprep.subr.mxu0 0.0
        %1254 = vmatpush1.msra.mxu0 0.0
        %1255 = vmatprep.subr.mxu0 0.0
        %1256 = vmatpush1.msra.mxu0 0.0
        %1257 = vmatprep.subr.mxu0 0.0
        %1258 = vmatpush1.msra.mxu0 0.0
        %1259 = vmatprep.subr.mxu0 0.0
        %1260 = vmatpush1.msra.mxu0 0.0
        %1261 = vmatprep.subr.mxu0 0.0
        %1262 = vmatpush1.msra.mxu0 0.0
        %1263 = vmatprep.subr.mxu0 0.0
        %1264 = vmatpush1.msra.mxu0 0.0
        %1265 = vmatprep.subr.mxu0 0.0
        %1266 = vmatpush1.msra.mxu0 0.0
        %1267 = vmatprep.subr.mxu0 0.0
        %1268 = vmatpush1.msra.mxu0 0.0
        %1269 = vmatprep.subr.mxu0 0.0
        %1270 = vmatpush1.msra.mxu0 0.0
        %1271 = vmatprep.mubr.f32.mxu0 0.0
        %1272 = vmatmul.mubr.f32.gmra.mrb[0].mxu0 %v1202
        %v1273 = vpop.f32.mrb[0].mxu0
        %v1274 = vadd.f32 0.0, %v1273
        %v1275 = vpop.f32.mrb[0].mxu0
        %1276 = vmatprep.mubr.f32.mxu0 0.0
        %1277 = vmatmul.mubr.f32.gmra.mrb[0].mxu0 %v1205
        %v1278 = vpop.f32.mrb[0].mxu0
        %v1279 = vadd.f32 0.0, %v1278
        %v1280 = vpop.f32.mrb[0].mxu0
        %1281 = vdwg.mxu0
        %1282 = vrot.lane.b32.xlu0 %v634, 104
        %v1283 = vpop.permute.xlu0 %1282
        %1284 = vrot.lane.b32.xlu0 %v639, 104
        %v1285 = vpop.permute.xlu0 %1284
        %1286 = vrot.lane.b32.xlu0 %v634, 72
        %v1287 = vpop.permute.xlu0 %1286
        %1288 = vrot.lane.b32.xlu0 %v639, 72
        %v1289 = vpop.permute.xlu0 %1288
        %v1290 = vsel %vm662, %v1283, 0
        %v1292 = vsel %vm662, %v1285, 0
        %v1294 = vsel %vm662, %v1287, 0
        %v1296 = vsel %vm662, %v1289, 0
        %1298 = vmatprep.subr.mxu0 0.0
        %1299 = vmatpush1.xpose.msra.mxu0 %v1294
        %1300 = vmatprep.subr.mxu0 0.0
        %1301 = vmatpush1.xpose.msra.mxu0 %v1296
        %1302 = vmatprep.subr.mxu0 0.0
        %1303 = vmatpush1.xpose.msra.mxu0 0.0
        %1304 = vmatprep.subr.mxu0 0.0
        %1305 = vmatpush1.xpose.msra.mxu0 0.0
        %1306 = vmatprep.subr.mxu0 0.0
        %1307 = vmatpush1.xpose.msra.mxu0 0.0
        %1308 = vmatprep.subr.mxu0 0.0
        %1309 = vmatpush1.xpose.msra.mxu0 0.0
        %1310 = vmatprep.subr.mxu0 0.0
        %1311 = vmatpush1.xpose.msra.mxu0 0.0
        %1312 = vmatprep.subr.mxu0 0.0
        %1313 = vmatpush1.xpose.msra.mxu0 0.0
        %1314 = vmatprep.subr.mxu0 0.0
        %1315 = vmatpush1.xpose.msra.mxu0 0.0
        %1316 = vmatprep.subr.mxu0 0.0
        %1317 = vmatpush1.xpose.msra.mxu0 0.0
        %1318 = vmatprep.subr.mxu0 0.0
        %1319 = vmatpush1.xpose.msra.mxu0 0.0
        %1320 = vmatprep.subr.mxu0 0.0
        %1321 = vmatpush1.xpose.msra.mxu0 0.0
        %1322 = vmatprep.subr.mxu0 0.0
        %1323 = vmatpush1.xpose.msra.mxu0 0.0
        %1324 = vmatprep.subr.mxu0 0.0
        %1325 = vmatpush1.xpose.msra.mxu0 0.0
        %1326 = vmatprep.subr.mxu0 0.0
        %1327 = vmatpush1.xpose.msra.mxu0 0.0
        %1328 = vmatprep.subr.mxu0 0.0
        %1329 = vmatpush1.xpose.msra.mxu0 0.0
        %1330 = vmatprep.subr.mxu0 0.0
        %1331 = vmatpush1.xpose.msra.mxu0 0.0
        %1332 = vmatprep.subr.mxu0 0.0
        %1333 = vmatpush1.xpose.msra.mxu0 0.0
        %1334 = vmatprep.subr.mxu0 0.0
        %1335 = vmatpush1.xpose.msra.mxu0 0.0
        %1336 = vmatprep.subr.mxu0 0.0
        %1337 = vmatpush1.xpose.msra.mxu0 0.0
        %1338 = vmatprep.subr.mxu0 0.0
        %1339 = vmatpush1.xpose.msra.mxu0 0.0
        %1340 = vmatprep.subr.mxu0 0.0
        %1341 = vmatpush1.xpose.msra.mxu0 0.0
        %1342 = vmatprep.subr.mxu0 0.0
        %1343 = vmatpush1.xpose.msra.mxu0 0.0
        %1344 = vmatprep.subr.mxu0 0.0
        %1345 = vmatpush1.xpose.msra.mxu0 0.0
        %1346 = vmatprep.subr.mxu0 0.0
        %1347 = vmatpush1.xpose.msra.mxu0 0.0
        %1348 = vmatprep.subr.mxu0 0.0
        %1349 = vmatpush1.xpose.msra.mxu0 0.0
        %1350 = vmatprep.subr.mxu0 0.0
        %1351 = vmatpush1.xpose.msra.mxu0 0.0
        %1352 = vmatprep.subr.mxu0 0.0
        %1353 = vmatpush1.xpose.msra.mxu0 0.0
        %1354 = vmatprep.subr.mxu0 0.0
        %1355 = vmatpush1.xpose.msra.mxu0 0.0
        %1356 = vmatprep.subr.mxu0 0.0
        %1357 = vmatpush1.xpose.msra.mxu0 0.0
        %1358 = vmatprep.subr.mxu0 0.0
        %1359 = vmatpush1.xpose.msra.mxu0 0.0
        %1360 = vmatprep.subr.mxu0 0.0
        %1361 = vmatpush1.xpose.msra.mxu0 0.0
        %1362 = vmatprep.mubr.f32.mxu0 0.0
        %1363 = vmatmul.mubr.f32.gmra.mrb[0].mxu0 %v1290
        %v1364 = vpop.f32.mrb[0].mxu0
        %v1365 = vadd.f32 0.0, %v1364
        %v1366 = vpop.f32.mrb[0].mxu0
        %1367 = vmatprep.mubr.f32.mxu0 0.0
        %1368 = vmatmul.mubr.f32.gmra.mrb[0].mxu0 %v1292
        %v1369 = vpop.f32.mrb[0].mxu0
        %v1370 = vadd.f32 0.0, %v1369
        %v1371 = vpop.f32.mrb[0].mxu0
        %1372 = vdwg.mxu0
        %v1373 = vmul.f32 %v1365, 0.35355338
        %v1374 = vmul.f32 %v1370, 0.35355338
        %1375 = vrot.lane.b32.xlu0 %v652, 80
        %v1376 = vpop.permute.xlu0 %1375
        %1377 = vrot.lane.b32.xlu0 %v653, 80
        %v1378 = vpop.permute.xlu0 %1377
        %v1381 = vadd.f32 %v1373, %v1376
        %v1382 = vadd.f32 %v1374, %v1378
        %v1383 = vsel %vm750, %v1381, -inf
        %1384 = vmax.xlane.f32.xlu0 %v1383
        %v1385 = vpop.xlane.xlu0 %1384
        %v1386 = vsel %vm750, %v1382, -inf
        %1387 = vmax.xlane.f32.xlu0 %v1386
        %v1388 = vpop.xlane.xlu0 %1387
        %v1389 = vsub.f32 %v1381, %v1385
        %v1390 = vsub.f32 %v1382, %v1388
        %v1391 = vmul.f32 %v1389, 1.442695
        %v1392 = vpow.pop %v1391
        %v1393 = vmul.f32 %v1390, 1.442695
        %v1394 = vpow.pop %v1393
        %v1395 = vsel %vm750, %v1392, 0.0
        %1396 = vadd.xlane.f32.xlu0 %v1395
        %v1397 = vpop.xlane.xlu0 %1396
        %v1398 = vsel %vm750, %v1394, 0.0
        %1399 = vadd.xlane.f32.xlu0 %v1398
        %v1400 = vpop.xlane.xlu0 %1399
        %v1401 = vrcp.pop %v1397
        %v1402 = vmul.f32 %v1392, %v1401
        %v1403 = vrcp.pop %v1400
        %v1404 = vmul.f32 %v1394, %v1403
        %1405 = vrot.lane.b32.xlu0 %v634, 40
        %v1406 = vpop.permute.xlu0 %1405
        %1407 = vrot.lane.b32.xlu0 %v639, 40
        %v1408 = vpop.permute.xlu0 %1407
        %v1412 = vsel %vm750, %v1402, 0
        %v1415 = vsel %vm750, %v1404, 0
        %1417 = vmatprep.subr.mxu0 0.0
        %1418 = vmatpush1.msra.mxu0 %v1406
        %1419 = vmatprep.subr.mxu0 0.0
        %1420 = vmatpush1.msra.mxu0 %v1408
        %1421 = vmatprep.subr.mxu0 0.0
        %1422 = vmatpush1.msra.mxu0 0.0
        %1423 = vmatprep.subr.mxu0 0.0
        %1424 = vmatpush1.msra.mxu0 0.0
        %1425 = vmatprep.subr.mxu0 0.0
        %1426 = vmatpush1.msra.mxu0 0.0
        %1427 = vmatprep.subr.mxu0 0.0
        %1428 = vmatpush1.msra.mxu0 0.0
        %1429 = vmatprep.subr.mxu0 0.0
        %1430 = vmatpush1.msra.mxu0 0.0
        %1431 = vmatprep.subr.mxu0 0.0
        %1432 = vmatpush1.msra.mxu0 0.0
        %1433 = vmatprep.subr.mxu0 0.0
        %1434 = vmatpush1.msra.mxu0 0.0
        %1435 = vmatprep.subr.mxu0 0.0
        %1436 = vmatpush1.msra.mxu0 0.0
        %1437 = vmatprep.subr.mxu0 0.0
        %1438 = vmatpush1.msra.mxu0 0.0
        %1439 = vmatprep.subr.mxu0 0.0
        %1440 = vmatpush1.msra.mxu0 0.0
        %1441 = vmatprep.subr.mxu0 0.0
        %1442 = vmatpush1.msra.mxu0 0.0
        %1443 = vmatprep.subr.mxu0 0.0
        %1444 = vmatpush1.msra.mxu0 0.0
        %1445 = vmatprep.subr.mxu0 0.0
        %1446 = vmatpush1.msra.mxu0 0.0
        %1447 = vmatprep.subr.mxu0 0.0
        %1448 = vmatpush1.msra.mxu0 0.0
        %1449 = vmatprep.subr.mxu0 0.0
        %1450 = vmatpush1.msra.mxu0 0.0
        %1451 = vmatprep.subr.mxu0 0.0
        %1452 = vmatpush1.msra.mxu0 0.0
        %1453 = vmatprep.subr.mxu0 0.0
        %1454 = vmatpush1.msra.mxu0 0.0
        %1455 = vmatprep.subr.mxu0 0.0
        %1456 = vmatpush1.msra.mxu0 0.0
        %1457 = vmatprep.subr.mxu0 0.0
        %1458 = vmatpush1.msra.mxu0 0.0
        %1459 = vmatprep.subr.mxu0 0.0
        %1460 = vmatpush1.msra.mxu0 0.0
        %1461 = vmatprep.subr.mxu0 0.0
        %1462 = vmatpush1.msra.mxu0 0.0
        %1463 = vmatprep.subr.mxu0 0.0
        %1464 = vmatpush1.msra.mxu0 0.0
        %1465 = vmatprep.subr.mxu0 0.0
        %1466 = vmatpush1.msra.mxu0 0.0
        %1467 = vmatprep.subr.mxu0 0.0
        %1468 = vmatpush1.msra.mxu0 0.0
        %1469 = vmatprep.subr.mxu0 0.0
        %1470 = vmatpush1.msra.mxu0 0.0
        %1471 = vmatprep.subr.mxu0 0.0
        %1472 = vmatpush1.msra.mxu0 0.0
        %1473 = vmatprep.subr.mxu0 0.0
        %1474 = vmatpush1.msra.mxu0 0.0
        %1475 = vmatprep.subr.mxu0 0.0
        %1476 = vmatpush1.msra.mxu0 0.0
        %1477 = vmatprep.subr.mxu0 0.0
        %1478 = vmatpush1.msra.mxu0 0.0
        %1479 = vmatprep.subr.mxu0 0.0
        %1480 = vmatpush1.msra.mxu0 0.0
        %1481 = vmatprep.mubr.f32.mxu0 0.0
        %1482 = vmatmul.mubr.f32.gmra.mrb[0].mxu0 %v1412
        %v1483 = vpop.f32.mrb[0].mxu0
        %v1484 = vadd.f32 0.0, %v1483
        %v1485 = vpop.f32.mrb[0].mxu0
        %1486 = vmatprep.mubr.f32.mxu0 0.0
        %1487 = vmatmul.mubr.f32.gmra.mrb[0].mxu0 %v1415
        %v1488 = vpop.f32.mrb[0].mxu0
        %v1489 = vadd.f32 0.0, %v1488
        %v1490 = vpop.f32.mrb[0].mxu0
        %1491 = vdwg.mxu0
        %1494 = vrot.lane.b32.xlu0 %v961, 16
        %v1495 = vpop.permute.xlu0 %1494
        %1496 = vrot.lane.b32.xlu0 %v962, 16
        %v1497 = vpop.permute.xlu0 %1496
        %1502 = vrot.lane.b32.xlu0 %v1171, 32
        %v1503 = vpop.permute.xlu0 %1502
        %1504 = vrot.lane.b32.xlu0 %v1172, 32
        %v1505 = vpop.permute.xlu0 %1504
        %1510 = vrot.lane.b32.xlu0 %v1381, 48
        %v1511 = vpop.permute.xlu0 %1510
        %1512 = vrot.lane.b32.xlu0 %v1382, 48
        %v1513 = vpop.permute.xlu0 %1512
        %v1516 = vsel %vm750, %v748, %v1495
        %v1517 = vsel %vm750, %v749, %v1497
        %v1518 = vsel %vm554, %v1516, %v1503
        %v1519 = vsel %vm554, %v1517, %v1505
        %vm1520 = vcmask 392192
        %v1521 = vsel %vm1520, %v1518, %v1511
        %v1522 = vsel %vm1520, %v1519, %v1513
        %1525 = vrot.lane.b32.xlu0 %v1064, 8
        %v1526 = vpop.permute.xlu0 %1525
        %1527 = vrot.lane.b32.xlu0 %v1069, 8
        %v1528 = vpop.permute.xlu0 %1527
        %1533 = vrot.lane.b32.xlu0 %v1274, 16
        %v1534 = vpop.permute.xlu0 %1533
        %1535 = vrot.lane.b32.xlu0 %v1279, 16
        %v1536 = vpop.permute.xlu0 %1535
        %1541 = vrot.lane.b32.xlu0 %v1484, 24
        %v1542 = vpop.permute.xlu0 %1541
        %1543 = vrot.lane.b32.xlu0 %v1489, 24
        %v1544 = vpop.permute.xlu0 %1543
        %v1547 = vsel %vm662, %v852, %v1526
        %v1548 = vsel %vm662, %v857, %v1528
        %v1549 = vsel %vm750, %v1547, %v1534
        %v1550 = vsel %vm750, %v1548, %v1536
        %vm1551 = vcmask 195584
        %v1552 = vsel %vm1551, %v1549, %v1542
        %v1553 = vsel %vm1551, %v1550, %v1544
        %1556 = vrot.lane.b32.xlu0 %v644, 96
        %v1557 = vpop.permute.xlu0 %1556
        %1558 = vrot.lane.b32.xlu0 %v649, 96
        %v1559 = vpop.permute.xlu0 %1558
        %v1560 = vsel %vm662, %v644, 0
        %v1562 = vsel %vm662, %v649, 0
        %v1564 = vsel %vm662, %v1557, 0
        %v1566 = vsel %vm662, %v1559, 0
        %1568 = vmatprep.subr.mxu0 0.0
        %1569 = vmatpush1.xpose.msra.mxu0 %v1564
        %1570 = vmatprep.subr.mxu0 0.0
        %1571 = vmatpush1.xpose.msra.mxu0 %v1566
        %1572 = vmatprep.subr.mxu0 0.0
        %1573 = vmatpush1.xpose.msra.mxu0 0.0
        %1574 = vmatprep.subr.mxu0 0.0
        %1575 = vmatpush1.xpose.msra.mxu0 0.0
        %1576 = vmatprep.subr.mxu0 0.0
        %1577 = vmatpush1.xpose.msra.mxu0 0.0
        %1578 = vmatprep.subr.mxu0 0.0
        %1579 = vmatpush1.xpose.msra.mxu0 0.0
        %1580 = vmatprep.subr.mxu0 0.0
        %1581 = vmatpush1.xpose.msra.mxu0 0.0
        %1582 = vmatprep.subr.mxu0 0.0
        %1583 = vmatpush1.xpose.msra.mxu0 0.0
        %1584 = vmatprep.subr.mxu0 0.0
        %1585 = vmatpush1.xpose.msra.mxu0 0.0
        %1586 = vmatprep.subr.mxu0 0.0
        %1587 = vmatpush1.xpose.msra.mxu0 0.0
        %1588 = vmatprep.subr.mxu0 0.0
        %1589 = vmatpush1.xpose.msra.mxu0 0.0
        %1590 = vmatprep.subr.mxu0 0.0
        %1591 = vmatpush1.xpose.msra.mxu0 0.0
        %1592 = vmatprep.subr.mxu0 0.0
        %1593 = vmatpush1.xpose.msra.mxu0 0.0
        %1594 = vmatprep.subr.mxu0 0.0
        %1595 = vmatpush1.xpose.msra.mxu0 0.0
        %1596 = vmatprep.subr.mxu0 0.0
        %1597 = vmatpush1.xpose.msra.mxu0 0.0
        %1598 = vmatprep.subr.mxu0 0.0
        %1599 = vmatpush1.xpose.msra.mxu0 0.0
        %1600 = vmatprep.subr.mxu0 0.0
        %1601 = vmatpush1.xpose.msra.mxu0 0.0
        %1602 = vmatprep.subr.mxu0 0.0
        %1603 = vmatpush1.xpose.msra.mxu0 0.0
        %1604 = vmatprep.subr.mxu0 0.0
        %1605 = vmatpush1.xpose.msra.mxu0 0.0
        %1606 = vmatprep.subr.mxu0 0.0
        %1607 = vmatpush1.xpose.msra.mxu0 0.0
        %1608 = vmatprep.subr.mxu0 0.0
        %1609 = vmatpush1.xpose.msra.mxu0 0.0
        %1610 = vmatprep.subr.mxu0 0.0
        %1611 = vmatpush1.xpose.msra.mxu0 0.0
        %1612 = vmatprep.subr.mxu0 0.0
        %1613 = vmatpush1.xpose.msra.mxu0 0.0
        %1614 = vmatprep.subr.mxu0 0.0
        %1615 = vmatpush1.xpose.msra.mxu0 0.0
        %1616 = vmatprep.subr.mxu0 0.0
        %1617 = vmatpush1.xpose.msra.mxu0 0.0
        %1618 = vmatprep.subr.mxu0 0.0
        %1619 = vmatpush1.xpose.msra.mxu0 0.0
        %1620 = vmatprep.subr.mxu0 0.0
        %1621 = vmatpush1.xpose.msra.mxu0 0.0
        %1622 = vmatprep.subr.mxu0 0.0
        %1623 = vmatpush1.xpose.msra.mxu0 0.0
        %1624 = vmatprep.subr.mxu0 0.0
        %1625 = vmatpush1.xpose.msra.mxu0 0.0
        %1626 = vmatprep.subr.mxu0 0.0
        %1627 = vmatpush1.xpose.msra.mxu0 0.0
        %1628 = vmatprep.subr.mxu0 0.0
        %1629 = vmatpush1.xpose.msra.mxu0 0.0
        %1630 = vmatprep.subr.mxu0 0.0
        %1631 = vmatpush1.xpose.msra.mxu0 0.0
        %1632 = vmatprep.mubr.f32.mxu0 0.0
        %1633 = vmatmul.mubr.f32.gmra.mrb[0].mxu0 %v1560
        %v1634 = vpop.f32.mrb[0].mxu0
        %v1635 = vadd.f32 0.0, %v1634
        %v1636 = vpop.f32.mrb[0].mxu0
        %1637 = vmatprep.mubr.f32.mxu0 0.0
        %1638 = vmatmul.mubr.f32.gmra.mrb[0].mxu0 %v1562
        %v1639 = vpop.f32.mrb[0].mxu0
        %v1640 = vadd.f32 0.0, %v1639
        %v1641 = vpop.f32.mrb[0].mxu0
        %1642 = vdwg.mxu0
        %v1643 = vmul.f32 %v1635, 0.35355338
        %v1644 = vmul.f32 %v1640, 0.35355338
        %v1645 = vadd.f32 %v1643, %v654
        %v1646 = vadd.f32 %v1644, %v655
        %v1647 = vsel %vm750, %v1645, -inf
        %1648 = vmax.xlane.f32.xlu0 %v1647
        %v1649 = vpop.xlane.xlu0 %1648
        %v1650 = vsel %vm750, %v1646, -inf
        %1651 = vmax.xlane.f32.xlu0 %v1650
        %v1652 = vpop.xlane.xlu0 %1651
        %v1653 = vsub.f32 %v1645, %v1649
        %v1654 = vsub.f32 %v1646, %v1652
        %v1655 = vmul.f32 %v1653, 1.442695
        %v1656 = vpow.pop %v1655
        %v1657 = vmul.f32 %v1654, 1.442695
        %v1658 = vpow.pop %v1657
        %v1659 = vsel %vm750, %v1656, 0.0
        %1660 = vadd.xlane.f32.xlu0 %v1659
        %v1661 = vpop.xlane.xlu0 %1660
        %v1662 = vsel %vm750, %v1658, 0.0
        %1663 = vadd.xlane.f32.xlu0 %v1662
        %v1664 = vpop.xlane.xlu0 %1663
        %v1665 = vrcp.pop %v1661
        %v1666 = vmul.f32 %v1656, %v1665
        %v1667 = vrcp.pop %v1664
        %v1668 = vmul.f32 %v1658, %v1667
        %1669 = vrot.lane.b32.xlu0 %v644, 64
        %v1670 = vpop.permute.xlu0 %1669
        %1671 = vrot.lane.b32.xlu0 %v649, 64
        %v1672 = vpop.permute.xlu0 %1671
        %v1676 = vsel %vm750, %v1666, 0
        %v1679 = vsel %vm750, %v1668, 0
        %1681 = vmatprep.subr.mxu0 0.0
        %1682 = vmatpush1.msra.mxu0 %v1670
        %1683 = vmatprep.subr.mxu0 0.0
        %1684 = vmatpush1.msra.mxu0 %v1672
        %1685 = vmatprep.subr.mxu0 0.0
        %1686 = vmatpush1.msra.mxu0 0.0
        %1687 = vmatprep.subr.mxu0 0.0
        %1688 = vmatpush1.msra.mxu0 0.0
        %1689 = vmatprep.subr.mxu0 0.0
        %1690 = vmatpush1.msra.mxu0 0.0
        %1691 = vmatprep.subr.mxu0 0.0
        %1692 = vmatpush1.msra.mxu0 0.0
        %1693 = vmatprep.subr.mxu0 0.0
        %1694 = vmatpush1.msra.mxu0 0.0
        %1695 = vmatprep.subr.mxu0 0.0
        %1696 = vmatpush1.msra.mxu0 0.0
        %1697 = vmatprep.subr.mxu0 0.0
        %1698 = vmatpush1.msra.mxu0 0.0
        %1699 = vmatprep.subr.mxu0 0.0
        %1700 = vmatpush1.msra.mxu0 0.0
        %1701 = vmatprep.subr.mxu0 0.0
        %1702 = vmatpush1.msra.mxu0 0.0
        %1703 = vmatprep.subr.mxu0 0.0
        %1704 = vmatpush1.msra.mxu0 0.0
        %1705 = vmatprep.subr.mxu0 0.0
        %1706 = vmatpush1.msra.mxu0 0.0
        %1707 = vmatprep.subr.mxu0 0.0
        %1708 = vmatpush1.msra.mxu0 0.0
        %1709 = vmatprep.subr.mxu0 0.0
        %1710 = vmatpush1.msra.mxu0 0.0
        %1711 = vmatprep.subr.mxu0 0.0
        %1712 = vmatpush1.msra.mxu0 0.0
        %1713 = vmatprep.subr.mxu0 0.0
        %1714 = vmatpush1.msra.mxu0 0.0
        %1715 = vmatprep.subr.mxu0 0.0
        %1716 = vmatpush1.msra.mxu0 0.0
        %1717 = vmatprep.subr.mxu0 0.0
        %1718 = vmatpush1.msra.mxu0 0.0
        %1719 = vmatprep.subr.mxu0 0.0
        %1720 = vmatpush1.msra.mxu0 0.0
        %1721 = vmatprep.subr.mxu0 0.0
        %1722 = vmatpush1.msra.mxu0 0.0
        %1723 = vmatprep.subr.mxu0 0.0
        %1724 = vmatpush1.msra.mxu0 0.0
        %1725 = vmatprep.subr.mxu0 0.0
        %1726 = vmatpush1.msra.mxu0 0.0
        %1727 = vmatprep.subr.mxu0 0.0
        %1728 = vmatpush1.msra.mxu0 0.0
        %1729 = vmatprep.subr.mxu0 0.0
        %1730 = vmatpush1.msra.mxu0 0.0
        %1731 = vmatprep.subr.mxu0 0.0
        %1732 = vmatpush1.msra.mxu0 0.0
        %1733 = vmatprep.subr.mxu0 0.0
        %1734 = vmatpush1.msra.mxu0 0.0
        %1735 = vmatprep.subr.mxu0 0.0
        %1736 = vmatpush1.msra.mxu0 0.0
        %1737 = vmatprep.subr.mxu0 0.0
        %1738 = vmatpush1.msra.mxu0 0.0
        %1739 = vmatprep.subr.mxu0 0.0
        %1740 = vmatpush1.msra.mxu0 0.0
        %1741 = vmatprep.subr.mxu0 0.0
        %1742 = vmatpush1.msra.mxu0 0.0
        %1743 = vmatprep.subr.mxu0 0.0
        %1744 = vmatpush1.msra.mxu0 0.0
        %1745 = vmatprep.mubr.f32.mxu0 0.0
        %1746 = vmatmul.mubr.f32.gmra.mrb[0].mxu0 %v1676
        %v1747 = vpop.f32.mrb[0].mxu0
        %v1748 = vadd.f32 0.0, %v1747
        %v1749 = vpop.f32.mrb[0].mxu0
        %1750 = vmatprep.mubr.f32.mxu0 0.0
        %1751 = vmatmul.mubr.f32.gmra.mrb[0].mxu0 %v1679
        %v1752 = vpop.f32.mrb[0].mxu0
        %v1753 = vadd.f32 0.0, %v1752
        %v1754 = vpop.f32.mrb[0].mxu0
        %1755 = vdwg.mxu0
        %1756 = vrot.lane.b32.xlu0 %v644, 120
        %v1757 = vpop.permute.xlu0 %1756
        %1758 = vrot.lane.b32.xlu0 %v649, 120
        %v1759 = vpop.permute.xlu0 %1758
        %1760 = vrot.lane.b32.xlu0 %v644, 88
        %v1761 = vpop.permute.xlu0 %1760
        %1762 = vrot.lane.b32.xlu0 %v649, 88
        %v1763 = vpop.permute.xlu0 %1762
        %v1764 = vsel %vm662, %v1757, 0
        %v1766 = vsel %vm662, %v1759, 0
        %v1768 = vsel %vm662, %v1761, 0
        %v1770 = vsel %vm662, %v1763, 0
        %1772 = vmatprep.subr.mxu0 0.0
        %1773 = vmatpush1.xpose.msra.mxu0 %v1768
        %1774 = vmatprep.subr.mxu0 0.0
        %1775 = vmatpush1.xpose.msra.mxu0 %v1770
        %1776 = vmatprep.subr.mxu0 0.0
        %1777 = vmatpush1.xpose.msra.mxu0 0.0
        %1778 = vmatprep.subr.mxu0 0.0
        %1779 = vmatpush1.xpose.msra.mxu0 0.0
        %1780 = vmatprep.subr.mxu0 0.0
        %1781 = vmatpush1.xpose.msra.mxu0 0.0
        %1782 = vmatprep.subr.mxu0 0.0
        %1783 = vmatpush1.xpose.msra.mxu0 0.0
        %1784 = vmatprep.subr.mxu0 0.0
        %1785 = vmatpush1.xpose.msra.mxu0 0.0
        %1786 = vmatprep.subr.mxu0 0.0
        %1787 = vmatpush1.xpose.msra.mxu0 0.0
        %1788 = vmatprep.subr.mxu0 0.0
        %1789 = vmatpush1.xpose.msra.mxu0 0.0
        %1790 = vmatprep.subr.mxu0 0.0
        %1791 = vmatpush1.xpose.msra.mxu0 0.0
        %1792 = vmatprep.subr.mxu0 0.0
        %1793 = vmatpush1.xpose.msra.mxu0 0.0
        %1794 = vmatprep.subr.mxu0 0.0
        %1795 = vmatpush1.xpose.msra.mxu0 0.0
        %1796 = vmatprep.subr.mxu0 0.0
        %1797 = vmatpush1.xpose.msra.mxu0 0.0
        %1798 = vmatprep.subr.mxu0 0.0
        %1799 = vmatpush1.xpose.msra.mxu0 0.0
        %1800 = vmatprep.subr.mxu0 0.0
        %1801 = vmatpush1.xpose.msra.mxu0 0.0
        %1802 = vmatprep.subr.mxu0 0.0
        %1803 = vmatpush1.xpose.msra.mxu0 0.0
        %1804 = vmatprep.subr.mxu0 0.0
        %1805 = vmatpush1.xpose.msra.mxu0 0.0
        %1806 = vmatprep.subr.mxu0 0.0
        %1807 = vmatpush1.xpose.msra.mxu0 0.0
        %1808 = vmatprep.subr.mxu0 0.0
        %1809 = vmatpush1.xpose.msra.mxu0 0.0
        %1810 = vmatprep.subr.mxu0 0.0
        %1811 = vmatpush1.xpose.msra.mxu0 0.0
        %1812 = vmatprep.subr.mxu0 0.0
        %1813 = vmatpush1.xpose.msra.mxu0 0.0
        %1814 = vmatprep.subr.mxu0 0.0
        %1815 = vmatpush1.xpose.msra.mxu0 0.0
        %1816 = vmatprep.subr.mxu0 0.0
        %1817 = vmatpush1.xpose.msra.mxu0 0.0
        %1818 = vmatprep.subr.mxu0 0.0
        %1819 = vmatpush1.xpose.msra.mxu0 0.0
        %1820 = vmatprep.subr.mxu0 0.0
        %1821 = vmatpush1.xpose.msra.mxu0 0.0
        %1822 = vmatprep.subr.mxu0 0.0
        %1823 = vmatpush1.xpose.msra.mxu0 0.0
        %1824 = vmatprep.subr.mxu0 0.0
        %1825 = vmatpush1.xpose.msra.mxu0 0.0
        %1826 = vmatprep.subr.mxu0 0.0
        %1827 = vmatpush1.xpose.msra.mxu0 0.0
        %1828 = vmatprep.subr.mxu0 0.0
        %1829 = vmatpush1.xpose.msra.mxu0 0.0
        %1830 = vmatprep.subr.mxu0 0.0
        %1831 = vmatpush1.xpose.msra.mxu0 0.0
        %1832 = vmatprep.subr.mxu0 0.0
        %1833 = vmatpush1.xpose.msra.mxu0 0.0
        %1834 = vmatprep.subr.mxu0 0.0
        %1835 = vmatpush1.xpose.msra.mxu0 0.0
        %1836 = vmatprep.mubr.f32.mxu0 0.0
        %1837 = vmatmul.mubr.f32.gmra.mrb[0].mxu0 %v1764
        %v1838 = vpop.f32.mrb[0].mxu0
        %v1839 = vadd.f32 0.0, %v1838
        %v1840 = vpop.f32.mrb[0].mxu0
        %1841 = vmatprep.mubr.f32.mxu0 0.0
        %1842 = vmatmul.mubr.f32.gmra.mrb[0].mxu0 %v1766
        %v1843 = vpop.f32.mrb[0].mxu0
        %v1844 = vadd.f32 0.0, %v1843
        %v1845 = vpop.f32.mrb[0].mxu0
        %1846 = vdwg.mxu0
        %v1847 = vmul.f32 %v1839, 0.35355338
        %v1848 = vmul.f32 %v1844, 0.35355338
        %1851 = vrot.lane.b32.xlu0 %v654, 112
        %v1852 = vpop.permute.xlu0 %1851
        %1853 = vrot.lane.b32.xlu0 %v655, 112
        %v1854 = vpop.permute.xlu0 %1853
        %v1857 = vadd.f32 %v1847, %v1852
        %v1858 = vadd.f32 %v1848, %v1854
        %v1859 = vsel %vm750, %v1857, -inf
        %1860 = vmax.xlane.f32.xlu0 %v1859
        %v1861 = vpop.xlane.xlu0 %1860
        %v1862 = vsel %vm750, %v1858, -inf
        %1863 = vmax.xlane.f32.xlu0 %v1862
        %v1864 = vpop.xlane.xlu0 %1863
        %v1865 = vsub.f32 %v1857, %v1861
        %v1866 = vsub.f32 %v1858, %v1864
        %v1867 = vmul.f32 %v1865, 1.442695
        %v1868 = vpow.pop %v1867
        %v1869 = vmul.f32 %v1866, 1.442695
        %v1870 = vpow.pop %v1869
        %v1871 = vsel %vm750, %v1868, 0.0
        %1872 = vadd.xlane.f32.xlu0 %v1871
        %v1873 = vpop.xlane.xlu0 %1872
        %v1874 = vsel %vm750, %v1870, 0.0
        %1875 = vadd.xlane.f32.xlu0 %v1874
        %v1876 = vpop.xlane.xlu0 %1875
        %v1877 = vrcp.pop %v1873
        %v1878 = vmul.f32 %v1868, %v1877
        %v1879 = vrcp.pop %v1876
        %v1880 = vmul.f32 %v1870, %v1879
        %1881 = vrot.lane.b32.xlu0 %v644, 56
        %v1882 = vpop.permute.xlu0 %1881
        %1883 = vrot.lane.b32.xlu0 %v649, 56
        %v1884 = vpop.permute.xlu0 %1883
        %v1888 = vsel %vm750, %v1878, 0
        %v1891 = vsel %vm750, %v1880, 0
        %1893 = vmatprep.subr.mxu0 0.0
        %1894 = vmatpush1.msra.mxu0 %v1882
        %1895 = vmatprep.subr.mxu0 0.0
        %1896 = vmatpush1.msra.mxu0 %v1884
        %1897 = vmatprep.subr.mxu0 0.0
        %1898 = vmatpush1.msra.mxu0 0.0
        %1899 = vmatprep.subr.mxu0 0.0
        %1900 = vmatpush1.msra.mxu0 0.0
        %1901 = vmatprep.subr.mxu0 0.0
        %1902 = vmatpush1.msra.mxu0 0.0
        %1903 = vmatprep.subr.mxu0 0.0
        %1904 = vmatpush1.msra.mxu0 0.0
        %1905 = vmatprep.subr.mxu0 0.0
        %1906 = vmatpush1.msra.mxu0 0.0
        %1907 = vmatprep.subr.mxu0 0.0
        %1908 = vmatpush1.msra.mxu0 0.0
        %1909 = vmatprep.subr.mxu0 0.0
        %1910 = vmatpush1.msra.mxu0 0.0
        %1911 = vmatprep.subr.mxu0 0.0
        %1912 = vmatpush1.msra.mxu0 0.0
        %1913 = vmatprep.subr.mxu0 0.0
        %1914 = vmatpush1.msra.mxu0 0.0
        %1915 = vmatprep.subr.mxu0 0.0
        %1916 = vmatpush1.msra.mxu0 0.0
        %1917 = vmatprep.subr.mxu0 0.0
        %1918 = vmatpush1.msra.mxu0 0.0
        %1919 = vmatprep.subr.mxu0 0.0
        %1920 = vmatpush1.msra.mxu0 0.0
        %1921 = vmatprep.subr.mxu0 0.0
        %1922 = vmatpush1.msra.mxu0 0.0
        %1923 = vmatprep.subr.mxu0 0.0
        %1924 = vmatpush1.msra.mxu0 0.0
        %1925 = vmatprep.subr.mxu0 0.0
        %1926 = vmatpush1.msra.mxu0 0.0
        %1927 = vmatprep.subr.mxu0 0.0
        %1928 = vmatpush1.msra.mxu0 0.0
        %1929 = vmatprep.subr.mxu0 0.0
        %1930 = vmatpush1.msra.mxu0 0.0
        %1931 = vmatprep.subr.mxu0 0.0
        %1932 = vmatpush1.msra.mxu0 0.0
        %1933 = vmatprep.subr.mxu0 0.0
        %1934 = vmatpush1.msra.mxu0 0.0
        %1935 = vmatprep.subr.mxu0 0.0
        %1936 = vmatpush1.msra.mxu0 0.0
        %1937 = vmatprep.subr.mxu0 0.0
        %1938 = vmatpush1.msra.mxu0 0.0
        %1939 = vmatprep.subr.mxu0 0.0
        %1940 = vmatpush1.msra.mxu0 0.0
        %1941 = vmatprep.subr.mxu0 0.0
        %1942 = vmatpush1.msra.mxu0 0.0
        %1943 = vmatprep.subr.mxu0 0.0
        %1944 = vmatpush1.msra.mxu0 0.0
        %1945 = vmatprep.subr.mxu0 0.0
        %1946 = vmatpush1.msra.mxu0 0.0
        %1947 = vmatprep.subr.mxu0 0.0
        %1948 = vmatpush1.msra.mxu0 0.0
        %1949 = vmatprep.subr.mxu0 0.0
        %1950 = vmatpush1.msra.mxu0 0.0
        %1951 = vmatprep.subr.mxu0 0.0
        %1952 = vmatpush1.msra.mxu0 0.0
        %1953 = vmatprep.subr.mxu0 0.0
        %1954 = vmatpush1.msra.mxu0 0.0
        %1955 = vmatprep.subr.mxu0 0.0
        %1956 = vmatpush1.msra.mxu0 0.0
        %1957 = vmatprep.mubr.f32.mxu0 0.0
        %1958 = vmatmul.mubr.f32.gmra.mrb[0].mxu0 %v1888
        %v1959 = vpop.f32.mrb[0].mxu0
        %v1960 = vadd.f32 0.0, %v1959
        %v1961 = vpop.f32.mrb[0].mxu0
        %1962 = vmatprep.mubr.f32.mxu0 0.0
        %1963 = vmatmul.mubr.f32.gmra.mrb[0].mxu0 %v1891
        %v1964 = vpop.f32.mrb[0].mxu0
        %v1965 = vadd.f32 0.0, %v1964
        %v1966 = vpop.f32.mrb[0].mxu0
        %1967 = vdwg.mxu0
        %1968 = vrot.lane.b32.xlu0 %v644, 112
        %v1969 = vpop.permute.xlu0 %1968
        %1970 = vrot.lane.b32.xlu0 %v649, 112
        %v1971 = vpop.permute.xlu0 %1970
        %1972 = vrot.lane.b32.xlu0 %v644, 80
        %v1973 = vpop.permute.xlu0 %1972
        %1974 = vrot.lane.b32.xlu0 %v649, 80
        %v1975 = vpop.permute.xlu0 %1974
        %v1976 = vsel %vm662, %v1969, 0
        %v1978 = vsel %vm662, %v1971, 0
        %v1980 = vsel %vm662, %v1973, 0
        %v1982 = vsel %vm662, %v1975, 0
        %1984 = vmatprep.subr.mxu0 0.0
        %1985 = vmatpush1.xpose.msra.mxu0 %v1980
        %1986 = vmatprep.subr.mxu0 0.0
        %1987 = vmatpush1.xpose.msra.mxu0 %v1982
        %1988 = vmatprep.subr.mxu0 0.0
        %1989 = vmatpush1.xpose.msra.mxu0 0.0
        %1990 = vmatprep.subr.mxu0 0.0
        %1991 = vmatpush1.xpose.msra.mxu0 0.0
        %1992 = vmatprep.subr.mxu0 0.0
        %1993 = vmatpush1.xpose.msra.mxu0 0.0
        %1994 = vmatprep.subr.mxu0 0.0
        %1995 = vmatpush1.xpose.msra.mxu0 0.0
        %1996 = vmatprep.subr.mxu0 0.0
        %1997 = vmatpush1.xpose.msra.mxu0 0.0
        %1998 = vmatprep.subr.mxu0 0.0
        %1999 = vmatpush1.xpose.msra.mxu0 0.0
        %2000 = vmatprep.subr.mxu0 0.0
        %2001 = vmatpush1.xpose.msra.mxu0 0.0
        %2002 = vmatprep.subr.mxu0 0.0
        %2003 = vmatpush1.xpose.msra.mxu0 0.0
        %2004 = vmatprep.subr.mxu0 0.0
        %2005 = vmatpush1.xpose.msra.mxu0 0.0
        %2006 = vmatprep.subr.mxu0 0.0
        %2007 = vmatpush1.xpose.msra.mxu0 0.0
        %2008 = vmatprep.subr.mxu0 0.0
        %2009 = vmatpush1.xpose.msra.mxu0 0.0
        %2010 = vmatprep.subr.mxu0 0.0
        %2011 = vmatpush1.xpose.msra.mxu0 0.0
        %2012 = vmatprep.subr.mxu0 0.0
        %2013 = vmatpush1.xpose.msra.mxu0 0.0
        %2014 = vmatprep.subr.mxu0 0.0
        %2015 = vmatpush1.xpose.msra.mxu0 0.0
        %2016 = vmatprep.subr.mxu0 0.0
        %2017 = vmatpush1.xpose.msra.mxu0 0.0
        %2018 = vmatprep.subr.mxu0 0.0
        %2019 = vmatpush1.xpose.msra.mxu0 0.0
        %2020 = vmatprep.subr.mxu0 0.0
        %2021 = vmatpush1.xpose.msra.mxu0 0.0
        %2022 = vmatprep.subr.mxu0 0.0
        %2023 = vmatpush1.xpose.msra.mxu0 0.0
        %2024 = vmatprep.subr.mxu0 0.0
        %2025 = vmatpush1.xpose.msra.mxu0 0.0
        %2026 = vmatprep.subr.mxu0 0.0
        %2027 = vmatpush1.xpose.msra.mxu0 0.0
        %2028 = vmatprep.subr.mxu0 0.0
        %2029 = vmatpush1.xpose.msra.mxu0 0.0
        %2030 = vmatprep.subr.mxu0 0.0
        %2031 = vmatpush1.xpose.msra.mxu0 0.0
        %2032 = vmatprep.subr.mxu0 0.0
        %2033 = vmatpush1.xpose.msra.mxu0 0.0
        %2034 = vmatprep.subr.mxu0 0.0
        %2035 = vmatpush1.xpose.msra.mxu0 0.0
        %2036 = vmatprep.subr.mxu0 0.0
        %2037 = vmatpush1.xpose.msra.mxu0 0.0
        %2038 = vmatprep.subr.mxu0 0.0
        %2039 = vmatpush1.xpose.msra.mxu0 0.0
        %2040 = vmatprep.subr.mxu0 0.0
        %2041 = vmatpush1.xpose.msra.mxu0 0.0
        %2042 = vmatprep.subr.mxu0 0.0
        %2043 = vmatpush1.xpose.msra.mxu0 0.0
        %2044 = vmatprep.subr.mxu0 0.0
        %2045 = vmatpush1.xpose.msra.mxu0 0.0
        %2046 = vmatprep.subr.mxu0 0.0
        %2047 = vmatpush1.xpose.msra.mxu0 0.0
        %2048 = vmatprep.mubr.f32.mxu0 0.0
        %2049 = vmatmul.mubr.f32.gmra.mrb[0].mxu0 %v1976
        %v2050 = vpop.f32.mrb[0].mxu0
        %v2051 = vadd.f32 0.0, %v2050
        %v2052 = vpop.f32.mrb[0].mxu0
        %2053 = vmatprep.mubr.f32.mxu0 0.0
        %2054 = vmatmul.mubr.f32.gmra.mrb[0].mxu0 %v1978
        %v2055 = vpop.f32.mrb[0].mxu0
        %v2056 = vadd.f32 0.0, %v2055
        %v2057 = vpop.f32.mrb[0].mxu0
        %2058 = vdwg.mxu0
        %v2059 = vmul.f32 %v2051, 0.35355338
        %v2060 = vmul.f32 %v2056, 0.35355338
        %2061 = vrot.lane.b32.xlu0 %v654, 96
        %v2062 = vpop.permute.xlu0 %2061
        %2063 = vrot.lane.b32.xlu0 %v655, 96
        %v2064 = vpop.permute.xlu0 %2063
        %v2067 = vadd.f32 %v2059, %v2062
        %v2068 = vadd.f32 %v2060, %v2064
        %v2069 = vsel %vm750, %v2067, -inf
        %2070 = vmax.xlane.f32.xlu0 %v2069
        %v2071 = vpop.xlane.xlu0 %2070
        %v2072 = vsel %vm750, %v2068, -inf
        %2073 = vmax.xlane.f32.xlu0 %v2072
        %v2074 = vpop.xlane.xlu0 %2073
        %v2075 = vsub.f32 %v2067, %v2071
        %v2076 = vsub.f32 %v2068, %v2074
        %v2077 = vmul.f32 %v2075, 1.442695
        %v2078 = vpow.pop %v2077
        %v2079 = vmul.f32 %v2076, 1.442695
        %v2080 = vpow.pop %v2079
        %v2081 = vsel %vm750, %v2078, 0.0
        %2082 = vadd.xlane.f32.xlu0 %v2081
        %v2083 = vpop.xlane.xlu0 %2082
        %v2084 = vsel %vm750, %v2080, 0.0
        %2085 = vadd.xlane.f32.xlu0 %v2084
        %v2086 = vpop.xlane.xlu0 %2085
        %v2087 = vrcp.pop %v2083
        %v2088 = vmul.f32 %v2078, %v2087
        %v2089 = vrcp.pop %v2086
        %v2090 = vmul.f32 %v2080, %v2089
        %2091 = vrot.lane.b32.xlu0 %v644, 48
        %v2092 = vpop.permute.xlu0 %2091
        %2093 = vrot.lane.b32.xlu0 %v649, 48
        %v2094 = vpop.permute.xlu0 %2093
        %v2098 = vsel %vm750, %v2088, 0
        %v2101 = vsel %vm750, %v2090, 0
        %2103 = vmatprep.subr.mxu0 0.0
        %2104 = vmatpush1.msra.mxu0 %v2092
        %2105 = vmatprep.subr.mxu0 0.0
        %2106 = vmatpush1.msra.mxu0 %v2094
        %2107 = vmatprep.subr.mxu0 0.0
        %2108 = vmatpush1.msra.mxu0 0.0
        %2109 = vmatprep.subr.mxu0 0.0
        %2110 = vmatpush1.msra.mxu0 0.0
        %2111 = vmatprep.subr.mxu0 0.0
        %2112 = vmatpush1.msra.mxu0 0.0
        %2113 = vmatprep.subr.mxu0 0.0
        %2114 = vmatpush1.msra.mxu0 0.0
        %2115 = vmatprep.subr.mxu0 0.0
        %2116 = vmatpush1.msra.mxu0 0.0
        %2117 = vmatprep.subr.mxu0 0.0
        %2118 = vmatpush1.msra.mxu0 0.0
        %2119 = vmatprep.subr.mxu0 0.0
        %2120 = vmatpush1.msra.mxu0 0.0
        %2121 = vmatprep.subr.mxu0 0.0
        %2122 = vmatpush1.msra.mxu0 0.0
        %2123 = vmatprep.subr.mxu0 0.0
        %2124 = vmatpush1.msra.mxu0 0.0
        %2125 = vmatprep.subr.mxu0 0.0
        %2126 = vmatpush1.msra.mxu0 0.0
        %2127 = vmatprep.subr.mxu0 0.0
        %2128 = vmatpush1.msra.mxu0 0.0
        %2129 = vmatprep.subr.mxu0 0.0
        %2130 = vmatpush1.msra.mxu0 0.0
        %2131 = vmatprep.subr.mxu0 0.0
        %2132 = vmatpush1.msra.mxu0 0.0
        %2133 = vmatprep.subr.mxu0 0.0
        %2134 = vmatpush1.msra.mxu0 0.0
        %2135 = vmatprep.subr.mxu0 0.0
        %2136 = vmatpush1.msra.mxu0 0.0
        %2137 = vmatprep.subr.mxu0 0.0
        %2138 = vmatpush1.msra.mxu0 0.0
        %2139 = vmatprep.subr.mxu0 0.0
        %2140 = vmatpush1.msra.mxu0 0.0
        %2141 = vmatprep.subr.mxu0 0.0
        %2142 = vmatpush1.msra.mxu0 0.0
        %2143 = vmatprep.subr.mxu0 0.0
        %2144 = vmatpush1.msra.mxu0 0.0
        %2145 = vmatprep.subr.mxu0 0.0
        %2146 = vmatpush1.msra.mxu0 0.0
        %2147 = vmatprep.subr.mxu0 0.0
        %2148 = vmatpush1.msra.mxu0 0.0
        %2149 = vmatprep.subr.mxu0 0.0
        %2150 = vmatpush1.msra.mxu0 0.0
        %2151 = vmatprep.subr.mxu0 0.0
        %2152 = vmatpush1.msra.mxu0 0.0
        %2153 = vmatprep.subr.mxu0 0.0
        %2154 = vmatpush1.msra.mxu0 0.0
        %2155 = vmatprep.subr.mxu0 0.0
        %2156 = vmatpush1.msra.mxu0 0.0
        %2157 = vmatprep.subr.mxu0 0.0
        %2158 = vmatpush1.msra.mxu0 0.0
        %2159 = vmatprep.subr.mxu0 0.0
        %2160 = vmatpush1.msra.mxu0 0.0
        %2161 = vmatprep.subr.mxu0 0.0
        %2162 = vmatpush1.msra.mxu0 0.0
        %2163 = vmatprep.subr.mxu0 0.0
        %2164 = vmatpush1.msra.mxu0 0.0
        %2165 = vmatprep.subr.mxu0 0.0
        %2166 = vmatpush1.msra.mxu0 0.0
        %2167 = vmatprep.mubr.f32.mxu0 0.0
        %2168 = vmatmul.mubr.f32.gmra.mrb[0].mxu0 %v2098
        %v2169 = vpop.f32.mrb[0].mxu0
        %v2170 = vadd.f32 0.0, %v2169
        %v2171 = vpop.f32.mrb[0].mxu0
        %2172 = vmatprep.mubr.f32.mxu0 0.0
        %2173 = vmatmul.mubr.f32.gmra.mrb[0].mxu0 %v2101
        %v2174 = vpop.f32.mrb[0].mxu0
        %v2175 = vadd.f32 0.0, %v2174
        %v2176 = vpop.f32.mrb[0].mxu0
        %2177 = vdwg.mxu0
        %2178 = vrot.lane.b32.xlu0 %v644, 104
        %v2179 = vpop.permute.xlu0 %2178
        %2180 = vrot.lane.b32.xlu0 %v649, 104
        %v2181 = vpop.permute.xlu0 %2180
        %2182 = vrot.lane.b32.xlu0 %v644, 72
        %v2183 = vpop.permute.xlu0 %2182
        %2184 = vrot.lane.b32.xlu0 %v649, 72
        %v2185 = vpop.permute.xlu0 %2184
        %v2186 = vsel %vm662, %v2179, 0
        %v2188 = vsel %vm662, %v2181, 0
        %v2190 = vsel %vm662, %v2183, 0
        %v2192 = vsel %vm662, %v2185, 0
        %2194 = vmatprep.subr.mxu0 0.0
        %2195 = vmatpush1.xpose.msra.mxu0 %v2190
        %2196 = vmatprep.subr.mxu0 0.0
        %2197 = vmatpush1.xpose.msra.mxu0 %v2192
        %2198 = vmatprep.subr.mxu0 0.0
        %2199 = vmatpush1.xpose.msra.mxu0 0.0
        %2200 = vmatprep.subr.mxu0 0.0
        %2201 = vmatpush1.xpose.msra.mxu0 0.0
        %2202 = vmatprep.subr.mxu0 0.0
        %2203 = vmatpush1.xpose.msra.mxu0 0.0
        %2204 = vmatprep.subr.mxu0 0.0
        %2205 = vmatpush1.xpose.msra.mxu0 0.0
        %2206 = vmatprep.subr.mxu0 0.0
        %2207 = vmatpush1.xpose.msra.mxu0 0.0
        %2208 = vmatprep.subr.mxu0 0.0
        %2209 = vmatpush1.xpose.msra.mxu0 0.0
        %2210 = vmatprep.subr.mxu0 0.0
        %2211 = vmatpush1.xpose.msra.mxu0 0.0
        %2212 = vmatprep.subr.mxu0 0.0
        %2213 = vmatpush1.xpose.msra.mxu0 0.0
        %2214 = vmatprep.subr.mxu0 0.0
        %2215 = vmatpush1.xpose.msra.mxu0 0.0
        %2216 = vmatprep.subr.mxu0 0.0
        %2217 = vmatpush1.xpose.msra.mxu0 0.0
        %2218 = vmatprep.subr.mxu0 0.0
        %2219 = vmatpush1.xpose.msra.mxu0 0.0
        %2220 = vmatprep.subr.mxu0 0.0
        %2221 = vmatpush1.xpose.msra.mxu0 0.0
        %2222 = vmatprep.subr.mxu0 0.0
        %2223 = vmatpush1.xpose.msra.mxu0 0.0
        %2224 = vmatprep.subr.mxu0 0.0
        %2225 = vmatpush1.xpose.msra.mxu0 0.0
        %2226 = vmatprep.subr.mxu0 0.0
        %2227 = vmatpush1.xpose.msra.mxu0 0.0
        %2228 = vmatprep.subr.mxu0 0.0
        %2229 = vmatpush1.xpose.msra.mxu0 0.0
        %2230 = vmatprep.subr.mxu0 0.0
        %2231 = vmatpush1.xpose.msra.mxu0 0.0
        %2232 = vmatprep.subr.mxu0 0.0
        %2233 = vmatpush1.xpose.msra.mxu0 0.0
        %2234 = vmatprep.subr.mxu0 0.0
        %2235 = vmatpush1.xpose.msra.mxu0 0.0
        %2236 = vmatprep.subr.mxu0 0.0
        %2237 = vmatpush1.xpose.msra.mxu0 0.0
        %2238 = vmatprep.subr.mxu0 0.0
        %2239 = vmatpush1.xpose.msra.mxu0 0.0
        %2240 = vmatprep.subr.mxu0 0.0
        %2241 = vmatpush1.xpose.msra.mxu0 0.0
        %2242 = vmatprep.subr.mxu0 0.0
        %2243 = vmatpush1.xpose.msra.mxu0 0.0
        %2244 = vmatprep.subr.mxu0 0.0
        %2245 = vmatpush1.xpose.msra.mxu0 0.0
        %2246 = vmatprep.subr.mxu0 0.0
        %2247 = vmatpush1.xpose.msra.mxu0 0.0
        %2248 = vmatprep.subr.mxu0 0.0
        %2249 = vmatpush1.xpose.msra.mxu0 0.0
        %2250 = vmatprep.subr.mxu0 0.0
        %2251 = vmatpush1.xpose.msra.mxu0 0.0
        %2252 = vmatprep.subr.mxu0 0.0
        %2253 = vmatpush1.xpose.msra.mxu0 0.0
        %2254 = vmatprep.subr.mxu0 0.0
        %2255 = vmatpush1.xpose.msra.mxu0 0.0
        %2256 = vmatprep.subr.mxu0 0.0
        %2257 = vmatpush1.xpose.msra.mxu0 0.0
        %2258 = vmatprep.mubr.f32.mxu0 0.0
        %2259 = vmatmul.mubr.f32.gmra.mrb[0].mxu0 %v2186
        %v2260 = vpop.f32.mrb[0].mxu0
        %v2261 = vadd.f32 0.0, %v2260
        %v2262 = vpop.f32.mrb[0].mxu0
        %2263 = vmatprep.mubr.f32.mxu0 0.0
        %2264 = vmatmul.mubr.f32.gmra.mrb[0].mxu0 %v2188
        %v2265 = vpop.f32.mrb[0].mxu0
        %v2266 = vadd.f32 0.0, %v2265
        %v2267 = vpop.f32.mrb[0].mxu0
        %2268 = vdwg.mxu0
        %v2269 = vmul.f32 %v2261, 0.35355338
        %v2270 = vmul.f32 %v2266, 0.35355338
        %2271 = vrot.lane.b32.xlu0 %v654, 80
        %v2272 = vpop.permute.xlu0 %2271
        %2273 = vrot.lane.b32.xlu0 %v655, 80
        %v2274 = vpop.permute.xlu0 %2273
        %v2277 = vadd.f32 %v2269, %v2272
        %v2278 = vadd.f32 %v2270, %v2274
        %v2279 = vsel %vm750, %v2277, -inf
        %2280 = vmax.xlane.f32.xlu0 %v2279
        %v2281 = vpop.xlane.xlu0 %2280
        %v2282 = vsel %vm750, %v2278, -inf
        %2283 = vmax.xlane.f32.xlu0 %v2282
        %v2284 = vpop.xlane.xlu0 %2283
        %v2285 = vsub.f32 %v2277, %v2281
        %v2286 = vsub.f32 %v2278, %v2284
        %v2287 = vmul.f32 %v2285, 1.442695
        %v2288 = vpow.pop %v2287
        %v2289 = vmul.f32 %v2286, 1.442695
        %v2290 = vpow.pop %v2289
        %v2291 = vsel %vm750, %v2288, 0.0
        %2292 = vadd.xlane.f32.xlu0 %v2291
        %v2293 = vpop.xlane.xlu0 %2292
        %v2294 = vsel %vm750, %v2290, 0.0
        %2295 = vadd.xlane.f32.xlu0 %v2294
        %v2296 = vpop.xlane.xlu0 %2295
        %v2297 = vrcp.pop %v2293
        %v2298 = vmul.f32 %v2288, %v2297
        %v2299 = vrcp.pop %v2296
        %v2300 = vmul.f32 %v2290, %v2299
        %2301 = vrot.lane.b32.xlu0 %v644, 40
        %v2302 = vpop.permute.xlu0 %2301
        %2303 = vrot.lane.b32.xlu0 %v649, 40
        %v2304 = vpop.permute.xlu0 %2303
        %v2308 = vsel %vm750, %v2298, 0
        %v2311 = vsel %vm750, %v2300, 0
        %2313 = vmatprep.subr.mxu0 0.0
        %2314 = vmatpush1.msra.mxu0 %v2302
        %2315 = vmatprep.subr.mxu0 0.0
        %2316 = vmatpush1.msra.mxu0 %v2304
        %2317 = vmatprep.subr.mxu0 0.0
        %2318 = vmatpush1.msra.mxu0 0.0
        %2319 = vmatprep.subr.mxu0 0.0
        %2320 = vmatpush1.msra.mxu0 0.0
        %2321 = vmatprep.subr.mxu0 0.0
        %2322 = vmatpush1.msra.mxu0 0.0
        %2323 = vmatprep.subr.mxu0 0.0
        %2324 = vmatpush1.msra.mxu0 0.0
        %2325 = vmatprep.subr.mxu0 0.0
        %2326 = vmatpush1.msra.mxu0 0.0
        %2327 = vmatprep.subr.mxu0 0.0
        %2328 = vmatpush1.msra.mxu0 0.0
        %2329 = vmatprep.subr.mxu0 0.0
        %2330 = vmatpush1.msra.mxu0 0.0
        %2331 = vmatprep.subr.mxu0 0.0
        %2332 = vmatpush1.msra.mxu0 0.0
        %2333 = vmatprep.subr.mxu0 0.0
        %2334 = vmatpush1.msra.mxu0 0.0
        %2335 = vmatprep.subr.mxu0 0.0
        %2336 = vmatpush1.msra.mxu0 0.0
        %2337 = vmatprep.subr.mxu0 0.0
        %2338 = vmatpush1.msra.mxu0 0.0
        %2339 = vmatprep.subr.mxu0 0.0
        %2340 = vmatpush1.msra.mxu0 0.0
        %2341 = vmatprep.subr.mxu0 0.0
        %2342 = vmatpush1.msra.mxu0 0.0
        %2343 = vmatprep.subr.mxu0 0.0
        %2344 = vmatpush1.msra.mxu0 0.0
        %2345 = vmatprep.subr.mxu0 0.0
        %2346 = vmatpush1.msra.mxu0 0.0
        %2347 = vmatprep.subr.mxu0 0.0
        %2348 = vmatpush1.msra.mxu0 0.0
        %2349 = vmatprep.subr.mxu0 0.0
        %2350 = vmatpush1.msra.mxu0 0.0
        %2351 = vmatprep.subr.mxu0 0.0
        %2352 = vmatpush1.msra.mxu0 0.0
        %2353 = vmatprep.subr.mxu0 0.0
        %2354 = vmatpush1.msra.mxu0 0.0
        %2355 = vmatprep.subr.mxu0 0.0
        %2356 = vmatpush1.msra.mxu0 0.0
        %2357 = vmatprep.subr.mxu0 0.0
        %2358 = vmatpush1.msra.mxu0 0.0
        %2359 = vmatprep.subr.mxu0 0.0
        %2360 = vmatpush1.msra.mxu0 0.0
        %2361 = vmatprep.subr.mxu0 0.0
        %2362 = vmatpush1.msra.mxu0 0.0
        %2363 = vmatprep.subr.mxu0 0.0
        %2364 = vmatpush1.msra.mxu0 0.0
        %2365 = vmatprep.subr.mxu0 0.0
        %2366 = vmatpush1.msra.mxu0 0.0
        %2367 = vmatprep.subr.mxu0 0.0
        %2368 = vmatpush1.msra.mxu0 0.0
        %2369 = vmatprep.subr.mxu0 0.0
        %2370 = vmatpush1.msra.mxu0 0.0
        %2371 = vmatprep.subr.mxu0 0.0
        %2372 = vmatpush1.msra.mxu0 0.0
        %2373 = vmatprep.subr.mxu0 0.0
        %2374 = vmatpush1.msra.mxu0 0.0
        %2375 = vmatprep.subr.mxu0 0.0
        %2376 = vmatpush1.msra.mxu0 0.0
        %2377 = vmatprep.mubr.f32.mxu0 0.0
        %2378 = vmatmul.mubr.f32.gmra.mrb[0].mxu0 %v2308
        %v2379 = vpop.f32.mrb[0].mxu0
        %v2380 = vadd.f32 0.0, %v2379
        %v2381 = vpop.f32.mrb[0].mxu0
        %2382 = vmatprep.mubr.f32.mxu0 0.0
        %2383 = vmatmul.mubr.f32.gmra.mrb[0].mxu0 %v2311
        %v2384 = vpop.f32.mrb[0].mxu0
        %v2385 = vadd.f32 0.0, %v2384
        %v2386 = vpop.f32.mrb[0].mxu0
        %2387 = vdwg.mxu0
        %2390 = vrot.lane.b32.xlu0 %v1857, 16
        %v2391 = vpop.permute.xlu0 %2390
        %2392 = vrot.lane.b32.xlu0 %v1858, 16
        %v2393 = vpop.permute.xlu0 %2392
        %2398 = vrot.lane.b32.xlu0 %v2067, 32
        %v2399 = vpop.permute.xlu0 %2398
        %2400 = vrot.lane.b32.xlu0 %v2068, 32
        %v2401 = vpop.permute.xlu0 %2400
        %2406 = vrot.lane.b32.xlu0 %v2277, 48
        %v2407 = vpop.permute.xlu0 %2406
        %2408 = vrot.lane.b32.xlu0 %v2278, 48
        %v2409 = vpop.permute.xlu0 %2408
        %v2412 = vsel %vm750, %v1645, %v2391
        %v2413 = vsel %vm750, %v1646, %v2393
        %v2414 = vsel %vm554, %v2412, %v2399
        %v2415 = vsel %vm554, %v2413, %v2401
        %v2416 = vsel %vm1520, %v2414, %v2407
        %v2417 = vsel %vm1520, %v2415, %v2409
        %2420 = vrot.lane.b32.xlu0 %v1960, 8
        %v2421 = vpop.permute.xlu0 %2420
        %2422 = vrot.lane.b32.xlu0 %v1965, 8
        %v2423 = vpop.permute.xlu0 %2422
        %2428 = vrot.lane.b32.xlu0 %v2170, 16
        %v2429 = vpop.permute.xlu0 %2428
        %2430 = vrot.lane.b32.xlu0 %v2175, 16
        %v2431 = vpop.permute.xlu0 %2430
        %2436 = vrot.lane.b32.xlu0 %v2380, 24
        %v2437 = vpop.permute.xlu0 %2436
        %2438 = vrot.lane.b32.xlu0 %v2385, 24
        %v2439 = vpop.permute.xlu0 %2438
        %v2442 = vsel %vm662, %v1748, %v2421
        %v2443 = vsel %vm662, %v1753, %v2423
        %v2444 = vsel %vm750, %v2442, %v2429
        %v2445 = vsel %vm750, %v2443, %v2431
        %v2446 = vsel %vm1551, %v2444, %v2437
        %v2447 = vsel %vm1551, %v2445, %v2439
        %vm2448 = vcmask 523264
        %2449 = vst.msk [vmem:[#allocation3] sm:$0xff] %vm2448, %v1521
        %2450 = vst.msk [vmem:[#allocation3 + $0x8] sm:$0xff] %vm2448, %v1522
        %2451 = vst.msk [vmem:[#allocation3 + $0x10] sm:$0xff] %vm2448, %v2416
        %2452 = vst.msk [vmem:[#allocation3 + $0x18] sm:$0xff] %vm2448, %v2417
        %v2453 = vld [vmem:[%s394] sm:$0xff]
        %v2454 = vld [vmem:[%s394 + $0x8] sm:$0xff]
        %v2455 = vld [vmem:[%s394 + $0x10] sm:$0xff]
        %v2456 = vld [vmem:[%s394 + $0x18] sm:$0xff]
        %v2458 = vsel %vm554, %v1552, 0
        %v2461 = vsel %vm554, %v1553, 0
        %v2464 = vsel %vm554, %v2446, 0
        %v2467 = vsel %vm554, %v2447, 0
        %2469 = vmatprep.subr.mxu0 0.0
        %2470 = vmatpush1.msra.mxu0 %v2453
        %2471 = vmatprep.subr.mxu0 0.0
        %2472 = vmatpush1.msra.mxu0 %v2454
        %2473 = vmatprep.subr.mxu0 0.0
        %2474 = vmatpush1.msra.mxu0 %v2455
        %2475 = vmatprep.subr.mxu0 0.0
        %2476 = vmatpush1.msra.mxu0 %v2456
        %2477 = vmatprep.subr.mxu0 0.0
        %2478 = vmatpush1.msra.mxu0 0.0
        %2479 = vmatprep.subr.mxu0 0.0
        %2480 = vmatpush1.msra.mxu0 0.0
        %2481 = vmatprep.subr.mxu0 0.0
        %2482 = vmatpush1.msra.mxu0 0.0
        %2483 = vmatprep.subr.mxu0 0.0
        %2484 = vmatpush1.msra.mxu0 0.0
        %2485 = vmatprep.subr.mxu0 0.0
        %2486 = vmatpush1.msra.mxu0 0.0
        %2487 = vmatprep.subr.mxu0 0.0
        %2488 = vmatpush1.msra.mxu0 0.0
        %2489 = vmatprep.subr.mxu0 0.0
        %2490 = vmatpush1.msra.mxu0 0.0
        %2491 = vmatprep.subr.mxu0 0.0
        %2492 = vmatpush1.msra.mxu0 0.0
        %2493 = vmatprep.subr.mxu0 0.0
        %2494 = vmatpush1.msra.mxu0 0.0
        %2495 = vmatprep.subr.mxu0 0.0
        %2496 = vmatpush1.msra.mxu0 0.0
        %2497 = vmatprep.subr.mxu0 0.0
        %2498 = vmatpush1.msra.mxu0 0.0
        %2499 = vmatprep.subr.mxu0 0.0
        %2500 = vmatpush1.msra.mxu0 0.0
        %2501 = vmatprep.subr.mxu0 0.0
        %2502 = vmatpush1.msra.mxu0 0.0
        %2503 = vmatprep.subr.mxu0 0.0
        %2504 = vmatpush1.msra.mxu0 0.0
        %2505 = vmatprep.subr.mxu0 0.0
        %2506 = vmatpush1.msra.mxu0 0.0
        %2507 = vmatprep.subr.mxu0 0.0
        %2508 = vmatpush1.msra.mxu0 0.0
        %2509 = vmatprep.subr.mxu0 0.0
        %2510 = vmatpush1.msra.mxu0 0.0
        %2511 = vmatprep.subr.mxu0 0.0
        %2512 = vmatpush1.msra.mxu0 0.0
        %2513 = vmatprep.subr.mxu0 0.0
        %2514 = vmatpush1.msra.mxu0 0.0
        %2515 = vmatprep.subr.mxu0 0.0
        %2516 = vmatpush1.msra.mxu0 0.0
        %2517 = vmatprep.subr.mxu0 0.0
        %2518 = vmatpush1.msra.mxu0 0.0
        %2519 = vmatprep.subr.mxu0 0.0
        %2520 = vmatpush1.msra.mxu0 0.0
        %2521 = vmatprep.subr.mxu0 0.0
        %2522 = vmatpush1.msra.mxu0 0.0
        %2523 = vmatprep.subr.mxu0 0.0
        %2524 = vmatpush1.msra.mxu0 0.0
        %2525 = vmatprep.subr.mxu0 0.0
        %2526 = vmatpush1.msra.mxu0 0.0
        %2527 = vmatprep.subr.mxu0 0.0
        %2528 = vmatpush1.msra.mxu0 0.0
        %2529 = vmatprep.subr.mxu0 0.0
        %2530 = vmatpush1.msra.mxu0 0.0
        %2531 = vmatprep.subr.mxu0 0.0
        %2532 = vmatpush1.msra.mxu0 0.0
        %2533 = vmatprep.mubr.f32.mxu0 0.0
        %2534 = vmatmul.mubr.f32.gmra.mrb[0].mxu0 %v2458
        %v2535 = vpop.f32.mrb[0].mxu0
        %v2536 = vadd.f32 0.0, %v2535
        %v2537 = vpop.f32.mrb[0].mxu0
        %2538 = vmatprep.mubr.f32.mxu0 0.0
        %2539 = vmatmul.mubr.f32.gmra.mrb[0].mxu0 %v2461
        %v2540 = vpop.f32.mrb[0].mxu0
        %v2541 = vadd.f32 0.0, %v2540
        %v2542 = vpop.f32.mrb[0].mxu0
        %2543 = vmatprep.mubr.f32.mxu0 0.0
        %2544 = vmatmul.mubr.f32.gmra.mrb[0].mxu0 %v2464
        %v2545 = vpop.f32.mrb[0].mxu0
        %v2546 = vadd.f32 0.0, %v2545
        %v2547 = vpop.f32.mrb[0].mxu0
        %2548 = vmatprep.mubr.f32.mxu0 0.0
        %2549 = vmatmul.mubr.f32.gmra.mrb[0].mxu0 %v2467
        %v2550 = vpop.f32.mrb[0].mxu0
        %v2551 = vadd.f32 0.0, %v2550
        %v2552 = vpop.f32.mrb[0].mxu0
        %2553 = vdwg.mxu0
        %v2554 = vadd.f32 %v546, %v2536
        %v2555 = vadd.f32 %v547, %v2541
        %v2556 = vadd.f32 %v548, %v2546
        %v2557 = vadd.f32 %v549, %v2551
        %v2558 = vld [vmem:[%s412] sm:$0xff]
        %v2559 = vld [vmem:[%s412 + $0x8] sm:$0xff]
        %v2560 = vsel %vm554, %v2554, 0.0
        %2561 = vadd.xlane.f32.xlu0 %v2560
        %v2562 = vpop.xlane.xlu0 %2561
        %v2563 = vsel %vm554, %v2555, 0.0
        %2564 = vadd.xlane.f32.xlu0 %v2563
        %v2565 = vpop.xlane.xlu0 %2564
        %v2566 = vsel %vm554, %v2556, 0.0
        %2567 = vadd.xlane.f32.xlu0 %v2566
        %v2568 = vpop.xlane.xlu0 %2567
        %v2569 = vsel %vm554, %v2557, 0.0
        %2570 = vadd.xlane.f32.xlu0 %v2569
        %v2571 = vpop.xlane.xlu0 %2570
        %v2572 = vadd.f32 %v2562, %v2568
        %v2573 = vadd.f32 %v2565, %v2571
        %v2574 = vmul.f32 %v2572, 0.015625
        %v2575 = vmul.f32 %v2573, 0.015625
        %2577 = vset.pattern.permute.xlu0 0
        %2578 = vperm.xlu0 %2577, %v2574
        %v2579 = vpop.permute.xlu0 %2578
        %2582 = vset.pattern.permute.xlu0 0
        %2583 = vperm.xlu0 %2582, %v2575
        %v2584 = vpop.permute.xlu0 %2583
        %v2586 = vsub.f32 %v2554, %v2579
        %v2587 = vsub.f32 %v2555, %v2584
        %v2588 = vsub.f32 %v2556, %v2579
        %v2589 = vsub.f32 %v2557, %v2584
        %v2590 = vmul.f32 %v2586, %v2586
        %v2591 = vmul.f32 %v2587, %v2587
        %v2592 = vmul.f32 %v2588, %v2588
        %v2593 = vmul.f32 %v2589, %v2589
        %v2594 = vsel %vm554, %v2590, 0.0
        %2595 = vadd.xlane.f32.xlu0 %v2594
        %v2596 = vpop.xlane.xlu0 %2595
        %v2597 = vsel %vm554, %v2591, 0.0
        %2598 = vadd.xlane.f32.xlu0 %v2597
        %v2599 = vpop.xlane.xlu0 %2598
        %v2600 = vsel %vm554, %v2592, 0.0
        %2601 = vadd.xlane.f32.xlu0 %v2600
        %v2602 = vpop.xlane.xlu0 %2601
        %v2603 = vsel %vm554, %v2593, 0.0
        %2604 = vadd.xlane.f32.xlu0 %v2603
        %v2605 = vpop.xlane.xlu0 %2604
        %v2606 = vadd.f32 %v2596, %v2602
        %v2607 = vadd.f32 %v2599, %v2605
        %v2608 = vmul.f32 %v2606, 0.015625
        %v2609 = vmul.f32 %v2607, 0.015625
        %v2610 = vadd.f32 %v2608, 1e-05
        %v2611 = vadd.f32 %v2609, 1e-05
        %v2612 = vrsqrt.pop %v2610
        %v2613 = vrsqrt.pop %v2611
        %v2614 = vmul.f32 %v2612, %v2558
        %v2615 = vmul.f32 %v2613, %v2559
        %2617 = vset.pattern.permute.xlu0 0
        %2618 = vperm.xlu0 %2617, %v2614
        %v2619 = vpop.permute.xlu0 %2618
        %2622 = vset.pattern.permute.xlu0 0
        %2623 = vperm.xlu0 %2622, %v2615
        %v2624 = vpop.permute.xlu0 %2623
        %v2626 = vmul.f32 %v2586, %v2619
        %v2627 = vmul.f32 %v2587, %v2624
        %v2628 = vmul.f32 %v2588, %v2619
        %v2629 = vmul.f32 %v2589, %v2624
        %2631 = vset.pattern.permute.xlu0 1
        %2632 = vperm.xlu0 %2631, %v2558
        %v2633 = vpop.permute.xlu0 %2632
        %2636 = vset.pattern.permute.xlu0 1
        %2637 = vperm.xlu0 %2636, %v2559
        %v2638 = vpop.permute.xlu0 %2637
        %v2640 = vadd.f32 %v2626, %v2633
        %v2641 = vadd.f32 %v2627, %v2638
        %v2642 = vadd.f32 %v2628, %v2633
        %v2643 = vadd.f32 %v2629, %v2638
        %v2644 = vld [vmem:[%s407] sm:$0x1]
        %v2645 = vld [vmem:[%s399] sm:$0xff]
        %v2646 = vld [vmem:[%s399 + $0x8] sm:$0xff]
        %v2647 = vld [vmem:[%s399 + $0x10] sm:$0xff]
        %v2648 = vld [vmem:[%s399 + $0x18] sm:$0xff]
        %v2650 = vlaneseq
        %v2651 = vshrl.u32 %v2650, 7
        %v2652 = vsub.s32 0, %v2651
        %v2653 = vrot.slane %v2644, %v2652
        %v2656 = vsel %vm554, %v2640, 0
        %v2659 = vsel %vm554, %v2641, 0
        %v2662 = vsel %vm554, %v2642, 0
        %v2665 = vsel %vm554, %v2643, 0
        %2667 = vmatprep.subr.mxu0 0.0
        %2668 = vmatpush1.msra.mxu0 %v2645
        %2669 = vmatprep.subr.mxu0 0.0
        %2670 = vmatpush1.msra.mxu0 %v2646
        %2671 = vmatprep.subr.mxu0 0.0
        %2672 = vmatpush1.msra.mxu0 %v2647
        %2673 = vmatprep.subr.mxu0 0.0
        %2674 = vmatpush1.msra.mxu0 %v2648
        %2675 = vmatprep.subr.mxu0 0.0
        %2676 = vmatpush1.msra.mxu0 0.0
        %2677 = vmatprep.subr.mxu0 0.0
        %2678 = vmatpush1.msra.mxu0 0.0
        %2679 = vmatprep.subr.mxu0 0.0
        %2680 = vmatpush1.msra.mxu0 0.0
        %2681 = vmatprep.subr.mxu0 0.0
        %2682 = vmatpush1.msra.mxu0 0.0
        %2683 = vmatprep.subr.mxu0 0.0
        %2684 = vmatpush1.msra.mxu0 0.0
        %2685 = vmatprep.subr.mxu0 0.0
        %2686 = vmatpush1.msra.mxu0 0.0
        %2687 = vmatprep.subr.mxu0 0.0
        %2688 = vmatpush1.msra.mxu0 0.0
        %2689 = vmatprep.subr.mxu0 0.0
        %2690 = vmatpush1.msra.mxu0 0.0
        %2691 = vmatprep.subr.mxu0 0.0
        %2692 = vmatpush1.msra.mxu0 0.0
        %2693 = vmatprep.subr.mxu0 0.0
        %2694 = vmatpush1.msra.mxu0 0.0
        %2695 = vmatprep.subr.mxu0 0.0
        %2696 = vmatpush1.msra.mxu0 0.0
        %2697 = vmatprep.subr.mxu0 0.0
        %2698 = vmatpush1.msra.mxu0 0.0
        %2699 = vmatprep.subr.mxu0 0.0
        %2700 = vmatpush1.msra.mxu0 0.0
        %2701 = vmatprep.subr.mxu0 0.0
        %2702 = vmatpush1.msra.mxu0 0.0
        %2703 = vmatprep.subr.mxu0 0.0
        %2704 = vmatpush1.msra.mxu0 0.0
        %2705 = vmatprep.subr.mxu0 0.0
        %2706 = vmatpush1.msra.mxu0 0.0
        %2707 = vmatprep.subr.mxu0 0.0
        %2708 = vmatpush1.msra.mxu0 0.0
        %2709 = vmatprep.subr.mxu0 0.0
        %2710 = vmatpush1.msra.mxu0 0.0
        %2711 = vmatprep.subr.mxu0 0.0
        %2712 = vmatpush1.msra.mxu0 0.0
        %2713 = vmatprep.subr.mxu0 0.0
        %2714 = vmatpush1.msra.mxu0 0.0
        %2715 = vmatprep.subr.mxu0 0.0
        %2716 = vmatpush1.msra.mxu0 0.0
        %2717 = vmatprep.subr.mxu0 0.0
        %2718 = vmatpush1.msra.mxu0 0.0
        %2719 = vmatprep.subr.mxu0 0.0
        %2720 = vmatpush1.msra.mxu0 0.0
        %2721 = vmatprep.subr.mxu0 0.0
        %2722 = vmatpush1.msra.mxu0 0.0
        %2723 = vmatprep.subr.mxu0 0.0
        %2724 = vmatpush1.msra.mxu0 0.0
        %2725 = vmatprep.subr.mxu0 0.0
        %2726 = vmatpush1.msra.mxu0 0.0
        %2727 = vmatprep.subr.mxu0 0.0
        %2728 = vmatpush1.msra.mxu0 0.0
        %2729 = vmatprep.subr.mxu0 0.0
        %2730 = vmatpush1.msra.mxu0 0.0
        %2731 = vmatprep.mubr.f32.mxu0 0.0
        %2732 = vmatmul.mubr.f32.gmra.mrb[0].mxu0 %v2656
        %v2733 = vpop.f32.mrb[0].mxu0
        %v2734 = vadd.f32 %v2653, %v2733
        %v2735 = vpop.f32.mrb[0].mxu0
        %2736 = vmatprep.mubr.f32.mxu0 0.0
        %2737 = vmatmul.mubr.f32.gmra.mrb[0].mxu0 %v2659
        %v2738 = vpop.f32.mrb[0].mxu0
        %v2739 = vadd.f32 %v2653, %v2738
        %v2740 = vpop.f32.mrb[0].mxu0
        %2741 = vmatprep.mubr.f32.mxu0 0.0
        %2742 = vmatmul.mubr.f32.gmra.mrb[0].mxu0 %v2662
        %v2743 = vpop.f32.mrb[0].mxu0
        %v2744 = vadd.f32 %v2653, %v2743
        %v2745 = vpop.f32.mrb[0].mxu0
        %2746 = vmatprep.mubr.f32.mxu0 0.0
        %2747 = vmatmul.mubr.f32.gmra.mrb[0].mxu0 %v2665
        %v2748 = vpop.f32.mrb[0].mxu0
        %v2749 = vadd.f32 %v2653, %v2748
        %v2750 = vpop.f32.mrb[0].mxu0
        %2751 = vdwg.mxu0
        %v2752 = vmul.f32 %v2734, 0.5
        %v2753 = vmul.f32 %v2739, 0.5
        %v2754 = vmul.f32 %v2744, 0.5
        %v2755 = vmul.f32 %v2749, 0.5
        %v2756 = vmul.f32 %v2734, 0.70710677
        %v2757 = vmul.f32 %v2739, 0.70710677
        %v2758 = vmul.f32 %v2744, 0.70710677
        %v2759 = vmul.f32 %v2749, 0.70710677
        %v2760 = vand.u32 2147483647, %v2756
        %v2761 = vand.u32 2147483647, %v2757
        %v2762 = vand.u32 2147483647, %v2758
        %v2763 = vand.u32 2147483647, %v2759
        %v2764 = vmul.f32 %v2760, 0.3275911
        %v2765 = vmul.f32 %v2761, 0.3275911
        %v2766 = vmul.f32 %v2762, 0.3275911
        %v2767 = vmul.f32 %v2763, 0.3275911
        %v2768 = vadd.f32 %v2764, 1.0
        %v2769 = vadd.f32 %v2765, 1.0
        %v2770 = vadd.f32 %v2766, 1.0
        %v2771 = vadd.f32 %v2767, 1.0
        %v2772 = vrcp.pop %v2768
        %v2773 = vmul.f32 1.0, %v2772
        %v2774 = vrcp.pop %v2769
        %v2775 = vmul.f32 1.0, %v2774
        %v2776 = vrcp.pop %v2770
        %v2777 = vmul.f32 1.0, %v2776
        %v2778 = vrcp.pop %v2771
        %v2779 = vmul.f32 1.0, %v2778
        %v2780 = vmul.f32 %v2773, 1.0614054
        %v2781 = vmul.f32 %v2775, 1.0614054
        %v2782 = vmul.f32 %v2777, 1.0614054
        %v2783 = vmul.f32 %v2779, 1.0614054
        %v2784 = vsub.f32 %v2780, 1.4531521
        %v2785 = vsub.f32 %v2781, 1.4531521
        %v2786 = vsub.f32 %v2782, 1.4531521
        %v2787 = vsub.f32 %v2783, 1.4531521
        %v2788 = vmul.f32 %v2784, %v2773
        %v2789 = vmul.f32 %v2785, %v2775
        %v2790 = vmul.f32 %v2786, %v2777
        %v2791 = vmul.f32 %v2787, %v2779
        %v2792 = vadd.f32 %v2788, 1.4214138
        %v2793 = vadd.f32 %v2789, 1.4214138
        %v2794 = vadd.f32 %v2790, 1.4214138
        %v2795 = vadd.f32 %v2791, 1.4214138
        %v2796 = vmul.f32 %v2792, %v2773
        %v2797 = vmul.f32 %v2793, %v2775
        %v2798 = vmul.f32 %v2794, %v2777
        %v2799 = vmul.f32 %v2795, %v2779
        %v2800 = vsub.f32 %v2796, 0.28449672
        %v2801 = vsub.f32 %v2797, 0.28449672
        %v2802 = vsub.f32 %v2798, 0.28449672
        %v2803 = vsub.f32 %v2799, 0.28449672
        %v2804 = vmul.f32 %v2800, %v2773
        %v2805 = vmul.f32 %v2801, %v2775
        %v2806 = vmul.f32 %v2802, %v2777
        %v2807 = vmul.f32 %v2803, %v2779
        %v2808 = vadd.f32 %v2804, 0.2548296
        %v2809 = vadd.f32 %v2805, 0.2548296
        %v2810 = vadd.f32 %v2806, 0.2548296
        %v2811 = vadd.f32 %v2807, 0.2548296
        %v2812 = vmul.f32 %v2808, %v2773
        %v2813 = vmul.f32 %v2809, %v2775
        %v2814 = vmul.f32 %v2810, %v2777
        %v2815 = vmul.f32 %v2811, %v2779
        %v2816 = vsub.f32 0.0, %v2760
        %v2817 = vsub.f32 0.0, %v2761
        %v2818 = vsub.f32 0.0, %v2762
        %v2819 = vsub.f32 0.0, %v2763
        %v2820 = vmul.f32 %v2816, %v2760
        %v2821 = vmul.f32 %v2817, %v2761
        %v2822 = vmul.f32 %v2818, %v2762
        %v2823 = vmul.f32 %v2819, %v2763
        %v2824 = vmul.f32 %v2820, 1.442695
        %v2825 = vpow.pop %v2824
        %v2826 = vmul.f32 %v2821, 1.442695
        %v2827 = vpow.pop %v2826
        %v2828 = vmul.f32 %v2822, 1.442695
        %v2829 = vpow.pop %v2828
        %v2830 = vmul.f32 %v2823, 1.442695
        %v2831 = vpow.pop %v2830
        %v2832 = vmul.f32 %v2812, %v2825
        %v2833 = vmul.f32 %v2813, %v2827
        %v2834 = vmul.f32 %v2814, %v2829
        %v2835 = vmul.f32 %v2815, %v2831
        %v2836 = vsub.f32 1.0, %v2832
        %v2837 = vsub.f32 1.0, %v2833
        %v2838 = vsub.f32 1.0, %v2834
        %v2839 = vsub.f32 1.0, %v2835
        %vm2840 = vcmp.lt.f32.partialorder %v2756, 0.0
        %vm2841 = vcmp.lt.f32.partialorder %v2757, 0.0
        %vm2842 = vcmp.lt.f32.partialorder %v2758, 0.0
        %vm2843 = vcmp.lt.f32.partialorder %v2759, 0.0
        %v2844 = vsub.f32 0.0, %v2836
        %v2845 = vsub.f32 0.0, %v2837
        %v2846 = vsub.f32 0.0, %v2838
        %v2847 = vsub.f32 0.0, %v2839
        %v2848 = vsel %vm2840, %v2844, %v2836
        %v2849 = vsel %vm2841, %v2845, %v2837
        %v2850 = vsel %vm2842, %v2846, %v2838
        %v2851 = vsel %vm2843, %v2847, %v2839
        %v2852 = vadd.f32 %v2848, 1.0
        %v2853 = vadd.f32 %v2849, 1.0
        %v2854 = vadd.f32 %v2850, 1.0
        %v2855 = vadd.f32 %v2851, 1.0
        %v2856 = vmul.f32 %v2752, %v2852
        %v2857 = vmul.f32 %v2753, %v2853
        %v2858 = vmul.f32 %v2754, %v2854
        %v2859 = vmul.f32 %v2755, %v2855
        %v2860 = vld [vmem:[%s404] sm:$0xff]
        %v2861 = vld [vmem:[%s404 + $0x8] sm:$0xff]
        %v2862 = vld [vmem:[%s404 + $0x10] sm:$0xff]
        %v2863 = vld [vmem:[%s404 + $0x18] sm:$0xff]
        %v2864 = vld [vmem:[%s404 + $0x20] sm:$0xff]
        %v2865 = vld [vmem:[%s404 + $0x28] sm:$0xff]
        %v2866 = vld [vmem:[%s404 + $0x30] sm:$0xff]
        %v2867 = vld [vmem:[%s404 + $0x38] sm:$0xff]
        %2868 = vrot.lane.b32.xlu0 %v2653, 64
        %v2869 = vpop.permute.xlu0 %2868
        %v2872 = vsel %vm2448, %v2856, 0
        %v2875 = vsel %vm2448, %v2857, 0
        %v2878 = vsel %vm2448, %v2858, 0
        %v2881 = vsel %vm2448, %v2859, 0
        %2883 = vmatprep.subr.mxu0 0.0
        %2884 = vmatpush1.msra.mxu0 %v2860
        %2885 = vmatprep.subr.mxu0 0.0
        %2886 = vmatpush1.msra.mxu0 %v2861
        %2887 = vmatprep.subr.mxu0 0.0
        %2888 = vmatpush1.msra.mxu0 %v2862
        %2889 = vmatprep.subr.mxu0 0.0
        %2890 = vmatpush1.msra.mxu0 %v2863
        %2891 = vmatprep.subr.mxu0 0.0
        %2892 = vmatpush1.msra.mxu0 %v2864
        %2893 = vmatprep.subr.mxu0 0.0
        %2894 = vmatpush1.msra.mxu0 %v2865
        %2895 = vmatprep.subr.mxu0 0.0
        %2896 = vmatpush1.msra.mxu0 %v2866
        %2897 = vmatprep.subr.mxu0 0.0
        %2898 = vmatpush1.msra.mxu0 %v2867
        %2899 = vmatprep.subr.mxu0 0.0
        %2900 = vmatpush1.msra.mxu0 0.0
        %2901 = vmatprep.subr.mxu0 0.0
        %2902 = vmatpush1.msra.mxu0 0.0
        %2903 = vmatprep.subr.mxu0 0.0
        %2904 = vmatpush1.msra.mxu0 0.0
        %2905 = vmatprep.subr.mxu0 0.0
        %2906 = vmatpush1.msra.mxu0 0.0
        %2907 = vmatprep.subr.mxu0 0.0
        %2908 = vmatpush1.msra.mxu0 0.0
        %2909 = vmatprep.subr.mxu0 0.0
        %2910 = vmatpush1.msra.mxu0 0.0
        %2911 = vmatprep.subr.mxu0 0.0
        %2912 = vmatpush1.msra.mxu0 0.0
        %2913 = vmatprep.subr.mxu0 0.0
        %2914 = vmatpush1.msra.mxu0 0.0
        %2915 = vmatprep.subr.mxu0 0.0
        %2916 = vmatpush1.msra.mxu0 0.0
        %2917 = vmatprep.subr.mxu0 0.0
        %2918 = vmatpush1.msra.mxu0 0.0
        %2919 = vmatprep.subr.mxu0 0.0
        %2920 = vmatpush1.msra.mxu0 0.0
        %2921 = vmatprep.subr.mxu0 0.0
        %2922 = vmatpush1.msra.mxu0 0.0
        %2923 = vmatprep.subr.mxu0 0.0
        %2924 = vmatpush1.msra.mxu0 0.0
        %2925 = vmatprep.subr.mxu0 0.0
        %2926 = vmatpush1.msra.mxu0 0.0
        %2927 = vmatprep.subr.mxu0 0.0
        %2928 = vmatpush1.msra.mxu0 0.0
        %2929 = vmatprep.subr.mxu0 0.0
        %2930 = vmatpush1.msra.mxu0 0.0
        %2931 = vmatprep.subr.mxu0 0.0
        %2932 = vmatpush1.msra.mxu0 0.0
        %2933 = vmatprep.subr.mxu0 0.0
        %2934 = vmatpush1.msra.mxu0 0.0
        %2935 = vmatprep.subr.mxu0 0.0
        %2936 = vmatpush1.msra.mxu0 0.0
        %2937 = vmatprep.subr.mxu0 0.0
        %2938 = vmatpush1.msra.mxu0 0.0
        %2939 = vmatprep.subr.mxu0 0.0
        %2940 = vmatpush1.msra.mxu0 0.0
        %2941 = vmatprep.subr.mxu0 0.0
        %2942 = vmatpush1.msra.mxu0 0.0
        %2943 = vmatprep.subr.mxu0 0.0
        %2944 = vmatpush1.msra.mxu0 0.0
        %2945 = vmatprep.subr.mxu0 0.0
        %2946 = vmatpush1.msra.mxu0 0.0
        %2947 = vmatprep.mubr.f32.mxu0 0.0
        %2948 = vmatmul.mubr.f32.gmra.mrb[0].mxu0 %v2872
        %v2949 = vpop.f32.mrb[0].mxu0
        %v2950 = vadd.f32 %v2869, %v2949
        %v2951 = vpop.f32.mrb[0].mxu0
        %2952 = vmatprep.mubr.f32.mxu0 0.0
        %2953 = vmatmul.mubr.f32.gmra.mrb[0].mxu0 %v2875
        %v2954 = vpop.f32.mrb[0].mxu0
        %v2955 = vadd.f32 %v2869, %v2954
        %v2956 = vpop.f32.mrb[0].mxu0
        %2957 = vmatprep.mubr.f32.mxu0 0.0
        %2958 = vmatmul.mubr.f32.gmra.mrb[0].mxu0 %v2878
        %v2959 = vpop.f32.mrb[0].mxu0
        %v2960 = vadd.f32 %v2869, %v2959
        %v2961 = vpop.f32.mrb[0].mxu0
        %2962 = vmatprep.mubr.f32.mxu0 0.0
        %2963 = vmatmul.mubr.f32.gmra.mrb[0].mxu0 %v2881
        %v2964 = vpop.f32.mrb[0].mxu0
        %v2965 = vadd.f32 %v2869, %v2964
        %v2966 = vpop.f32.mrb[0].mxu0
        %2967 = vdwg.mxu0
        %v2968 = vadd.f32 %v2640, %v2950
        %v2969 = vadd.f32 %v2641, %v2955
        %v2970 = vadd.f32 %v2642, %v2960
        %v2971 = vadd.f32 %v2643, %v2965
        %v2972 = vsel %vm554, %v2968, 0.0
        %2973 = vadd.xlane.f32.xlu0 %v2972
        %v2974 = vpop.xlane.xlu0 %2973
        %v2975 = vsel %vm554, %v2969, 0.0
        %2976 = vadd.xlane.f32.xlu0 %v2975
        %v2977 = vpop.xlane.xlu0 %2976
        %v2978 = vsel %vm554, %v2970, 0.0
        %2979 = vadd.xlane.f32.xlu0 %v2978
        %v2980 = vpop.xlane.xlu0 %2979
        %v2981 = vsel %vm554, %v2971, 0.0
        %2982 = vadd.xlane.f32.xlu0 %v2981
        %v2983 = vpop.xlane.xlu0 %2982
        %v2984 = vadd.f32 %v2974, %v2980
        %v2985 = vadd.f32 %v2977, %v2983
        %v2986 = vmul.f32 %v2984, 0.015625
        %v2987 = vmul.f32 %v2985, 0.015625
        %2989 = vset.pattern.permute.xlu0 0
        %2990 = vperm.xlu0 %2989, %v2986
        %v2991 = vpop.permute.xlu0 %2990
        %2994 = vset.pattern.permute.xlu0 0
        %2995 = vperm.xlu0 %2994, %v2987
        %v2996 = vpop.permute.xlu0 %2995
        %v2998 = vsub.f32 %v2968, %v2991
        %v2999 = vsub.f32 %v2969, %v2996
        %v3000 = vsub.f32 %v2970, %v2991
        %v3001 = vsub.f32 %v2971, %v2996
        %v3002 = vmul.f32 %v2998, %v2998
        %v3003 = vmul.f32 %v2999, %v2999
        %v3004 = vmul.f32 %v3000, %v3000
        %v3005 = vmul.f32 %v3001, %v3001
        %v3006 = vsel %vm554, %v3002, 0.0
        %3007 = vadd.xlane.f32.xlu0 %v3006
        %v3008 = vpop.xlane.xlu0 %3007
        %v3009 = vsel %vm554, %v3003, 0.0
        %3010 = vadd.xlane.f32.xlu0 %v3009
        %v3011 = vpop.xlane.xlu0 %3010
        %v3012 = vsel %vm554, %v3004, 0.0
        %3013 = vadd.xlane.f32.xlu0 %v3012
        %v3014 = vpop.xlane.xlu0 %3013
        %v3015 = vsel %vm554, %v3005, 0.0
        %3016 = vadd.xlane.f32.xlu0 %v3015
        %v3017 = vpop.xlane.xlu0 %3016
        %v3018 = vadd.f32 %v3008, %v3014
        %v3019 = vadd.f32 %v3011, %v3017
        %v3020 = vmul.f32 %v3018, 0.015625
        %v3021 = vmul.f32 %v3019, 0.015625
        %v3022 = vadd.f32 %v3020, 1e-05
        %v3023 = vadd.f32 %v3021, 1e-05
        %v3024 = vrsqrt.pop %v3022
        %v3025 = vrsqrt.pop %v3023
        %v3026 = vmul.f32 %v3024, %v2558
        %v3027 = vmul.f32 %v3025, %v2559
        %3029 = vset.pattern.permute.xlu0 2
        %3030 = vperm.xlu0 %3029, %v3026
        %v3031 = vpop.permute.xlu0 %3030
        %3034 = vset.pattern.permute.xlu0 2
        %3035 = vperm.xlu0 %3034, %v3027
        %v3036 = vpop.permute.xlu0 %3035
        %v3038 = vmul.f32 %v2998, %v3031
        %v3039 = vmul.f32 %v2999, %v3036
        %v3040 = vmul.f32 %v3000, %v3031
        %v3041 = vmul.f32 %v3001, %v3036
        %3042 = vset.pattern.permute.xlu0 3
        %3043 = vperm.xlu0 %3042, %v2558
        %v3044 = vpop.permute.xlu0 %3043
        %3046 = vset.pattern.permute.xlu0 3
        %3047 = vperm.xlu0 %3046, %v2559
        %v3048 = vpop.permute.xlu0 %3047
        %v3050 = vadd.f32 %v3038, %v3044
        %v3051 = vadd.f32 %v3039, %v3048
        %v3052 = vadd.f32 %v3040, %v3044
        %v3053 = vadd.f32 %v3041, %v3048
        %p3054 = scmp.lt.s32.totalorder %s21, 1
        // Predicated region
        $region61: #{tpu_custom_call.1} parent=55 // pred_check
          %p3055 = pneg %p3054
        $region62: #{tpu_custom_call.1} parent=55 // pred_check_branch
          %3057 = sbr.rel (%p3055) target = $region64
        $region63: #{tpu_custom_call.1} parent=55 // pred_region
          %3058 = vst.msk [vmem:[#allocation2] sm:$0xff] %vm554, %v3050
          %3059 = vst.msk [vmem:[#allocation2 + $0x8] sm:$0xff] %vm554, %v3051
          %3060 = vst.msk [vmem:[#allocation2 + $0x10] sm:$0xff] %vm554, %v3052
          %3061 = vst.msk [vmem:[#allocation2 + $0x18] sm:$0xff] %vm554, %v3053
        $region64: #{tpu_custom_call.1} parent=55 // pred_fallthru
          _
        %p3062 = scmp.eq.s32.totalorder %s21, 1
        // Predicated region
        $region65: #{tpu_custom_call.1} parent=55 // pred_check
          %p3063 = pneg %p3062
        $region66: #{tpu_custom_call.1} parent=55 // pred_check_branch
          %3065 = sbr.rel (%p3063) target = $region68
        $region67: #{tpu_custom_call.1} parent=55 // pred_region
          %v3066 = vld [vmem:[%s8] sm:$0xff]
          %v3067 = vld [vmem:[%s8 + $0x8] sm:$0xff]
          %v3068 = vld [vmem:[%s8 + $0x10] sm:$0xff]
          %v3069 = vld [vmem:[%s8 + $0x18] sm:$0xff]
          %v3070 = vld [vmem:[%s8 + $0x20] sm:$0x1]
          %v3071 = vlaneseq
          %v3072 = vshrl.u32 %v3071, 7
          %v3073 = vsub.s32 0, %v3072
          %v3074 = vrot.slane %v3070, %v3073
          %v3076 = vsel %vm554, %v3050, 0
          %v3079 = vsel %vm554, %v3051, 0
          %v3082 = vsel %vm554, %v3052, 0
          %v3085 = vsel %vm554, %v3053, 0
          %3087 = vmatprep.subr.mxu0 0.0
          %3088 = vmatpush1.msra.mxu0 %v3066
          %3089 = vmatprep.subr.mxu0 0.0
          %3090 = vmatpush1.msra.mxu0 %v3067
          %3091 = vmatprep.subr.mxu0 0.0
          %3092 = vmatpush1.msra.mxu0 %v3068
          %3093 = vmatprep.subr.mxu0 0.0
          %3094 = vmatpush1.msra.mxu0 %v3069
          %3095 = vmatprep.subr.mxu0 0.0
          %3096 = vmatpush1.msra.mxu0 0.0
          %3097 = vmatprep.subr.mxu0 0.0
          %3098 = vmatpush1.msra.mxu0 0.0
          %3099 = vmatprep.subr.mxu0 0.0
          %3100 = vmatpush1.msra.mxu0 0.0
          %3101 = vmatprep.subr.mxu0 0.0
          %3102 = vmatpush1.msra.mxu0 0.0
          %3103 = vmatprep.subr.mxu0 0.0
          %3104 = vmatpush1.msra.mxu0 0.0
          %3105 = vmatprep.subr.mxu0 0.0
          %3106 = vmatpush1.msra.mxu0 0.0
          %3107 = vmatprep.subr.mxu0 0.0
          %3108 = vmatpush1.msra.mxu0 0.0
          %3109 = vmatprep.subr.mxu0 0.0
          %3110 = vmatpush1.msra.mxu0 0.0
          %3111 = vmatprep.subr.mxu0 0.0
          %3112 = vmatpush1.msra.mxu0 0.0
          %3113 = vmatprep.subr.mxu0 0.0
          %3114 = vmatpush1.msra.mxu0 0.0
          %3115 = vmatprep.subr.mxu0 0.0
          %3116 = vmatpush1.msra.mxu0 0.0
          %3117 = vmatprep.subr.mxu0 0.0
          %3118 = vmatpush1.msra.mxu0 0.0
          %3119 = vmatprep.subr.mxu0 0.0
          %3120 = vmatpush1.msra.mxu0 0.0
          %3121 = vmatprep.subr.mxu0 0.0
          %3122 = vmatpush1.msra.mxu0 0.0
          %3123 = vmatprep.subr.mxu0 0.0
          %3124 = vmatpush1.msra.mxu0 0.0
          %3125 = vmatprep.subr.mxu0 0.0
          %3126 = vmatpush1.msra.mxu0 0.0
          %3127 = vmatprep.subr.mxu0 0.0
          %3128 = vmatpush1.msra.mxu0 0.0
          %3129 = vmatprep.subr.mxu0 0.0
          %3130 = vmatpush1.msra.mxu0 0.0
          %3131 = vmatprep.subr.mxu0 0.0
          %3132 = vmatpush1.msra.mxu0 0.0
          %3133 = vmatprep.subr.mxu0 0.0
          %3134 = vmatpush1.msra.mxu0 0.0
          %3135 = vmatprep.subr.mxu0 0.0
          %3136 = vmatpush1.msra.mxu0 0.0
          %3137 = vmatprep.subr.mxu0 0.0
          %3138 = vmatpush1.msra.mxu0 0.0
          %3139 = vmatprep.subr.mxu0 0.0
          %3140 = vmatpush1.msra.mxu0 0.0
          %3141 = vmatprep.subr.mxu0 0.0
          %3142 = vmatpush1.msra.mxu0 0.0
          %3143 = vmatprep.subr.mxu0 0.0
          %3144 = vmatpush1.msra.mxu0 0.0
          %3145 = vmatprep.subr.mxu0 0.0
          %3146 = vmatpush1.msra.mxu0 0.0
          %3147 = vmatprep.subr.mxu0 0.0
          %3148 = vmatpush1.msra.mxu0 0.0
          %3149 = vmatprep.subr.mxu0 0.0
          %3150 = vmatpush1.msra.mxu0 0.0
          %3151 = vmatprep.mubr.f32.mxu0 0.0
          %3152 = vmatmul.mubr.f32.gmra.mrb[0].mxu0 %v3076
          %v3153 = vpop.f32.mrb[0].mxu0
          %v3154 = vadd.f32 %v3074, %v3153
          %v3155 = vpop.f32.mrb[0].mxu0
          %3156 = vmatprep.mubr.f32.mxu0 0.0
          %3157 = vmatmul.mubr.f32.gmra.mrb[0].mxu0 %v3079
          %v3158 = vpop.f32.mrb[0].mxu0
          %v3159 = vadd.f32 %v3074, %v3158
          %v3160 = vpop.f32.mrb[0].mxu0
          %3161 = vmatprep.mubr.f32.mxu0 0.0
          %3162 = vmatmul.mubr.f32.gmra.mrb[0].mxu0 %v3082
          %v3163 = vpop.f32.mrb[0].mxu0
          %v3164 = vadd.f32 %v3074, %v3163
          %v3165 = vpop.f32.mrb[0].mxu0
          %3166 = vmatprep.mubr.f32.mxu0 0.0
          %3167 = vmatmul.mubr.f32.gmra.mrb[0].mxu0 %v3085
          %v3168 = vpop.f32.mrb[0].mxu0
          %v3169 = vadd.f32 %v3074, %v3168
          %v3170 = vpop.f32.mrb[0].mxu0
          %3171 = vdwg.mxu0
          %3176 = vrot.lane.b32.xlu0 %v3154, 32
          %v3177 = vpop.permute.xlu0 %3176
          %3178 = vrot.lane.b32.xlu0 %v3159, 32
          %v3179 = vpop.permute.xlu0 %3178
          %3180 = vrot.lane.b32.xlu0 %v3164, 32
          %v3181 = vpop.permute.xlu0 %3180
          %3182 = vrot.lane.b32.xlu0 %v3169, 32
          %v3183 = vpop.permute.xlu0 %3182
          %v3188 = vsel %vm554, %v3050, %v3177
          %v3189 = vsel %vm554, %v3051, %v3179
          %v3190 = vsel %vm554, %v3052, %v3181
          %v3191 = vsel %vm554, %v3053, %v3183
          %vm3192 = vcmask 293888
          %3193 = vst.msk [vmem:[#allocation4] sm:$0xff] %vm3192, %v3188
          %3194 = vst.msk [vmem:[#allocation4 + $0x8] sm:$0xff] %vm3192, %v3189
          %3195 = vst.msk [vmem:[#allocation4 + $0x10] sm:$0xff] %vm3192, %v3190
          %3196 = vst.msk [vmem:[#allocation4 + $0x18] sm:$0xff] %vm3192, %v3191
        $region68: #{tpu_custom_call.1} parent=55 // pred_fallthru
          _
        // Predicated region
        $region69: #{tpu_custom_call.1} parent=55 // pred_check
          %p3197 = pneg %p253
        $region70: #{tpu_custom_call.1} parent=55 // pred_check_branch
          %3199 = sbr.rel (%p3197) target = $region72
        $region71: #{tpu_custom_call.1} parent=55 // pred_region
          %s3201 = ssub.s32 512, 512
          %3202 = vsyncadd [#allocation5], %s3201
          %s3203 = sshll.u32 [#allocation4], 4
          %s3204 = int_to_ptr.vmem [resolvable:$true] %s3203
          %3209 = dma.vmem_to_hbm [thread:$0]  %s3204, 512, %s9, [#allocation5], 128, 128, 8
        $region72: #{tpu_custom_call.1} parent=55 // pred_fallthru
          _
        // Predicated region
        $region73: #{tpu_custom_call.1} parent=55 // pred_check
          %p3210 = pneg %p253
        $region74: #{tpu_custom_call.1} parent=55 // pred_check_branch
          %3212 = sbr.rel (%p3210) target = $region76
        $region75: #{tpu_custom_call.1} parent=55 // pred_region
          %3213 = dma.done [#allocation5], 512
        $region76: #{tpu_custom_call.1} parent=55 // pred_fallthru
          _
      $region56: #{tpu_custom_call.1} parent=5 // pred_fallthru
        _
      %p3214 = scmp.le.s32.totalorder 2, %s16
      // Predicated region
      $region77: #{tpu_custom_call.1} parent=5 // pred_check
        %p3215 = pneg %p3214
      $region78: #{tpu_custom_call.1} parent=5 // pred_check_branch
        %3217 = sbr.rel (%p3215) target = $region80
      $region79: #{tpu_custom_call.1} parent=5 // pred_region
        %s3218 = ssub.s32 %s16, 2
      $region80: #{tpu_custom_call.1} parent=5 // pred_fallthru
        _
    $region6: #{tpu_custom_call.1} parent=1 // loop_footer
      %s20 = sadd.s32 1, %s16
    $region7: #{tpu_custom_call.1} parent=1 // loop_footer_branch
      %15 = sbr.rel target = $region3
    $region8: #{tpu_custom_call.1} parent=1 // loop_exit
      _
    %3219 = vsyncpa [#allocation5], 1
    %s3220 = scalar_lea.sflag [#allocation5], 1
    %3221 = vsyncpa %s3220, 1

</llo_original>
